<compile_context>
chip_gen: v7x
topology: tpu7x:2x2x1
jax: 0.10.0
libtpu: 0.0.40
codegen_flags: <defaults>
</compile_context>

<pallas_src>
import functools

import jax
import jax.numpy as jnp
from jax import lax
from jax.experimental import pallas as pl
from jax.experimental.pallas import tpu as pltpu

MAX_CLAMP_VALUE = 50000.0


def _biattn_kernel(q_ref, k_ref, vv_ref, vl_ref, mask_ref, ov_ref, ol_ref,
                   *, num_heads, head_dim, batch_per_block):
    # Block views:
    #   q_ref/vv_ref : (bb, T, H*D)   k_ref/vl_ref : (bb, S, H*D)
    #   mask_ref     : (bb, 1, S)     ov_ref : (bb, T, H*D)   ol_ref : (bb, S, H*D)
    H, D = num_heads, head_dim
    dn = (((1,), (1,)), ((), ()))  # contract last dim of both operands (no transposes)

    for b in range(batch_per_block):          # unrolled, static
        q_all = q_ref[b]                      # (T, H*D)
        k_all = k_ref[b]                      # (S, H*D)
        vv_all = vv_ref[b]                    # (T, H*D)  vision values
        vl_all = vl_ref[b]                    # (S, H*D)  language values
        mask = mask_ref[b, 0]                 # (S,)

        T = q_all.shape[0]
        S = k_all.shape[0]
        # Hoisted out of the head loop (no broadcast CSE in JAX).
        mask_b = jnp.broadcast_to(mask[None, :], (T, S))

        v_heads = []
        l_heads = []
        for h in range(H):                    # unrolled, static
            lo = h * D
            q = q_all[:, lo:lo + D]           # (T, D)
            k = k_all[:, lo:lo + D]           # (S, D)
            vv = vv_all[:, lo:lo + D]         # (T, D)
            vl = vl_all[:, lo:lo + D]         # (S, D)

            # --- vision path: scores (T, S), clamp, mask, softmax over S ---
            s = lax.dot_general(q, k, dn, preferred_element_type=jnp.float32)
            s = jnp.clip(s, -MAX_CLAMP_VALUE, MAX_CLAMP_VALUE)
            sv = s + mask_b
            sv = sv - jnp.max(sv, axis=-1, keepdims=True)
            pv = jnp.exp(sv)
            pv = pv * pl.reciprocal(jnp.sum(pv, axis=-1, keepdims=True),
                                    approx=False)
            v_heads.append(
                jnp.dot(pv, vl, preferred_element_type=jnp.float32))  # (T, D)

            # --- language path: scores computed directly as (S, T) -------
            sl = lax.dot_general(k, q, dn, preferred_element_type=jnp.float32)
            sl = jnp.clip(sl, -MAX_CLAMP_VALUE, MAX_CLAMP_VALUE)
            sl = sl - jnp.max(sl, axis=-1, keepdims=True)
            sl = jnp.clip(sl, -MAX_CLAMP_VALUE, MAX_CLAMP_VALUE)  # ref's 2nd clamp
            pw = jnp.exp(sl)
            pw = pw * pl.reciprocal(jnp.sum(pw, axis=-1, keepdims=True),
                                    approx=False)
            l_heads.append(
                jnp.dot(pw, vv, preferred_element_type=jnp.float32))  # (S, D)

        # One full-width (lane-dense) store per output; the concat along the
        # lane axis is exactly the view(...).transpose(1,2).reshape(...) of
        # the reference.  Module adds torch.ones([1]) to both outputs.
        ov_ref[b] = jnp.concatenate(v_heads, axis=-1) + 1.0
        ol_ref[b] = jnp.concatenate(l_heads, axis=-1) + 1.0


def _has_two_tensorcores():
    # v7x is the only targeted generation with 2 TensorCores per chip.
    try:
        kind = jax.devices()[0].device_kind.lower()
    except Exception:
        return False
    return ("v7" in kind) or ("7x" in kind)


def my_model_onnx_forward(query_states, proj_key, proj_vision_values,
                          proj_lang_values, attention_mask_l,
                          num_heads, head_dim):
    B, T, HD = query_states.shape
    S = proj_key.shape[1]
    assert HD == num_heads * head_dim

    # Free (no-copy) reshape so the mask block satisfies the (8,128)/full-dim rule.
    mask = attention_mask_l.reshape(B, 1, S)

    # Grid strategy: single step (batch unrolled in-kernel) on 1-TC chips;
    # per-batch "parallel" grid only when 2 TCs can each take a batch.
    if _has_two_tensorcores() and B >= 2:
        steps, bb = B, 1
        semantics = ("parallel",)
    else:
        steps, bb = 1, B
        semantics = ("arbitrary",)

    kernel = functools.partial(_biattn_kernel, num_heads=num_heads,
                               head_dim=head_dim, batch_per_block=bb)

    out_v, out_l = pl.pallas_call(
        kernel,
        out_shape=(
            jax.ShapeDtypeStruct((B, T, HD), jnp.float32),
            jax.ShapeDtypeStruct((B, S, HD), jnp.float32),
        ),
        grid_spec=pltpu.PrefetchScalarGridSpec(
            num_scalar_prefetch=0,
            grid=(steps,),
            in_specs=[
                pl.BlockSpec((bb, T, HD), lambda i: (i, 0, 0)),  # queries
                pl.BlockSpec((bb, S, HD), lambda i: (i, 0, 0)),  # keys
                pl.BlockSpec((bb, T, HD), lambda i: (i, 0, 0)),  # vision values
                pl.BlockSpec((bb, S, HD), lambda i: (i, 0, 0)),  # language values
                pl.BlockSpec((bb, 1, S), lambda i: (i, 0, 0)),   # additive mask
            ],
            out_specs=[
                pl.BlockSpec((bb, T, HD), lambda i: (i, 0, 0)),
                pl.BlockSpec((bb, S, HD), lambda i: (i, 0, 0)),
            ],
        ),
        compiler_params=pltpu.CompilerParams(dimension_semantics=semantics),
    )(query_states, proj_key, proj_vision_values, proj_lang_values, mask)

    # Outputs are already in (B, seq, H*D) layout -- no post-transpose needed.
    return out_v, out_l


def _reference(query_states, proj_key, proj_vision_values, proj_lang_values,
               attention_mask_l, num_heads, head_dim):
    # Pure-JAX reference mirroring the PyTorch StubBiAttention forward.
    B, T, _ = query_states.shape
    S = proj_key.shape[1]
    H, D = num_heads, head_dim

    def split_heads(x, seq):
        return x.reshape(B, seq, H, D).transpose(0, 2, 1, 3).reshape(B * H, seq, D)

    q = split_heads(query_states, T)
    k = split_heads(proj_key, S)
    vv = split_heads(proj_vision_values, T)
    vl = split_heads(proj_lang_values, S)

    aw = jnp.einsum('btd,bsd->bts', q, k)
    aw = jnp.clip(aw, -MAX_CLAMP_VALUE, MAX_CLAMP_VALUE)

    aw_t = jnp.swapaxes(aw, 1, 2)
    aw_l = aw_t - jnp.max(aw_t, axis=-1, keepdims=True)
    aw_l = jnp.clip(aw_l, -MAX_CLAMP_VALUE, MAX_CLAMP_VALUE)
    aw_l = jax.nn.softmax(aw_l, axis=-1)

    mask = attention_mask_l[:, None, None, :]                       # (B,1,1,S)
    aw_v = aw.reshape(B, H, T, S) + mask
    aw_v = jax.nn.softmax(aw_v.reshape(B * H, T, S), axis=-1)

    out_v = jnp.einsum('bts,bsd->btd', aw_v, vl)
    out_l = jnp.einsum('bst,btd->bsd', aw_l, vv)

    out_v = out_v.reshape(B, H, T, D).transpose(0, 2, 1, 3).reshape(B, T, H * D)
    out_l = out_l.reshape(B, H, S, D).transpose(0, 2, 1, 3).reshape(B, S, H * D)
    return out_v + 1.0, out_l + 1.0


if __name__ == "__main__":
    num_heads, head_dim = 4, 8
    hidden = num_heads * head_dim        # 32
    B, T, S = 2, 16, 8                   # batch, vision seq, language seq

    key = jax.random.PRNGKey(0)
    k1, k2, k3, k4, k5 = jax.random.split(key, 5)
    query_states = jax.random.normal(k1, (B, T, hidden), dtype=jnp.float32)
    proj_key = jax.random.normal(k2, (B, S, hidden), dtype=jnp.float32)
    proj_vision_values = jax.random.normal(k3, (B, T, hidden), dtype=jnp.float32)
    proj_lang_values = jax.random.normal(k4, (B, S, hidden), dtype=jnp.float32)
    # Additive language mask: 0 for attended positions, -1e4 for masked ones.
    mask_bits = (jax.random.uniform(k5, (B, S)) > 0.25).astype(jnp.float32)
    attention_mask_l = (1.0 - mask_bits) * (-1e4)

    out_v, out_l = my_model_onnx_forward(
        query_states, proj_key, proj_vision_values, proj_lang_values,
        attention_mask_l, num_heads, head_dim)
    jax.block_until_ready((out_v, out_l))

    ref_v, ref_l = _reference(
        query_states, proj_key, proj_vision_values, proj_lang_values,
        attention_mask_l, num_heads, head_dim)
    assert jnp.allclose(out_v, ref_v, rtol=1e-4, atol=1e-4)
    assert jnp.allclose(out_l, ref_l, rtol=1e-4, atol=1e-4)

    print("KERNEL_OK")
</pallas_src>

<mosaic_0001>
module attributes {stable_mosaic.version = 11 : i64} {
  func.func @_biattn_kernel(%arg0: i32, %arg1: memref<2x16x32xf32, #tpu.memory_space<vmem>>, %arg2: memref<2x8x32xf32, #tpu.memory_space<vmem>>, %arg3: memref<2x16x32xf32, #tpu.memory_space<vmem>>, %arg4: memref<2x8x32xf32, #tpu.memory_space<vmem>>, %arg5: memref<2x1x8xf32, #tpu.memory_space<vmem>>, %arg6: memref<2x16x32xf32, #tpu.memory_space<vmem>>, %arg7: memref<2x8x32xf32, #tpu.memory_space<vmem>>) attributes {dimension_semantics = [#tpu.dimension_semantics<arbitrary>], iteration_bounds = array<i64: 1>, scalar_prefetch = 0 : i64, scratch_operands = 0 : i64, tpu.core_type = #tpu.core_type<tc>, window_params = [{transform_indices = @transform_0, window_bounds = array<i64: 2, 16, 32>}, {transform_indices = @transform_1, window_bounds = array<i64: 2, 8, 32>}, {transform_indices = @transform_2, window_bounds = array<i64: 2, 16, 32>}, {transform_indices = @transform_3, window_bounds = array<i64: 2, 8, 32>}, {transform_indices = @transform_4, window_bounds = array<i64: 2, 1, 8>}, {transform_indices = @transform_5, window_bounds = array<i64: 2, 16, 32>}, {transform_indices = @transform_6, window_bounds = array<i64: 2, 8, 32>}]} {
    %c0 = arith.constant 0 : index
    %c0_0 = arith.constant 0 : index
    %c0_1 = arith.constant 0 : index
    %0 = vector.load %arg1[%c0, %c0_0, %c0_1] : memref<2x16x32xf32, #tpu.memory_space<vmem>>, vector<1x16x32xf32>
    %1 = vector.shape_cast %0 : vector<1x16x32xf32> to vector<16x32xf32>
    %c0_2 = arith.constant 0 : index
    %c0_3 = arith.constant 0 : index
    %c0_4 = arith.constant 0 : index
    %2 = vector.load %arg2[%c0_2, %c0_3, %c0_4] : memref<2x8x32xf32, #tpu.memory_space<vmem>>, vector<1x8x32xf32>
    %3 = vector.shape_cast %2 : vector<1x8x32xf32> to vector<8x32xf32>
    %c0_5 = arith.constant 0 : index
    %c0_6 = arith.constant 0 : index
    %c0_7 = arith.constant 0 : index
    %4 = vector.load %arg3[%c0_5, %c0_6, %c0_7] : memref<2x16x32xf32, #tpu.memory_space<vmem>>, vector<1x16x32xf32>
    %5 = vector.shape_cast %4 : vector<1x16x32xf32> to vector<16x32xf32>
    %c0_8 = arith.constant 0 : index
    %c0_9 = arith.constant 0 : index
    %c0_10 = arith.constant 0 : index
    %6 = vector.load %arg4[%c0_8, %c0_9, %c0_10] : memref<2x8x32xf32, #tpu.memory_space<vmem>>, vector<1x8x32xf32>
    %7 = vector.shape_cast %6 : vector<1x8x32xf32> to vector<8x32xf32>
    %c0_11 = arith.constant 0 : index
    %c0_12 = arith.constant 0 : index
    %c0_13 = arith.constant 0 : index
    %8 = vector.load %arg5[%c0_11, %c0_12, %c0_13] : memref<2x1x8xf32, #tpu.memory_space<vmem>>, vector<1x1x8xf32>
    %9 = vector.shape_cast %8 : vector<1x1x8xf32> to vector<8xf32>
    %10 = vector.shape_cast %9 : vector<8xf32> to vector<1x8xf32>
    %11 = vector.shape_cast %10 : vector<1x8xf32> to vector<1x8xf32>
    %12 = vector.broadcast %11 : vector<1x8xf32> to vector<16x8xf32>
    %13 = vector.extract_strided_slice %1 {offsets = [0, 0], sizes = [16, 8], strides = [1, 1]} : vector<16x32xf32> to vector<16x8xf32>
    %14 = vector.extract_strided_slice %3 {offsets = [0, 0], sizes = [8, 8], strides = [1, 1]} : vector<8x32xf32> to vector<8x8xf32>
    %15 = vector.extract_strided_slice %5 {offsets = [0, 0], sizes = [16, 8], strides = [1, 1]} : vector<16x32xf32> to vector<16x8xf32>
    %16 = vector.extract_strided_slice %7 {offsets = [0, 0], sizes = [8, 8], strides = [1, 1]} : vector<8x32xf32> to vector<8x8xf32>
    %cst = arith.constant dense<0.000000e+00> : vector<16x8xf32>
    %17 = tpu.matmul %13, %14, %cst {dimension_numbers = #tpu.dot_dimension_numbers<[1], [1], [0], [0], [0, 0, 1, 0], [], []>} : vector<16x8xf32>, vector<8x8xf32>, vector<16x8xf32> -> vector<16x8xf32>
    %cst_14 = arith.constant -5.000000e+04 : f32
    %cst_15 = arith.constant 5.000000e+04 : f32
    %18 = vector.broadcast %cst_14 : f32 to vector<16x8xf32>
    %19 = arith.maximumf %18, %17 : vector<16x8xf32>
    %20 = vector.broadcast %cst_15 : f32 to vector<16x8xf32>
    %21 = arith.minimumf %20, %19 : vector<16x8xf32>
    %22 = arith.addf %21, %12 : vector<16x8xf32>
    %cst_16 = arith.constant dense<0xFF800000> : vector<16xf32>
    %23 = vector.multi_reduction <maximumf>, %22, %cst_16 [1] : vector<16x8xf32> to vector<16xf32>
    %24 = vector.shape_cast %23 : vector<16xf32> to vector<16x1xf32>
    %25 = vector.broadcast %24 : vector<16x1xf32> to vector<16x8xf32>
    %26 = arith.subf %22, %25 : vector<16x8xf32>
    %27 = math.exp %26 : vector<16x8xf32>
    %cst_17 = arith.constant dense<0.000000e+00> : vector<16xf32>
    %28 = vector.multi_reduction <add>, %27, %cst_17 [1] : vector<16x8xf32> to vector<16xf32>
    %29 = vector.shape_cast %28 : vector<16xf32> to vector<16x1xf32>
    %30 = tpu.reciprocal %29 : vector<16x1xf32> -> vector<16x1xf32>
    %31 = vector.broadcast %30 : vector<16x1xf32> to vector<16x8xf32>
    %32 = arith.mulf %27, %31 : vector<16x8xf32>
    %cst_18 = arith.constant dense<0.000000e+00> : vector<16x8xf32>
    %33 = tpu.matmul %32, %16, %cst_18 {dimension_numbers = #tpu.dot_dimension_numbers<[1], [0], [0], [1], [0, 0, 1, 1], [], []>} : vector<16x8xf32>, vector<8x8xf32>, vector<16x8xf32> -> vector<16x8xf32>
    %cst_19 = arith.constant dense<0.000000e+00> : vector<8x16xf32>
    %34 = tpu.matmul %14, %13, %cst_19 {dimension_numbers = #tpu.dot_dimension_numbers<[1], [1], [0], [0], [0, 0, 1, 0], [], []>} : vector<8x8xf32>, vector<16x8xf32>, vector<8x16xf32> -> vector<8x16xf32>
    %cst_20 = arith.constant -5.000000e+04 : f32
    %cst_21 = arith.constant 5.000000e+04 : f32
    %35 = vector.broadcast %cst_20 : f32 to vector<8x16xf32>
    %36 = arith.maximumf %35, %34 : vector<8x16xf32>
    %37 = vector.broadcast %cst_21 : f32 to vector<8x16xf32>
    %38 = arith.minimumf %37, %36 : vector<8x16xf32>
    %cst_22 = arith.constant dense<0xFF800000> : vector<8xf32>
    %39 = vector.multi_reduction <maximumf>, %38, %cst_22 [1] : vector<8x16xf32> to vector<8xf32>
    %40 = vector.shape_cast %39 : vector<8xf32> to vector<8x1xf32>
    %41 = vector.broadcast %40 : vector<8x1xf32> to vector<8x16xf32>
    %42 = arith.subf %38, %41 : vector<8x16xf32>
    %cst_23 = arith.constant -5.000000e+04 : f32
    %cst_24 = arith.constant 5.000000e+04 : f32
    %43 = vector.broadcast %cst_23 : f32 to vector<8x16xf32>
    %44 = arith.maximumf %43, %42 : vector<8x16xf32>
    %45 = vector.broadcast %cst_24 : f32 to vector<8x16xf32>
    %46 = arith.minimumf %45, %44 : vector<8x16xf32>
    %47 = math.exp %46 : vector<8x16xf32>
    %cst_25 = arith.constant dense<0.000000e+00> : vector<8xf32>
    %48 = vector.multi_reduction <add>, %47, %cst_25 [1] : vector<8x16xf32> to vector<8xf32>
    %49 = vector.shape_cast %48 : vector<8xf32> to vector<8x1xf32>
    %50 = tpu.reciprocal %49 : vector<8x1xf32> -> vector<8x1xf32>
    %51 = vector.broadcast %50 : vector<8x1xf32> to vector<8x16xf32>
    %52 = arith.mulf %47, %51 : vector<8x16xf32>
    %cst_26 = arith.constant dense<0.000000e+00> : vector<8x8xf32>
    %53 = tpu.matmul %52, %15, %cst_26 {dimension_numbers = #tpu.dot_dimension_numbers<[1], [0], [0], [1], [0, 0, 1, 1], [], []>} : vector<8x16xf32>, vector<16x8xf32>, vector<8x8xf32> -> vector<8x8xf32>
    %54 = vector.extract_strided_slice %1 {offsets = [0, 8], sizes = [16, 8], strides = [1, 1]} : vector<16x32xf32> to vector<16x8xf32>
    %55 = vector.extract_strided_slice %3 {offsets = [0, 8], sizes = [8, 8], strides = [1, 1]} : vector<8x32xf32> to vector<8x8xf32>
    %56 = vector.extract_strided_slice %5 {offsets = [0, 8], sizes = [16, 8], strides = [1, 1]} : vector<16x32xf32> to vector<16x8xf32>
    %57 = vector.extract_strided_slice %7 {offsets = [0, 8], sizes = [8, 8], strides = [1, 1]} : vector<8x32xf32> to vector<8x8xf32>
    %cst_27 = arith.constant dense<0.000000e+00> : vector<16x8xf32>
    %58 = tpu.matmul %54, %55, %cst_27 {dimension_numbers = #tpu.dot_dimension_numbers<[1], [1], [0], [0], [0, 0, 1, 0], [], []>} : vector<16x8xf32>, vector<8x8xf32>, vector<16x8xf32> -> vector<16x8xf32>
    %cst_28 = arith.constant -5.000000e+04 : f32
    %cst_29 = arith.constant 5.000000e+04 : f32
    %59 = vector.broadcast %cst_28 : f32 to vector<16x8xf32>
    %60 = arith.maximumf %59, %58 : vector<16x8xf32>
    %61 = vector.broadcast %cst_29 : f32 to vector<16x8xf32>
    %62 = arith.minimumf %61, %60 : vector<16x8xf32>
    %63 = arith.addf %62, %12 : vector<16x8xf32>
    %cst_30 = arith.constant dense<0xFF800000> : vector<16xf32>
    %64 = vector.multi_reduction <maximumf>, %63, %cst_30 [1] : vector<16x8xf32> to vector<16xf32>
    %65 = vector.shape_cast %64 : vector<16xf32> to vector<16x1xf32>
    %66 = vector.broadcast %65 : vector<16x1xf32> to vector<16x8xf32>
    %67 = arith.subf %63, %66 : vector<16x8xf32>
    %68 = math.exp %67 : vector<16x8xf32>
    %cst_31 = arith.constant dense<0.000000e+00> : vector<16xf32>
    %69 = vector.multi_reduction <add>, %68, %cst_31 [1] : vector<16x8xf32> to vector<16xf32>
    %70 = vector.shape_cast %69 : vector<16xf32> to vector<16x1xf32>
    %71 = tpu.reciprocal %70 : vector<16x1xf32> -> vector<16x1xf32>
    %72 = vector.broadcast %71 : vector<16x1xf32> to vector<16x8xf32>
    %73 = arith.mulf %68, %72 : vector<16x8xf32>
    %cst_32 = arith.constant dense<0.000000e+00> : vector<16x8xf32>
    %74 = tpu.matmul %73, %57, %cst_32 {dimension_numbers = #tpu.dot_dimension_numbers<[1], [0], [0], [1], [0, 0, 1, 1], [], []>} : vector<16x8xf32>, vector<8x8xf32>, vector<16x8xf32> -> vector<16x8xf32>
    %cst_33 = arith.constant dense<0.000000e+00> : vector<8x16xf32>
    %75 = tpu.matmul %55, %54, %cst_33 {dimension_numbers = #tpu.dot_dimension_numbers<[1], [1], [0], [0], [0, 0, 1, 0], [], []>} : vector<8x8xf32>, vector<16x8xf32>, vector<8x16xf32> -> vector<8x16xf32>
    %cst_34 = arith.constant -5.000000e+04 : f32
    %cst_35 = arith.constant 5.000000e+04 : f32
    %76 = vector.broadcast %cst_34 : f32 to vector<8x16xf32>
    %77 = arith.maximumf %76, %75 : vector<8x16xf32>
    %78 = vector.broadcast %cst_35 : f32 to vector<8x16xf32>
    %79 = arith.minimumf %78, %77 : vector<8x16xf32>
    %cst_36 = arith.constant dense<0xFF800000> : vector<8xf32>
    %80 = vector.multi_reduction <maximumf>, %79, %cst_36 [1] : vector<8x16xf32> to vector<8xf32>
    %81 = vector.shape_cast %80 : vector<8xf32> to vector<8x1xf32>
    %82 = vector.broadcast %81 : vector<8x1xf32> to vector<8x16xf32>
    %83 = arith.subf %79, %82 : vector<8x16xf32>
    %cst_37 = arith.constant -5.000000e+04 : f32
    %cst_38 = arith.constant 5.000000e+04 : f32
    %84 = vector.broadcast %cst_37 : f32 to vector<8x16xf32>
    %85 = arith.maximumf %84, %83 : vector<8x16xf32>
    %86 = vector.broadcast %cst_38 : f32 to vector<8x16xf32>
    %87 = arith.minimumf %86, %85 : vector<8x16xf32>
    %88 = math.exp %87 : vector<8x16xf32>
    %cst_39 = arith.constant dense<0.000000e+00> : vector<8xf32>
    %89 = vector.multi_reduction <add>, %88, %cst_39 [1] : vector<8x16xf32> to vector<8xf32>
    %90 = vector.shape_cast %89 : vector<8xf32> to vector<8x1xf32>
    %91 = tpu.reciprocal %90 : vector<8x1xf32> -> vector<8x1xf32>
    %92 = vector.broadcast %91 : vector<8x1xf32> to vector<8x16xf32>
    %93 = arith.mulf %88, %92 : vector<8x16xf32>
    %cst_40 = arith.constant dense<0.000000e+00> : vector<8x8xf32>
    %94 = tpu.matmul %93, %56, %cst_40 {dimension_numbers = #tpu.dot_dimension_numbers<[1], [0], [0], [1], [0, 0, 1, 1], [], []>} : vector<8x16xf32>, vector<16x8xf32>, vector<8x8xf32> -> vector<8x8xf32>
    %95 = vector.extract_strided_slice %1 {offsets = [0, 16], sizes = [16, 8], strides = [1, 1]} : vector<16x32xf32> to vector<16x8xf32>
    %96 = vector.extract_strided_slice %3 {offsets = [0, 16], sizes = [8, 8], strides = [1, 1]} : vector<8x32xf32> to vector<8x8xf32>
    %97 = vector.extract_strided_slice %5 {offsets = [0, 16], sizes = [16, 8], strides = [1, 1]} : vector<16x32xf32> to vector<16x8xf32>
    %98 = vector.extract_strided_slice %7 {offsets = [0, 16], sizes = [8, 8], strides = [1, 1]} : vector<8x32xf32> to vector<8x8xf32>
    %cst_41 = arith.constant dense<0.000000e+00> : vector<16x8xf32>
    %99 = tpu.matmul %95, %96, %cst_41 {dimension_numbers = #tpu.dot_dimension_numbers<[1], [1], [0], [0], [0, 0, 1, 0], [], []>} : vector<16x8xf32>, vector<8x8xf32>, vector<16x8xf32> -> vector<16x8xf32>
    %cst_42 = arith.constant -5.000000e+04 : f32
    %cst_43 = arith.constant 5.000000e+04 : f32
    %100 = vector.broadcast %cst_42 : f32 to vector<16x8xf32>
    %101 = arith.maximumf %100, %99 : vector<16x8xf32>
    %102 = vector.broadcast %cst_43 : f32 to vector<16x8xf32>
    %103 = arith.minimumf %102, %101 : vector<16x8xf32>
    %104 = arith.addf %103, %12 : vector<16x8xf32>
    %cst_44 = arith.constant dense<0xFF800000> : vector<16xf32>
    %105 = vector.multi_reduction <maximumf>, %104, %cst_44 [1] : vector<16x8xf32> to vector<16xf32>
    %106 = vector.shape_cast %105 : vector<16xf32> to vector<16x1xf32>
    %107 = vector.broadcast %106 : vector<16x1xf32> to vector<16x8xf32>
    %108 = arith.subf %104, %107 : vector<16x8xf32>
    %109 = math.exp %108 : vector<16x8xf32>
    %cst_45 = arith.constant dense<0.000000e+00> : vector<16xf32>
    %110 = vector.multi_reduction <add>, %109, %cst_45 [1] : vector<16x8xf32> to vector<16xf32>
    %111 = vector.shape_cast %110 : vector<16xf32> to vector<16x1xf32>
    %112 = tpu.reciprocal %111 : vector<16x1xf32> -> vector<16x1xf32>
    %113 = vector.broadcast %112 : vector<16x1xf32> to vector<16x8xf32>
    %114 = arith.mulf %109, %113 : vector<16x8xf32>
    %cst_46 = arith.constant dense<0.000000e+00> : vector<16x8xf32>
    %115 = tpu.matmul %114, %98, %cst_46 {dimension_numbers = #tpu.dot_dimension_numbers<[1], [0], [0], [1], [0, 0, 1, 1], [], []>} : vector<16x8xf32>, vector<8x8xf32>, vector<16x8xf32> -> vector<16x8xf32>
    %cst_47 = arith.constant dense<0.000000e+00> : vector<8x16xf32>
    %116 = tpu.matmul %96, %95, %cst_47 {dimension_numbers = #tpu.dot_dimension_numbers<[1], [1], [0], [0], [0, 0, 1, 0], [], []>} : vector<8x8xf32>, vector<16x8xf32>, vector<8x16xf32> -> vector<8x16xf32>
    %cst_48 = arith.constant -5.000000e+04 : f32
    %cst_49 = arith.constant 5.000000e+04 : f32
    %117 = vector.broadcast %cst_48 : f32 to vector<8x16xf32>
    %118 = arith.maximumf %117, %116 : vector<8x16xf32>
    %119 = vector.broadcast %cst_49 : f32 to vector<8x16xf32>
    %120 = arith.minimumf %119, %118 : vector<8x16xf32>
    %cst_50 = arith.constant dense<0xFF800000> : vector<8xf32>
    %121 = vector.multi_reduction <maximumf>, %120, %cst_50 [1] : vector<8x16xf32> to vector<8xf32>
    %122 = vector.shape_cast %121 : vector<8xf32> to vector<8x1xf32>
    %123 = vector.broadcast %122 : vector<8x1xf32> to vector<8x16xf32>
    %124 = arith.subf %120, %123 : vector<8x16xf32>
    %cst_51 = arith.constant -5.000000e+04 : f32
    %cst_52 = arith.constant 5.000000e+04 : f32
    %125 = vector.broadcast %cst_51 : f32 to vector<8x16xf32>
    %126 = arith.maximumf %125, %124 : vector<8x16xf32>
    %127 = vector.broadcast %cst_52 : f32 to vector<8x16xf32>
    %128 = arith.minimumf %127, %126 : vector<8x16xf32>
    %129 = math.exp %128 : vector<8x16xf32>
    %cst_53 = arith.constant dense<0.000000e+00> : vector<8xf32>
    %130 = vector.multi_reduction <add>, %129, %cst_53 [1] : vector<8x16xf32> to vector<8xf32>
    %131 = vector.shape_cast %130 : vector<8xf32> to vector<8x1xf32>
    %132 = tpu.reciprocal %131 : vector<8x1xf32> -> vector<8x1xf32>
    %133 = vector.broadcast %132 : vector<8x1xf32> to vector<8x16xf32>
    %134 = arith.mulf %129, %133 : vector<8x16xf32>
    %cst_54 = arith.constant dense<0.000000e+00> : vector<8x8xf32>
    %135 = tpu.matmul %134, %97, %cst_54 {dimension_numbers = #tpu.dot_dimension_numbers<[1], [0], [0], [1], [0, 0, 1, 1], [], []>} : vector<8x16xf32>, vector<16x8xf32>, vector<8x8xf32> -> vector<8x8xf32>
    %136 = vector.extract_strided_slice %1 {offsets = [0, 24], sizes = [16, 8], strides = [1, 1]} : vector<16x32xf32> to vector<16x8xf32>
    %137 = vector.extract_strided_slice %3 {offsets = [0, 24], sizes = [8, 8], strides = [1, 1]} : vector<8x32xf32> to vector<8x8xf32>
    %138 = vector.extract_strided_slice %5 {offsets = [0, 24], sizes = [16, 8], strides = [1, 1]} : vector<16x32xf32> to vector<16x8xf32>
    %139 = vector.extract_strided_slice %7 {offsets = [0, 24], sizes = [8, 8], strides = [1, 1]} : vector<8x32xf32> to vector<8x8xf32>
    %cst_55 = arith.constant dense<0.000000e+00> : vector<16x8xf32>
    %140 = tpu.matmul %136, %137, %cst_55 {dimension_numbers = #tpu.dot_dimension_numbers<[1], [1], [0], [0], [0, 0, 1, 0], [], []>} : vector<16x8xf32>, vector<8x8xf32>, vector<16x8xf32> -> vector<16x8xf32>
    %cst_56 = arith.constant -5.000000e+04 : f32
    %cst_57 = arith.constant 5.000000e+04 : f32
    %141 = vector.broadcast %cst_56 : f32 to vector<16x8xf32>
    %142 = arith.maximumf %141, %140 : vector<16x8xf32>
    %143 = vector.broadcast %cst_57 : f32 to vector<16x8xf32>
    %144 = arith.minimumf %143, %142 : vector<16x8xf32>
    %145 = arith.addf %144, %12 : vector<16x8xf32>
    %cst_58 = arith.constant dense<0xFF800000> : vector<16xf32>
    %146 = vector.multi_reduction <maximumf>, %145, %cst_58 [1] : vector<16x8xf32> to vector<16xf32>
    %147 = vector.shape_cast %146 : vector<16xf32> to vector<16x1xf32>
    %148 = vector.broadcast %147 : vector<16x1xf32> to vector<16x8xf32>
    %149 = arith.subf %145, %148 : vector<16x8xf32>
    %150 = math.exp %149 : vector<16x8xf32>
    %cst_59 = arith.constant dense<0.000000e+00> : vector<16xf32>
    %151 = vector.multi_reduction <add>, %150, %cst_59 [1] : vector<16x8xf32> to vector<16xf32>
    %152 = vector.shape_cast %151 : vector<16xf32> to vector<16x1xf32>
    %153 = tpu.reciprocal %152 : vector<16x1xf32> -> vector<16x1xf32>
    %154 = vector.broadcast %153 : vector<16x1xf32> to vector<16x8xf32>
    %155 = arith.mulf %150, %154 : vector<16x8xf32>
    %cst_60 = arith.constant dense<0.000000e+00> : vector<16x8xf32>
    %156 = tpu.matmul %155, %139, %cst_60 {dimension_numbers = #tpu.dot_dimension_numbers<[1], [0], [0], [1], [0, 0, 1, 1], [], []>} : vector<16x8xf32>, vector<8x8xf32>, vector<16x8xf32> -> vector<16x8xf32>
    %cst_61 = arith.constant dense<0.000000e+00> : vector<8x16xf32>
    %157 = tpu.matmul %137, %136, %cst_61 {dimension_numbers = #tpu.dot_dimension_numbers<[1], [1], [0], [0], [0, 0, 1, 0], [], []>} : vector<8x8xf32>, vector<16x8xf32>, vector<8x16xf32> -> vector<8x16xf32>
    %cst_62 = arith.constant -5.000000e+04 : f32
    %cst_63 = arith.constant 5.000000e+04 : f32
    %158 = vector.broadcast %cst_62 : f32 to vector<8x16xf32>
    %159 = arith.maximumf %158, %157 : vector<8x16xf32>
    %160 = vector.broadcast %cst_63 : f32 to vector<8x16xf32>
    %161 = arith.minimumf %160, %159 : vector<8x16xf32>
    %cst_64 = arith.constant dense<0xFF800000> : vector<8xf32>
    %162 = vector.multi_reduction <maximumf>, %161, %cst_64 [1] : vector<8x16xf32> to vector<8xf32>
    %163 = vector.shape_cast %162 : vector<8xf32> to vector<8x1xf32>
    %164 = vector.broadcast %163 : vector<8x1xf32> to vector<8x16xf32>
    %165 = arith.subf %161, %164 : vector<8x16xf32>
    %cst_65 = arith.constant -5.000000e+04 : f32
    %cst_66 = arith.constant 5.000000e+04 : f32
    %166 = vector.broadcast %cst_65 : f32 to vector<8x16xf32>
    %167 = arith.maximumf %166, %165 : vector<8x16xf32>
    %168 = vector.broadcast %cst_66 : f32 to vector<8x16xf32>
    %169 = arith.minimumf %168, %167 : vector<8x16xf32>
    %170 = math.exp %169 : vector<8x16xf32>
    %cst_67 = arith.constant dense<0.000000e+00> : vector<8xf32>
    %171 = vector.multi_reduction <add>, %170, %cst_67 [1] : vector<8x16xf32> to vector<8xf32>
    %172 = vector.shape_cast %171 : vector<8xf32> to vector<8x1xf32>
    %173 = tpu.reciprocal %172 : vector<8x1xf32> -> vector<8x1xf32>
    %174 = vector.broadcast %173 : vector<8x1xf32> to vector<8x16xf32>
    %175 = arith.mulf %170, %174 : vector<8x16xf32>
    %cst_68 = arith.constant dense<0.000000e+00> : vector<8x8xf32>
    %176 = tpu.matmul %175, %138, %cst_68 {dimension_numbers = #tpu.dot_dimension_numbers<[1], [0], [0], [1], [0, 0, 1, 1], [], []>} : vector<8x16xf32>, vector<16x8xf32>, vector<8x8xf32> -> vector<8x8xf32>
    %177 = tpu.concatenate %33, %74, %115, %156 in 1 : vector<16x8xf32>, vector<16x8xf32>, vector<16x8xf32>, vector<16x8xf32> -> vector<16x32xf32>
    %cst_69 = arith.constant 1.000000e+00 : f32
    %178 = vector.broadcast %cst_69 : f32 to vector<16x32xf32>
    %179 = arith.addf %177, %178 : vector<16x32xf32>
    %c0_70 = arith.constant 0 : index
    %c0_71 = arith.constant 0 : index
    %c0_72 = arith.constant 0 : index
    %180 = vector.load %arg6[%c0_70, %c0_71, %c0_72] : memref<2x16x32xf32, #tpu.memory_space<vmem>>, vector<1x16x32xf32>
    %181 = vector.shape_cast %180 : vector<1x16x32xf32> to vector<16x32xf32>
    %182 = vector.shape_cast %179 : vector<16x32xf32> to vector<1x16x32xf32>
    tpu.vector_store %arg6[%c0_70, %c0_71, %c0_72], %182 {strides = array<i32>} : memref<2x16x32xf32, #tpu.memory_space<vmem>>, vector<1x16x32xf32>,
    %183 = tpu.concatenate %53, %94, %135, %176 in 1 : vector<8x8xf32>, vector<8x8xf32>, vector<8x8xf32>, vector<8x8xf32> -> vector<8x32xf32>
    %cst_73 = arith.constant 1.000000e+00 : f32
    %184 = vector.broadcast %cst_73 : f32 to vector<8x32xf32>
    %185 = arith.addf %183, %184 : vector<8x32xf32>
    %c0_74 = arith.constant 0 : index
    %c0_75 = arith.constant 0 : index
    %c0_76 = arith.constant 0 : index
    %186 = vector.load %arg7[%c0_74, %c0_75, %c0_76] : memref<2x8x32xf32, #tpu.memory_space<vmem>>, vector<1x8x32xf32>
    %187 = vector.shape_cast %186 : vector<1x8x32xf32> to vector<8x32xf32>
    %188 = vector.shape_cast %185 : vector<8x32xf32> to vector<1x8x32xf32>
    tpu.vector_store %arg7[%c0_74, %c0_75, %c0_76], %188 {strides = array<i32>} : memref<2x8x32xf32, #tpu.memory_space<vmem>>, vector<1x8x32xf32>,
    %c1 = arith.constant 1 : index
    %c0_77 = arith.constant 0 : index
    %c0_78 = arith.constant 0 : index
    %189 = vector.load %arg1[%c1, %c0_77, %c0_78] : memref<2x16x32xf32, #tpu.memory_space<vmem>>, vector<1x16x32xf32>
    %190 = vector.shape_cast %189 : vector<1x16x32xf32> to vector<16x32xf32>
    %c1_79 = arith.constant 1 : index
    %c0_80 = arith.constant 0 : index
    %c0_81 = arith.constant 0 : index
    %191 = vector.load %arg2[%c1_79, %c0_80, %c0_81] : memref<2x8x32xf32, #tpu.memory_space<vmem>>, vector<1x8x32xf32>
    %192 = vector.shape_cast %191 : vector<1x8x32xf32> to vector<8x32xf32>
    %c1_82 = arith.constant 1 : index
    %c0_83 = arith.constant 0 : index
    %c0_84 = arith.constant 0 : index
    %193 = vector.load %arg3[%c1_82, %c0_83, %c0_84] : memref<2x16x32xf32, #tpu.memory_space<vmem>>, vector<1x16x32xf32>
    %194 = vector.shape_cast %193 : vector<1x16x32xf32> to vector<16x32xf32>
    %c1_85 = arith.constant 1 : index
    %c0_86 = arith.constant 0 : index
    %c0_87 = arith.constant 0 : index
    %195 = vector.load %arg4[%c1_85, %c0_86, %c0_87] : memref<2x8x32xf32, #tpu.memory_space<vmem>>, vector<1x8x32xf32>
    %196 = vector.shape_cast %195 : vector<1x8x32xf32> to vector<8x32xf32>
    %c1_88 = arith.constant 1 : index
    %c0_89 = arith.constant 0 : index
    %c0_90 = arith.constant 0 : index
    %197 = vector.load %arg5[%c1_88, %c0_89, %c0_90] : memref<2x1x8xf32, #tpu.memory_space<vmem>>, vector<1x1x8xf32>
    %198 = vector.shape_cast %197 : vector<1x1x8xf32> to vector<8xf32>
    %199 = vector.shape_cast %198 : vector<8xf32> to vector<1x8xf32>
    %200 = vector.shape_cast %199 : vector<1x8xf32> to vector<1x8xf32>
    %201 = vector.broadcast %200 : vector<1x8xf32> to vector<16x8xf32>
    %202 = vector.extract_strided_slice %190 {offsets = [0, 0], sizes = [16, 8], strides = [1, 1]} : vector<16x32xf32> to vector<16x8xf32>
    %203 = vector.extract_strided_slice %192 {offsets = [0, 0], sizes = [8, 8], strides = [1, 1]} : vector<8x32xf32> to vector<8x8xf32>
    %204 = vector.extract_strided_slice %194 {offsets = [0, 0], sizes = [16, 8], strides = [1, 1]} : vector<16x32xf32> to vector<16x8xf32>
    %205 = vector.extract_strided_slice %196 {offsets = [0, 0], sizes = [8, 8], strides = [1, 1]} : vector<8x32xf32> to vector<8x8xf32>
    %cst_91 = arith.constant dense<0.000000e+00> : vector<16x8xf32>
    %206 = tpu.matmul %202, %203, %cst_91 {dimension_numbers = #tpu.dot_dimension_numbers<[1], [1], [0], [0], [0, 0, 1, 0], [], []>} : vector<16x8xf32>, vector<8x8xf32>, vector<16x8xf32> -> vector<16x8xf32>
    %cst_92 = arith.constant -5.000000e+04 : f32
    %cst_93 = arith.constant 5.000000e+04 : f32
    %207 = vector.broadcast %cst_92 : f32 to vector<16x8xf32>
    %208 = arith.maximumf %207, %206 : vector<16x8xf32>
    %209 = vector.broadcast %cst_93 : f32 to vector<16x8xf32>
    %210 = arith.minimumf %209, %208 : vector<16x8xf32>
    %211 = arith.addf %210, %201 : vector<16x8xf32>
    %cst_94 = arith.constant dense<0xFF800000> : vector<16xf32>
    %212 = vector.multi_reduction <maximumf>, %211, %cst_94 [1] : vector<16x8xf32> to vector<16xf32>
    %213 = vector.shape_cast %212 : vector<16xf32> to vector<16x1xf32>
    %214 = vector.broadcast %213 : vector<16x1xf32> to vector<16x8xf32>
    %215 = arith.subf %211, %214 : vector<16x8xf32>
    %216 = math.exp %215 : vector<16x8xf32>
    %cst_95 = arith.constant dense<0.000000e+00> : vector<16xf32>
    %217 = vector.multi_reduction <add>, %216, %cst_95 [1] : vector<16x8xf32> to vector<16xf32>
    %218 = vector.shape_cast %217 : vector<16xf32> to vector<16x1xf32>
    %219 = tpu.reciprocal %218 : vector<16x1xf32> -> vector<16x1xf32>
    %220 = vector.broadcast %219 : vector<16x1xf32> to vector<16x8xf32>
    %221 = arith.mulf %216, %220 : vector<16x8xf32>
    %cst_96 = arith.constant dense<0.000000e+00> : vector<16x8xf32>
    %222 = tpu.matmul %221, %205, %cst_96 {dimension_numbers = #tpu.dot_dimension_numbers<[1], [0], [0], [1], [0, 0, 1, 1], [], []>} : vector<16x8xf32>, vector<8x8xf32>, vector<16x8xf32> -> vector<16x8xf32>
    %cst_97 = arith.constant dense<0.000000e+00> : vector<8x16xf32>
    %223 = tpu.matmul %203, %202, %cst_97 {dimension_numbers = #tpu.dot_dimension_numbers<[1], [1], [0], [0], [0, 0, 1, 0], [], []>} : vector<8x8xf32>, vector<16x8xf32>, vector<8x16xf32> -> vector<8x16xf32>
    %cst_98 = arith.constant -5.000000e+04 : f32
    %cst_99 = arith.constant 5.000000e+04 : f32
    %224 = vector.broadcast %cst_98 : f32 to vector<8x16xf32>
    %225 = arith.maximumf %224, %223 : vector<8x16xf32>
    %226 = vector.broadcast %cst_99 : f32 to vector<8x16xf32>
    %227 = arith.minimumf %226, %225 : vector<8x16xf32>
    %cst_100 = arith.constant dense<0xFF800000> : vector<8xf32>
    %228 = vector.multi_reduction <maximumf>, %227, %cst_100 [1] : vector<8x16xf32> to vector<8xf32>
    %229 = vector.shape_cast %228 : vector<8xf32> to vector<8x1xf32>
    %230 = vector.broadcast %229 : vector<8x1xf32> to vector<8x16xf32>
    %231 = arith.subf %227, %230 : vector<8x16xf32>
    %cst_101 = arith.constant -5.000000e+04 : f32
    %cst_102 = arith.constant 5.000000e+04 : f32
    %232 = vector.broadcast %cst_101 : f32 to vector<8x16xf32>
    %233 = arith.maximumf %232, %231 : vector<8x16xf32>
    %234 = vector.broadcast %cst_102 : f32 to vector<8x16xf32>
    %235 = arith.minimumf %234, %233 : vector<8x16xf32>
    %236 = math.exp %235 : vector<8x16xf32>
    %cst_103 = arith.constant dense<0.000000e+00> : vector<8xf32>
    %237 = vector.multi_reduction <add>, %236, %cst_103 [1] : vector<8x16xf32> to vector<8xf32>
    %238 = vector.shape_cast %237 : vector<8xf32> to vector<8x1xf32>
    %239 = tpu.reciprocal %238 : vector<8x1xf32> -> vector<8x1xf32>
    %240 = vector.broadcast %239 : vector<8x1xf32> to vector<8x16xf32>
    %241 = arith.mulf %236, %240 : vector<8x16xf32>
    %cst_104 = arith.constant dense<0.000000e+00> : vector<8x8xf32>
    %242 = tpu.matmul %241, %204, %cst_104 {dimension_numbers = #tpu.dot_dimension_numbers<[1], [0], [0], [1], [0, 0, 1, 1], [], []>} : vector<8x16xf32>, vector<16x8xf32>, vector<8x8xf32> -> vector<8x8xf32>
    %243 = vector.extract_strided_slice %190 {offsets = [0, 8], sizes = [16, 8], strides = [1, 1]} : vector<16x32xf32> to vector<16x8xf32>
    %244 = vector.extract_strided_slice %192 {offsets = [0, 8], sizes = [8, 8], strides = [1, 1]} : vector<8x32xf32> to vector<8x8xf32>
    %245 = vector.extract_strided_slice %194 {offsets = [0, 8], sizes = [16, 8], strides = [1, 1]} : vector<16x32xf32> to vector<16x8xf32>
    %246 = vector.extract_strided_slice %196 {offsets = [0, 8], sizes = [8, 8], strides = [1, 1]} : vector<8x32xf32> to vector<8x8xf32>
    %cst_105 = arith.constant dense<0.000000e+00> : vector<16x8xf32>
    %247 = tpu.matmul %243, %244, %cst_105 {dimension_numbers = #tpu.dot_dimension_numbers<[1], [1], [0], [0], [0, 0, 1, 0], [], []>} : vector<16x8xf32>, vector<8x8xf32>, vector<16x8xf32> -> vector<16x8xf32>
    %cst_106 = arith.constant -5.000000e+04 : f32
    %cst_107 = arith.constant 5.000000e+04 : f32
    %248 = vector.broadcast %cst_106 : f32 to vector<16x8xf32>
    %249 = arith.maximumf %248, %247 : vector<16x8xf32>
    %250 = vector.broadcast %cst_107 : f32 to vector<16x8xf32>
    %251 = arith.minimumf %250, %249 : vector<16x8xf32>
    %252 = arith.addf %251, %201 : vector<16x8xf32>
    %cst_108 = arith.constant dense<0xFF800000> : vector<16xf32>
    %253 = vector.multi_reduction <maximumf>, %252, %cst_108 [1] : vector<16x8xf32> to vector<16xf32>
    %254 = vector.shape_cast %253 : vector<16xf32> to vector<16x1xf32>
    %255 = vector.broadcast %254 : vector<16x1xf32> to vector<16x8xf32>
    %256 = arith.subf %252, %255 : vector<16x8xf32>
    %257 = math.exp %256 : vector<16x8xf32>
    %cst_109 = arith.constant dense<0.000000e+00> : vector<16xf32>
    %258 = vector.multi_reduction <add>, %257, %cst_109 [1] : vector<16x8xf32> to vector<16xf32>
    %259 = vector.shape_cast %258 : vector<16xf32> to vector<16x1xf32>
    %260 = tpu.reciprocal %259 : vector<16x1xf32> -> vector<16x1xf32>
    %261 = vector.broadcast %260 : vector<16x1xf32> to vector<16x8xf32>
    %262 = arith.mulf %257, %261 : vector<16x8xf32>
    %cst_110 = arith.constant dense<0.000000e+00> : vector<16x8xf32>
    %263 = tpu.matmul %262, %246, %cst_110 {dimension_numbers = #tpu.dot_dimension_numbers<[1], [0], [0], [1], [0, 0, 1, 1], [], []>} : vector<16x8xf32>, vector<8x8xf32>, vector<16x8xf32> -> vector<16x8xf32>
    %cst_111 = arith.constant dense<0.000000e+00> : vector<8x16xf32>
    %264 = tpu.matmul %244, %243, %cst_111 {dimension_numbers = #tpu.dot_dimension_numbers<[1], [1], [0], [0], [0, 0, 1, 0], [], []>} : vector<8x8xf32>, vector<16x8xf32>, vector<8x16xf32> -> vector<8x16xf32>
    %cst_112 = arith.constant -5.000000e+04 : f32
    %cst_113 = arith.constant 5.000000e+04 : f32
    %265 = vector.broadcast %cst_112 : f32 to vector<8x16xf32>
    %266 = arith.maximumf %265, %264 : vector<8x16xf32>
    %267 = vector.broadcast %cst_113 : f32 to vector<8x16xf32>
    %268 = arith.minimumf %267, %266 : vector<8x16xf32>
    %cst_114 = arith.constant dense<0xFF800000> : vector<8xf32>
    %269 = vector.multi_reduction <maximumf>, %268, %cst_114 [1] : vector<8x16xf32> to vector<8xf32>
    %270 = vector.shape_cast %269 : vector<8xf32> to vector<8x1xf32>
    %271 = vector.broadcast %270 : vector<8x1xf32> to vector<8x16xf32>
    %272 = arith.subf %268, %271 : vector<8x16xf32>
    %cst_115 = arith.constant -5.000000e+04 : f32
    %cst_116 = arith.constant 5.000000e+04 : f32
    %273 = vector.broadcast %cst_115 : f32 to vector<8x16xf32>
    %274 = arith.maximumf %273, %272 : vector<8x16xf32>
    %275 = vector.broadcast %cst_116 : f32 to vector<8x16xf32>
    %276 = arith.minimumf %275, %274 : vector<8x16xf32>
    %277 = math.exp %276 : vector<8x16xf32>
    %cst_117 = arith.constant dense<0.000000e+00> : vector<8xf32>
    %278 = vector.multi_reduction <add>, %277, %cst_117 [1] : vector<8x16xf32> to vector<8xf32>
    %279 = vector.shape_cast %278 : vector<8xf32> to vector<8x1xf32>
    %280 = tpu.reciprocal %279 : vector<8x1xf32> -> vector<8x1xf32>
    %281 = vector.broadcast %280 : vector<8x1xf32> to vector<8x16xf32>
    %282 = arith.mulf %277, %281 : vector<8x16xf32>
    %cst_118 = arith.constant dense<0.000000e+00> : vector<8x8xf32>
    %283 = tpu.matmul %282, %245, %cst_118 {dimension_numbers = #tpu.dot_dimension_numbers<[1], [0], [0], [1], [0, 0, 1, 1], [], []>} : vector<8x16xf32>, vector<16x8xf32>, vector<8x8xf32> -> vector<8x8xf32>
    %284 = vector.extract_strided_slice %190 {offsets = [0, 16], sizes = [16, 8], strides = [1, 1]} : vector<16x32xf32> to vector<16x8xf32>
    %285 = vector.extract_strided_slice %192 {offsets = [0, 16], sizes = [8, 8], strides = [1, 1]} : vector<8x32xf32> to vector<8x8xf32>
    %286 = vector.extract_strided_slice %194 {offsets = [0, 16], sizes = [16, 8], strides = [1, 1]} : vector<16x32xf32> to vector<16x8xf32>
    %287 = vector.extract_strided_slice %196 {offsets = [0, 16], sizes = [8, 8], strides = [1, 1]} : vector<8x32xf32> to vector<8x8xf32>
    %cst_119 = arith.constant dense<0.000000e+00> : vector<16x8xf32>
    %288 = tpu.matmul %284, %285, %cst_119 {dimension_numbers = #tpu.dot_dimension_numbers<[1], [1], [0], [0], [0, 0, 1, 0], [], []>} : vector<16x8xf32>, vector<8x8xf32>, vector<16x8xf32> -> vector<16x8xf32>
    %cst_120 = arith.constant -5.000000e+04 : f32
    %cst_121 = arith.constant 5.000000e+04 : f32
    %289 = vector.broadcast %cst_120 : f32 to vector<16x8xf32>
    %290 = arith.maximumf %289, %288 : vector<16x8xf32>
    %291 = vector.broadcast %cst_121 : f32 to vector<16x8xf32>
    %292 = arith.minimumf %291, %290 : vector<16x8xf32>
    %293 = arith.addf %292, %201 : vector<16x8xf32>
    %cst_122 = arith.constant dense<0xFF800000> : vector<16xf32>
    %294 = vector.multi_reduction <maximumf>, %293, %cst_122 [1] : vector<16x8xf32> to vector<16xf32>
    %295 = vector.shape_cast %294 : vector<16xf32> to vector<16x1xf32>
    %296 = vector.broadcast %295 : vector<16x1xf32> to vector<16x8xf32>
    %297 = arith.subf %293, %296 : vector<16x8xf32>
    %298 = math.exp %297 : vector<16x8xf32>
    %cst_123 = arith.constant dense<0.000000e+00> : vector<16xf32>
    %299 = vector.multi_reduction <add>, %298, %cst_123 [1] : vector<16x8xf32> to vector<16xf32>
    %300 = vector.shape_cast %299 : vector<16xf32> to vector<16x1xf32>
    %301 = tpu.reciprocal %300 : vector<16x1xf32> -> vector<16x1xf32>
    %302 = vector.broadcast %301 : vector<16x1xf32> to vector<16x8xf32>
    %303 = arith.mulf %298, %302 : vector<16x8xf32>
    %cst_124 = arith.constant dense<0.000000e+00> : vector<16x8xf32>
    %304 = tpu.matmul %303, %287, %cst_124 {dimension_numbers = #tpu.dot_dimension_numbers<[1], [0], [0], [1], [0, 0, 1, 1], [], []>} : vector<16x8xf32>, vector<8x8xf32>, vector<16x8xf32> -> vector<16x8xf32>
    %cst_125 = arith.constant dense<0.000000e+00> : vector<8x16xf32>
    %305 = tpu.matmul %285, %284, %cst_125 {dimension_numbers = #tpu.dot_dimension_numbers<[1], [1], [0], [0], [0, 0, 1, 0], [], []>} : vector<8x8xf32>, vector<16x8xf32>, vector<8x16xf32> -> vector<8x16xf32>
    %cst_126 = arith.constant -5.000000e+04 : f32
    %cst_127 = arith.constant 5.000000e+04 : f32
    %306 = vector.broadcast %cst_126 : f32 to vector<8x16xf32>
    %307 = arith.maximumf %306, %305 : vector<8x16xf32>
    %308 = vector.broadcast %cst_127 : f32 to vector<8x16xf32>
    %309 = arith.minimumf %308, %307 : vector<8x16xf32>
    %cst_128 = arith.constant dense<0xFF800000> : vector<8xf32>
    %310 = vector.multi_reduction <maximumf>, %309, %cst_128 [1] : vector<8x16xf32> to vector<8xf32>
    %311 = vector.shape_cast %310 : vector<8xf32> to vector<8x1xf32>
    %312 = vector.broadcast %311 : vector<8x1xf32> to vector<8x16xf32>
    %313 = arith.subf %309, %312 : vector<8x16xf32>
    %cst_129 = arith.constant -5.000000e+04 : f32
    %cst_130 = arith.constant 5.000000e+04 : f32
    %314 = vector.broadcast %cst_129 : f32 to vector<8x16xf32>
    %315 = arith.maximumf %314, %313 : vector<8x16xf32>
    %316 = vector.broadcast %cst_130 : f32 to vector<8x16xf32>
    %317 = arith.minimumf %316, %315 : vector<8x16xf32>
    %318 = math.exp %317 : vector<8x16xf32>
    %cst_131 = arith.constant dense<0.000000e+00> : vector<8xf32>
    %319 = vector.multi_reduction <add>, %318, %cst_131 [1] : vector<8x16xf32> to vector<8xf32>
    %320 = vector.shape_cast %319 : vector<8xf32> to vector<8x1xf32>
    %321 = tpu.reciprocal %320 : vector<8x1xf32> -> vector<8x1xf32>
    %322 = vector.broadcast %321 : vector<8x1xf32> to vector<8x16xf32>
    %323 = arith.mulf %318, %322 : vector<8x16xf32>
    %cst_132 = arith.constant dense<0.000000e+00> : vector<8x8xf32>
    %324 = tpu.matmul %323, %286, %cst_132 {dimension_numbers = #tpu.dot_dimension_numbers<[1], [0], [0], [1], [0, 0, 1, 1], [], []>} : vector<8x16xf32>, vector<16x8xf32>, vector<8x8xf32> -> vector<8x8xf32>
    %325 = vector.extract_strided_slice %190 {offsets = [0, 24], sizes = [16, 8], strides = [1, 1]} : vector<16x32xf32> to vector<16x8xf32>
    %326 = vector.extract_strided_slice %192 {offsets = [0, 24], sizes = [8, 8], strides = [1, 1]} : vector<8x32xf32> to vector<8x8xf32>
    %327 = vector.extract_strided_slice %194 {offsets = [0, 24], sizes = [16, 8], strides = [1, 1]} : vector<16x32xf32> to vector<16x8xf32>
    %328 = vector.extract_strided_slice %196 {offsets = [0, 24], sizes = [8, 8], strides = [1, 1]} : vector<8x32xf32> to vector<8x8xf32>
    %cst_133 = arith.constant dense<0.000000e+00> : vector<16x8xf32>
    %329 = tpu.matmul %325, %326, %cst_133 {dimension_numbers = #tpu.dot_dimension_numbers<[1], [1], [0], [0], [0, 0, 1, 0], [], []>} : vector<16x8xf32>, vector<8x8xf32>, vector<16x8xf32> -> vector<16x8xf32>
    %cst_134 = arith.constant -5.000000e+04 : f32
    %cst_135 = arith.constant 5.000000e+04 : f32
    %330 = vector.broadcast %cst_134 : f32 to vector<16x8xf32>
    %331 = arith.maximumf %330, %329 : vector<16x8xf32>
    %332 = vector.broadcast %cst_135 : f32 to vector<16x8xf32>
    %333 = arith.minimumf %332, %331 : vector<16x8xf32>
    %334 = arith.addf %333, %201 : vector<16x8xf32>
    %cst_136 = arith.constant dense<0xFF800000> : vector<16xf32>
    %335 = vector.multi_reduction <maximumf>, %334, %cst_136 [1] : vector<16x8xf32> to vector<16xf32>
    %336 = vector.shape_cast %335 : vector<16xf32> to vector<16x1xf32>
    %337 = vector.broadcast %336 : vector<16x1xf32> to vector<16x8xf32>
    %338 = arith.subf %334, %337 : vector<16x8xf32>
    %339 = math.exp %338 : vector<16x8xf32>
    %cst_137 = arith.constant dense<0.000000e+00> : vector<16xf32>
    %340 = vector.multi_reduction <add>, %339, %cst_137 [1] : vector<16x8xf32> to vector<16xf32>
    %341 = vector.shape_cast %340 : vector<16xf32> to vector<16x1xf32>
    %342 = tpu.reciprocal %341 : vector<16x1xf32> -> vector<16x1xf32>
    %343 = vector.broadcast %342 : vector<16x1xf32> to vector<16x8xf32>
    %344 = arith.mulf %339, %343 : vector<16x8xf32>
    %cst_138 = arith.constant dense<0.000000e+00> : vector<16x8xf32>
    %345 = tpu.matmul %344, %328, %cst_138 {dimension_numbers = #tpu.dot_dimension_numbers<[1], [0], [0], [1], [0, 0, 1, 1], [], []>} : vector<16x8xf32>, vector<8x8xf32>, vector<16x8xf32> -> vector<16x8xf32>
    %cst_139 = arith.constant dense<0.000000e+00> : vector<8x16xf32>
    %346 = tpu.matmul %326, %325, %cst_139 {dimension_numbers = #tpu.dot_dimension_numbers<[1], [1], [0], [0], [0, 0, 1, 0], [], []>} : vector<8x8xf32>, vector<16x8xf32>, vector<8x16xf32> -> vector<8x16xf32>
    %cst_140 = arith.constant -5.000000e+04 : f32
    %cst_141 = arith.constant 5.000000e+04 : f32
    %347 = vector.broadcast %cst_140 : f32 to vector<8x16xf32>
    %348 = arith.maximumf %347, %346 : vector<8x16xf32>
    %349 = vector.broadcast %cst_141 : f32 to vector<8x16xf32>
    %350 = arith.minimumf %349, %348 : vector<8x16xf32>
    %cst_142 = arith.constant dense<0xFF800000> : vector<8xf32>
    %351 = vector.multi_reduction <maximumf>, %350, %cst_142 [1] : vector<8x16xf32> to vector<8xf32>
    %352 = vector.shape_cast %351 : vector<8xf32> to vector<8x1xf32>
    %353 = vector.broadcast %352 : vector<8x1xf32> to vector<8x16xf32>
    %354 = arith.subf %350, %353 : vector<8x16xf32>
    %cst_143 = arith.constant -5.000000e+04 : f32
    %cst_144 = arith.constant 5.000000e+04 : f32
    %355 = vector.broadcast %cst_143 : f32 to vector<8x16xf32>
    %356 = arith.maximumf %355, %354 : vector<8x16xf32>
    %357 = vector.broadcast %cst_144 : f32 to vector<8x16xf32>
    %358 = arith.minimumf %357, %356 : vector<8x16xf32>
    %359 = math.exp %358 : vector<8x16xf32>
    %cst_145 = arith.constant dense<0.000000e+00> : vector<8xf32>
    %360 = vector.multi_reduction <add>, %359, %cst_145 [1] : vector<8x16xf32> to vector<8xf32>
    %361 = vector.shape_cast %360 : vector<8xf32> to vector<8x1xf32>
    %362 = tpu.reciprocal %361 : vector<8x1xf32> -> vector<8x1xf32>
    %363 = vector.broadcast %362 : vector<8x1xf32> to vector<8x16xf32>
    %364 = arith.mulf %359, %363 : vector<8x16xf32>
    %cst_146 = arith.constant dense<0.000000e+00> : vector<8x8xf32>
    %365 = tpu.matmul %364, %327, %cst_146 {dimension_numbers = #tpu.dot_dimension_numbers<[1], [0], [0], [1], [0, 0, 1, 1], [], []>} : vector<8x16xf32>, vector<16x8xf32>, vector<8x8xf32> -> vector<8x8xf32>
    %366 = tpu.concatenate %222, %263, %304, %345 in 1 : vector<16x8xf32>, vector<16x8xf32>, vector<16x8xf32>, vector<16x8xf32> -> vector<16x32xf32>
    %cst_147 = arith.constant 1.000000e+00 : f32
    %367 = vector.broadcast %cst_147 : f32 to vector<16x32xf32>
    %368 = arith.addf %366, %367 : vector<16x32xf32>
    %c1_148 = arith.constant 1 : index
    %c0_149 = arith.constant 0 : index
    %c0_150 = arith.constant 0 : index
    %369 = vector.load %arg6[%c1_148, %c0_149, %c0_150] : memref<2x16x32xf32, #tpu.memory_space<vmem>>, vector<1x16x32xf32>
    %370 = vector.shape_cast %369 : vector<1x16x32xf32> to vector<16x32xf32>
    %371 = vector.shape_cast %368 : vector<16x32xf32> to vector<1x16x32xf32>
    tpu.vector_store %arg6[%c1_148, %c0_149, %c0_150], %371 {strides = array<i32>} : memref<2x16x32xf32, #tpu.memory_space<vmem>>, vector<1x16x32xf32>,
    %372 = tpu.concatenate %242, %283, %324, %365 in 1 : vector<8x8xf32>, vector<8x8xf32>, vector<8x8xf32>, vector<8x8xf32> -> vector<8x32xf32>
    %cst_151 = arith.constant 1.000000e+00 : f32
    %373 = vector.broadcast %cst_151 : f32 to vector<8x32xf32>
    %374 = arith.addf %372, %373 : vector<8x32xf32>
    %c1_152 = arith.constant 1 : index
    %c0_153 = arith.constant 0 : index
    %c0_154 = arith.constant 0 : index
    %375 = vector.load %arg7[%c1_152, %c0_153, %c0_154] : memref<2x8x32xf32, #tpu.memory_space<vmem>>, vector<1x8x32xf32>
    %376 = vector.shape_cast %375 : vector<1x8x32xf32> to vector<8x32xf32>
    %377 = vector.shape_cast %374 : vector<8x32xf32> to vector<1x8x32xf32>
    tpu.vector_store %arg7[%c1_152, %c0_153, %c0_154], %377 {strides = array<i32>} : memref<2x8x32xf32, #tpu.memory_space<vmem>>, vector<1x8x32xf32>,
    return
  }
  func.func @transform_0(%arg0: i32) -> (i32, i32, i32) {
    %c0_i32 = arith.constant 0 : i32
    %c0_i32_0 = arith.constant 0 : i32
    %c0_i32_1 = arith.constant 0 : i32
    return %arg0, %c0_i32, %c0_i32_0 : i32, i32, i32
  }
  func.func @transform_1(%arg0: i32) -> (i32, i32, i32) {
    %c0_i32 = arith.constant 0 : i32
    %c0_i32_0 = arith.constant 0 : i32
    %c0_i32_1 = arith.constant 0 : i32
    return %arg0, %c0_i32, %c0_i32_0 : i32, i32, i32
  }
  func.func @transform_2(%arg0: i32) -> (i32, i32, i32) {
    %c0_i32 = arith.constant 0 : i32
    %c0_i32_0 = arith.constant 0 : i32
    %c0_i32_1 = arith.constant 0 : i32
    return %arg0, %c0_i32, %c0_i32_0 : i32, i32, i32
  }
  func.func @transform_3(%arg0: i32) -> (i32, i32, i32) {
    %c0_i32 = arith.constant 0 : i32
    %c0_i32_0 = arith.constant 0 : i32
    %c0_i32_1 = arith.constant 0 : i32
    return %arg0, %c0_i32, %c0_i32_0 : i32, i32, i32
  }
  func.func @transform_4(%arg0: i32) -> (i32, i32, i32) {
    %c0_i32 = arith.constant 0 : i32
    %c0_i32_0 = arith.constant 0 : i32
    %c0_i32_1 = arith.constant 0 : i32
    return %arg0, %c0_i32, %c0_i32_0 : i32, i32, i32
  }
  func.func @transform_5(%arg0: i32) -> (i32, i32, i32) {
    %c0_i32 = arith.constant 0 : i32
    %c0_i32_0 = arith.constant 0 : i32
    %c0_i32_1 = arith.constant 0 : i32
    return %arg0, %c0_i32, %c0_i32_0 : i32, i32, i32
  }
  func.func @transform_6(%arg0: i32) -> (i32, i32, i32) {
    %c0_i32 = arith.constant 0 : i32
    %c0_i32_0 = arith.constant 0 : i32
    %c0_i32_1 = arith.constant 0 : i32
    return %arg0, %c0_i32, %c0_i32_0 : i32, i32, i32
  }
}

</mosaic_0001>

<llo_original>
// kernel: tpu_custom_call.1
$region0: #{tpu_custom_call.1}
  #allocation0 [shape = 'u32[]', space=smem, size = 0x4, offset = 0x4, fixed_abs, tag = 'smem constant byte address 0x4 - core index']
  #allocation1 [shape = 'u32[144,128]{1,0:T(1,128)}', space=vmem, size = 0x12000, scoped, tag = 'internal scratch']
  %s0 = inlined_call_operand.hbm [shape: f32[2,16,32], index: 0, kind: input, shape index: {}]
  %s1 = inlined_call_operand.hbm [shape: f32[2,8,32], index: 1, kind: input, shape index: {}]
  %s2 = inlined_call_operand.hbm [shape: f32[2,16,32], index: 2, kind: input, shape index: {}]
  %s3 = inlined_call_operand.hbm [shape: f32[2,8,32], index: 3, kind: input, shape index: {}]
  %s4 = inlined_call_operand.vmem [shape: f32[2,1,8], index: 4, kind: input, shape index: {}]
  %s5 = inlined_call_operand.hbm [shape: f32[2,16,32], index: 5, kind: output, shape index: {0}]
  %s6 = inlined_call_operand.hbm [shape: f32[2,8,32], index: 6, kind: output, shape index: {1}]
  %7 = xla_tuple %s5, %s6
  %s8 = sld [smem:[#allocation0]]
  $region54: #{tpu_custom_call.1} parent=0
    _
  %s10 = ssub.s32 1, %s8
  %s11 = scalar_select 0, %s10, %s8
  $region1: #{tpu_custom_call.1} parent=0
    #allocation2 [shape = 'u8[16384]{0}', space=vmem, size = 0x4000, scoped, tag = 'input window, operand 0, single buffered']
    #allocation3 [shape = 's32[1]{0}', space=sflag, size = 0x4, scoped, tag = 'scoped memory for tpu_custom_call.1']
    #allocation4 [shape = 's32[1]{0}', space=sflag, size = 0x4, scoped, tag = 'scoped memory for tpu_custom_call.1']
    #allocation5 [shape = 'u8[8192]{0}', space=vmem, size = 0x2000, scoped, tag = 'input window, operand 1, single buffered']
    #allocation6 [shape = 's32[1]{0}', space=sflag, size = 0x4, scoped, tag = 'scoped memory for tpu_custom_call.1']
    #allocation7 [shape = 'u8[16384]{0}', space=vmem, size = 0x4000, scoped, tag = 'input window, operand 2, single buffered']
    #allocation8 [shape = 'u8[8192]{0}', space=vmem, size = 0x2000, scoped, tag = 'input window, operand 3, single buffered']
    #allocation9 [shape = 's32[1]{0}', space=sflag, size = 0x4, scoped, tag = 'scoped memory for tpu_custom_call.1']
    #allocation10 [shape = 'u8[16384]{0}', space=vmem, size = 0x4000, scoped, tag = 'output window, operand 0, single buffered']
    #allocation11 [shape = 'u8[8192]{0}', space=vmem, size = 0x2000, scoped, tag = 'output window, operand 1, single buffered']
    #allocation12 [shape = 's32[1]{0}', space=sflag, size = 0x4, scoped, tag = 'scoped memory for tpu_custom_call.1']
    %12 = vsyncpa [#allocation3], 0
    %13 = vsyncpa [#allocation6], 0
    %14 = vsyncpa [#allocation9], 0
    %15 = vsyncpa [#allocation4], 0
    %16 = vsyncpa [#allocation12], 0
    // Predicated region
    $region2: #{tpu_custom_call.1} parent=1 // pred_check
      _
    $region3: #{tpu_custom_call.1} parent=1 // pred_check_branch
      %18 = sbr.rel (0) target = $region5
    $region4: #{tpu_custom_call.1} parent=1 // pred_region
      %s20 = ssub.s32 512, 512
      %21 = vsyncadd [#allocation3], %s20
      %s22 = sshll.u32 [#allocation2], 4
      %s23 = int_to_ptr.vmem [resolvable:$true] %s22
      %28 = dma.hbm_to_vmem [thread:$0]  %s0, 512, %s23, [#allocation3], 128, 128, 8
    $region5: #{tpu_custom_call.1} parent=1 // pred_fallthru
      _
    // Predicated region
    $region6: #{tpu_custom_call.1} parent=1 // pred_check
      _
    $region7: #{tpu_custom_call.1} parent=1 // pred_check_branch
      %30 = sbr.rel (0) target = $region9
    $region8: #{tpu_custom_call.1} parent=1 // pred_region
      %s32 = ssub.s32 256, 256
      %33 = vsyncadd [#allocation6], %s32
      %s34 = sshll.u32 [#allocation5], 4
      %s35 = int_to_ptr.vmem [resolvable:$true] %s34
      %40 = dma.hbm_to_vmem [thread:$0]  %s1, 256, %s35, [#allocation6], 128, 128, 8
    $region9: #{tpu_custom_call.1} parent=1 // pred_fallthru
      _
    // Predicated region
    $region10: #{tpu_custom_call.1} parent=1 // pred_check
      _
    $region11: #{tpu_custom_call.1} parent=1 // pred_check_branch
      %42 = sbr.rel (0) target = $region13
    $region12: #{tpu_custom_call.1} parent=1 // pred_region
      %s44 = ssub.s32 512, 512
      %45 = vsyncadd [#allocation6], %s44
      %s46 = sshll.u32 [#allocation7], 4
      %s47 = int_to_ptr.vmem [resolvable:$true] %s46
      %52 = dma.hbm_to_vmem [thread:$0]  %s2, 512, %s47, [#allocation6], 128, 128, 8
    $region13: #{tpu_custom_call.1} parent=1 // pred_fallthru
      _
    // Predicated region
    $region14: #{tpu_custom_call.1} parent=1 // pred_check
      _
    $region15: #{tpu_custom_call.1} parent=1 // pred_check_branch
      %54 = sbr.rel (0) target = $region17
    $region16: #{tpu_custom_call.1} parent=1 // pred_region
      %s56 = ssub.s32 256, 256
      %57 = vsyncadd [#allocation9], %s56
      %s58 = sshll.u32 [#allocation8], 4
      %s59 = int_to_ptr.vmem [resolvable:$true] %s58
      %64 = dma.hbm_to_vmem [thread:$0]  %s3, 256, %s59, [#allocation9], 128, 128, 8
    $region17: #{tpu_custom_call.1} parent=1 // pred_fallthru
      _
    // Predicated region
    $region18: #{tpu_custom_call.1} parent=1 // pred_check
      _
    $region19: #{tpu_custom_call.1} parent=1 // pred_check_branch
      %66 = sbr.rel (0) target = $region21
    $region20: #{tpu_custom_call.1} parent=1 // pred_region
      _
    $region21: #{tpu_custom_call.1} parent=1 // pred_fallthru
      _
    // Predicated region
    $region22: #{tpu_custom_call.1} parent=1 // pred_check
      _
    $region23: #{tpu_custom_call.1} parent=1 // pred_check_branch
      %68 = sbr.rel (0) target = $region25
    $region24: #{tpu_custom_call.1} parent=1 // pred_region
      %69 = dma.done [#allocation3], 512
    $region25: #{tpu_custom_call.1} parent=1 // pred_fallthru
      _
    // Predicated region
    $region26: #{tpu_custom_call.1} parent=1 // pred_check
      _
    $region27: #{tpu_custom_call.1} parent=1 // pred_check_branch
      %71 = sbr.rel (0) target = $region29
    $region28: #{tpu_custom_call.1} parent=1 // pred_region
      %72 = dma.done [#allocation6], 256
    $region29: #{tpu_custom_call.1} parent=1 // pred_fallthru
      _
    // Predicated region
    $region30: #{tpu_custom_call.1} parent=1 // pred_check
      _
    $region31: #{tpu_custom_call.1} parent=1 // pred_check_branch
      %74 = sbr.rel (0) target = $region33
    $region32: #{tpu_custom_call.1} parent=1 // pred_region
      %75 = dma.done [#allocation6], 512
    $region33: #{tpu_custom_call.1} parent=1 // pred_fallthru
      _
    // Predicated region
    $region34: #{tpu_custom_call.1} parent=1 // pred_check
      _
    $region35: #{tpu_custom_call.1} parent=1 // pred_check_branch
      %77 = sbr.rel (0) target = $region37
    $region36: #{tpu_custom_call.1} parent=1 // pred_region
      %78 = dma.done [#allocation9], 256
    $region37: #{tpu_custom_call.1} parent=1 // pred_fallthru
      _
    %v79 = vld [vmem:[#allocation2] sm:$0xff]
    %v80 = vld [vmem:[#allocation2 + $0x8] sm:$0xff]
    %v81 = vld [vmem:[#allocation5] sm:$0xff]
    %v82 = vld [vmem:[#allocation7] sm:$0xff]
    %v83 = vld [vmem:[#allocation7 + $0x8] sm:$0xff]
    %v84 = vld [vmem:[#allocation8] sm:$0xff]
    %v85 = vld [vmem:[%s4] sm:$0x1]
    %v87 = vlaneseq
    %v88 = vshrl.u32 %v87, 7
    %v89 = vsub.s32 0, %v88
    %v90 = vrot.slane %v85, %v89
    %vm92 = vcmask 64512
    %v94 = vsel %vm92, %v79, 0
    %v97 = vsel %vm92, %v80, 0
    %v100 = vsel %vm92, %v81, 0
    %102 = vmatprep.subr.mxu0 0.0
    %103 = vmatpush1.xpose.msra.mxu0 %v100
    %104 = vmatprep.subr.mxu0 0.0
    %105 = vmatpush1.xpose.msra.mxu0 0.0
    %106 = vmatprep.subr.mxu0 0.0
    %107 = vmatpush1.xpose.msra.mxu0 0.0
    %108 = vmatprep.subr.mxu0 0.0
    %109 = vmatpush1.xpose.msra.mxu0 0.0
    %110 = vmatprep.subr.mxu0 0.0
    %111 = vmatpush1.xpose.msra.mxu0 0.0
    %112 = vmatprep.subr.mxu0 0.0
    %113 = vmatpush1.xpose.msra.mxu0 0.0
    %114 = vmatprep.subr.mxu0 0.0
    %115 = vmatpush1.xpose.msra.mxu0 0.0
    %116 = vmatprep.subr.mxu0 0.0
    %117 = vmatpush1.xpose.msra.mxu0 0.0
    %118 = vmatprep.subr.mxu0 0.0
    %119 = vmatpush1.xpose.msra.mxu0 0.0
    %120 = vmatprep.subr.mxu0 0.0
    %121 = vmatpush1.xpose.msra.mxu0 0.0
    %122 = vmatprep.subr.mxu0 0.0
    %123 = vmatpush1.xpose.msra.mxu0 0.0
    %124 = vmatprep.subr.mxu0 0.0
    %125 = vmatpush1.xpose.msra.mxu0 0.0
    %126 = vmatprep.subr.mxu0 0.0
    %127 = vmatpush1.xpose.msra.mxu0 0.0
    %128 = vmatprep.subr.mxu0 0.0
    %129 = vmatpush1.xpose.msra.mxu0 0.0
    %130 = vmatprep.subr.mxu0 0.0
    %131 = vmatpush1.xpose.msra.mxu0 0.0
    %132 = vmatprep.subr.mxu0 0.0
    %133 = vmatpush1.xpose.msra.mxu0 0.0
    %134 = vmatprep.subr.mxu0 0.0
    %135 = vmatpush1.xpose.msra.mxu0 0.0
    %136 = vmatprep.subr.mxu0 0.0
    %137 = vmatpush1.xpose.msra.mxu0 0.0
    %138 = vmatprep.subr.mxu0 0.0
    %139 = vmatpush1.xpose.msra.mxu0 0.0
    %140 = vmatprep.subr.mxu0 0.0
    %141 = vmatpush1.xpose.msra.mxu0 0.0
    %142 = vmatprep.subr.mxu0 0.0
    %143 = vmatpush1.xpose.msra.mxu0 0.0
    %144 = vmatprep.subr.mxu0 0.0
    %145 = vmatpush1.xpose.msra.mxu0 0.0
    %146 = vmatprep.subr.mxu0 0.0
    %147 = vmatpush1.xpose.msra.mxu0 0.0
    %148 = vmatprep.subr.mxu0 0.0
    %149 = vmatpush1.xpose.msra.mxu0 0.0
    %150 = vmatprep.subr.mxu0 0.0
    %151 = vmatpush1.xpose.msra.mxu0 0.0
    %152 = vmatprep.subr.mxu0 0.0
    %153 = vmatpush1.xpose.msra.mxu0 0.0
    %154 = vmatprep.subr.mxu0 0.0
    %155 = vmatpush1.xpose.msra.mxu0 0.0
    %156 = vmatprep.subr.mxu0 0.0
    %157 = vmatpush1.xpose.msra.mxu0 0.0
    %158 = vmatprep.subr.mxu0 0.0
    %159 = vmatpush1.xpose.msra.mxu0 0.0
    %160 = vmatprep.subr.mxu0 0.0
    %161 = vmatpush1.xpose.msra.mxu0 0.0
    %162 = vmatprep.subr.mxu0 0.0
    %163 = vmatpush1.xpose.msra.mxu0 0.0
    %164 = vmatprep.subr.mxu0 0.0
    %165 = vmatpush1.xpose.msra.mxu0 0.0
    %166 = vmatprep.mubr.f32.mxu0 0.0
    %167 = vmatmul.mubr.f32.gmra.mrb[0].mxu0 %v94
    %v168 = vpop.f32.mrb[0].mxu0
    %v169 = vadd.f32 0.0, %v168
    %v170 = vpop.f32.mrb[0].mxu0
    %171 = vmatprep.mubr.f32.mxu0 0.0
    %172 = vmatmul.mubr.f32.gmra.mrb[0].mxu0 %v97
    %v173 = vpop.f32.mrb[0].mxu0
    %v174 = vadd.f32 0.0, %v173
    %v175 = vpop.f32.mrb[0].mxu0
    %176 = vdwg.mxu0
    %v177 = vmax.f32 %v169, -50000.0
    %v178 = vmax.f32 %v174, -50000.0
    %v179 = vmin.f32 %v177, 50000.0
    %v180 = vmin.f32 %v178, 50000.0
    %v181 = vadd.f32 %v179, %v90
    %v182 = vadd.f32 %v180, %v90
    %v183 = vsel %vm92, %v181, -inf
    %184 = vmax.xlane.f32.xlu0 %v183
    %v185 = vpop.xlane.xlu0 %184
    %v186 = vsel %vm92, %v182, -inf
    %187 = vmax.xlane.f32.xlu0 %v186
    %v188 = vpop.xlane.xlu0 %187
    %v189 = vsub.f32 %v181, %v185
    %v190 = vsub.f32 %v182, %v188
    %v191 = vmul.f32 %v189, 1.442695
    %v192 = vpow.pop %v191
    %v193 = vmul.f32 %v190, 1.442695
    %v194 = vpow.pop %v193
    %v195 = vsel %vm92, %v192, 0.0
    %196 = vadd.xlane.f32.xlu0 %v195
    %v197 = vpop.xlane.xlu0 %196
    %v198 = vsel %vm92, %v194, 0.0
    %199 = vadd.xlane.f32.xlu0 %v198
    %v200 = vpop.xlane.xlu0 %199
    %v201 = vrcp.pop %v197
    %v202 = vrcp.pop %v200
    %v203 = vmul.f32 %v192, %v201
    %v204 = vmul.f32 %v194, %v202
    %v206 = vsel %vm92, %v203, 0
    %v209 = vsel %vm92, %v204, 0
    %211 = vmatprep.subr.mxu0 0.0
    %212 = vmatpush1.msra.mxu0 %v84
    %213 = vmatprep.subr.mxu0 0.0
    %214 = vmatpush1.msra.mxu0 0.0
    %215 = vmatprep.subr.mxu0 0.0
    %216 = vmatpush1.msra.mxu0 0.0
    %217 = vmatprep.subr.mxu0 0.0
    %218 = vmatpush1.msra.mxu0 0.0
    %219 = vmatprep.subr.mxu0 0.0
    %220 = vmatpush1.msra.mxu0 0.0
    %221 = vmatprep.subr.mxu0 0.0
    %222 = vmatpush1.msra.mxu0 0.0
    %223 = vmatprep.subr.mxu0 0.0
    %224 = vmatpush1.msra.mxu0 0.0
    %225 = vmatprep.subr.mxu0 0.0
    %226 = vmatpush1.msra.mxu0 0.0
    %227 = vmatprep.subr.mxu0 0.0
    %228 = vmatpush1.msra.mxu0 0.0
    %229 = vmatprep.subr.mxu0 0.0
    %230 = vmatpush1.msra.mxu0 0.0
    %231 = vmatprep.subr.mxu0 0.0
    %232 = vmatpush1.msra.mxu0 0.0
    %233 = vmatprep.subr.mxu0 0.0
    %234 = vmatpush1.msra.mxu0 0.0
    %235 = vmatprep.subr.mxu0 0.0
    %236 = vmatpush1.msra.mxu0 0.0
    %237 = vmatprep.subr.mxu0 0.0
    %238 = vmatpush1.msra.mxu0 0.0
    %239 = vmatprep.subr.mxu0 0.0
    %240 = vmatpush1.msra.mxu0 0.0
    %241 = vmatprep.subr.mxu0 0.0
    %242 = vmatpush1.msra.mxu0 0.0
    %243 = vmatprep.subr.mxu0 0.0
    %244 = vmatpush1.msra.mxu0 0.0
    %245 = vmatprep.subr.mxu0 0.0
    %246 = vmatpush1.msra.mxu0 0.0
    %247 = vmatprep.subr.mxu0 0.0
    %248 = vmatpush1.msra.mxu0 0.0
    %249 = vmatprep.subr.mxu0 0.0
    %250 = vmatpush1.msra.mxu0 0.0
    %251 = vmatprep.subr.mxu0 0.0
    %252 = vmatpush1.msra.mxu0 0.0
    %253 = vmatprep.subr.mxu0 0.0
    %254 = vmatpush1.msra.mxu0 0.0
    %255 = vmatprep.subr.mxu0 0.0
    %256 = vmatpush1.msra.mxu0 0.0
    %257 = vmatprep.subr.mxu0 0.0
    %258 = vmatpush1.msra.mxu0 0.0
    %259 = vmatprep.subr.mxu0 0.0
    %260 = vmatpush1.msra.mxu0 0.0
    %261 = vmatprep.subr.mxu0 0.0
    %262 = vmatpush1.msra.mxu0 0.0
    %263 = vmatprep.subr.mxu0 0.0
    %264 = vmatpush1.msra.mxu0 0.0
    %265 = vmatprep.subr.mxu0 0.0
    %266 = vmatpush1.msra.mxu0 0.0
    %267 = vmatprep.subr.mxu0 0.0
    %268 = vmatpush1.msra.mxu0 0.0
    %269 = vmatprep.subr.mxu0 0.0
    %270 = vmatpush1.msra.mxu0 0.0
    %271 = vmatprep.subr.mxu0 0.0
    %272 = vmatpush1.msra.mxu0 0.0
    %273 = vmatprep.subr.mxu0 0.0
    %274 = vmatpush1.msra.mxu0 0.0
    %275 = vmatprep.mubr.f32.mxu0 0.0
    %276 = vmatmul.mubr.f32.gmra.mrb[0].mxu0 %v206
    %v277 = vpop.f32.mrb[0].mxu0
    %v278 = vadd.f32 0.0, %v277
    %v279 = vpop.f32.mrb[0].mxu0
    %280 = vmatprep.mubr.f32.mxu0 0.0
    %281 = vmatmul.mubr.f32.gmra.mrb[0].mxu0 %v209
    %v282 = vpop.f32.mrb[0].mxu0
    %v283 = vadd.f32 0.0, %v282
    %v284 = vpop.f32.mrb[0].mxu0
    %285 = vdwg.mxu0
    %286 = vmatprep.subr.mxu0 0.0
    %287 = vmatpush1.xpose.msra.mxu0 %v94
    %288 = vmatprep.subr.mxu0 0.0
    %289 = vmatpush1.xpose.msra.mxu0 %v97
    %290 = vmatprep.subr.mxu0 0.0
    %291 = vmatpush1.xpose.msra.mxu0 0.0
    %292 = vmatprep.subr.mxu0 0.0
    %293 = vmatpush1.xpose.msra.mxu0 0.0
    %294 = vmatprep.subr.mxu0 0.0
    %295 = vmatpush1.xpose.msra.mxu0 0.0
    %296 = vmatprep.subr.mxu0 0.0
    %297 = vmatpush1.xpose.msra.mxu0 0.0
    %298 = vmatprep.subr.mxu0 0.0
    %299 = vmatpush1.xpose.msra.mxu0 0.0
    %300 = vmatprep.subr.mxu0 0.0
    %301 = vmatpush1.xpose.msra.mxu0 0.0
    %302 = vmatprep.subr.mxu0 0.0
    %303 = vmatpush1.xpose.msra.mxu0 0.0
    %304 = vmatprep.subr.mxu0 0.0
    %305 = vmatpush1.xpose.msra.mxu0 0.0
    %306 = vmatprep.subr.mxu0 0.0
    %307 = vmatpush1.xpose.msra.mxu0 0.0
    %308 = vmatprep.subr.mxu0 0.0
    %309 = vmatpush1.xpose.msra.mxu0 0.0
    %310 = vmatprep.subr.mxu0 0.0
    %311 = vmatpush1.xpose.msra.mxu0 0.0
    %312 = vmatprep.subr.mxu0 0.0
    %313 = vmatpush1.xpose.msra.mxu0 0.0
    %314 = vmatprep.subr.mxu0 0.0
    %315 = vmatpush1.xpose.msra.mxu0 0.0
    %316 = vmatprep.subr.mxu0 0.0
    %317 = vmatpush1.xpose.msra.mxu0 0.0
    %318 = vmatprep.subr.mxu0 0.0
    %319 = vmatpush1.xpose.msra.mxu0 0.0
    %320 = vmatprep.subr.mxu0 0.0
    %321 = vmatpush1.xpose.msra.mxu0 0.0
    %322 = vmatprep.subr.mxu0 0.0
    %323 = vmatpush1.xpose.msra.mxu0 0.0
    %324 = vmatprep.subr.mxu0 0.0
    %325 = vmatpush1.xpose.msra.mxu0 0.0
    %326 = vmatprep.subr.mxu0 0.0
    %327 = vmatpush1.xpose.msra.mxu0 0.0
    %328 = vmatprep.subr.mxu0 0.0
    %329 = vmatpush1.xpose.msra.mxu0 0.0
    %330 = vmatprep.subr.mxu0 0.0
    %331 = vmatpush1.xpose.msra.mxu0 0.0
    %332 = vmatprep.subr.mxu0 0.0
    %333 = vmatpush1.xpose.msra.mxu0 0.0
    %334 = vmatprep.subr.mxu0 0.0
    %335 = vmatpush1.xpose.msra.mxu0 0.0
    %336 = vmatprep.subr.mxu0 0.0
    %337 = vmatpush1.xpose.msra.mxu0 0.0
    %338 = vmatprep.subr.mxu0 0.0
    %339 = vmatpush1.xpose.msra.mxu0 0.0
    %340 = vmatprep.subr.mxu0 0.0
    %341 = vmatpush1.xpose.msra.mxu0 0.0
    %342 = vmatprep.subr.mxu0 0.0
    %343 = vmatpush1.xpose.msra.mxu0 0.0
    %344 = vmatprep.subr.mxu0 0.0
    %345 = vmatpush1.xpose.msra.mxu0 0.0
    %346 = vmatprep.subr.mxu0 0.0
    %347 = vmatpush1.xpose.msra.mxu0 0.0
    %348 = vmatprep.subr.mxu0 0.0
    %349 = vmatpush1.xpose.msra.mxu0 0.0
    %350 = vmatprep.mubr.f32.mxu0 0.0
    %351 = vmatmul.mubr.f32.gmra.mrb[0].mxu0 %v100
    %v352 = vpop.f32.mrb[0].mxu0
    %v353 = vadd.f32 0.0, %v352
    %v354 = vpop.f32.mrb[0].mxu0
    %355 = vdwg.mxu0
    %v356 = vmax.f32 %v353, -50000.0
    %v357 = vmin.f32 %v356, 50000.0
    %vm358 = vcmask 130048
    %v359 = vsel %vm358, %v357, -inf
    %360 = vmax.xlane.f32.xlu0 %v359
    %v361 = vpop.xlane.xlu0 %360
    %v362 = vsub.f32 %v357, %v361
    %v363 = vmax.f32 %v362, -50000.0
    %v364 = vmin.f32 %v363, 50000.0
    %v365 = vmul.f32 %v364, 1.442695
    %v366 = vpow.pop %v365
    %v367 = vsel %vm358, %v366, 0.0
    %368 = vadd.xlane.f32.xlu0 %v367
    %v369 = vpop.xlane.xlu0 %368
    %v370 = vrcp.pop %v369
    %v371 = vmul.f32 %v366, %v370
    %v373 = vsel %vm358, %v371, 0
    %375 = vmatprep.subr.mxu0 0.0
    %376 = vmatpush1.msra.mxu0 %v82
    %377 = vmatprep.subr.mxu0 0.0
    %378 = vmatpush1.msra.mxu0 %v83
    %379 = vmatprep.subr.mxu0 0.0
    %380 = vmatpush1.msra.mxu0 0.0
    %381 = vmatprep.subr.mxu0 0.0
    %382 = vmatpush1.msra.mxu0 0.0
    %383 = vmatprep.subr.mxu0 0.0
    %384 = vmatpush1.msra.mxu0 0.0
    %385 = vmatprep.subr.mxu0 0.0
    %386 = vmatpush1.msra.mxu0 0.0
    %387 = vmatprep.subr.mxu0 0.0
    %388 = vmatpush1.msra.mxu0 0.0
    %389 = vmatprep.subr.mxu0 0.0
    %390 = vmatpush1.msra.mxu0 0.0
    %391 = vmatprep.subr.mxu0 0.0
    %392 = vmatpush1.msra.mxu0 0.0
    %393 = vmatprep.subr.mxu0 0.0
    %394 = vmatpush1.msra.mxu0 0.0
    %395 = vmatprep.subr.mxu0 0.0
    %396 = vmatpush1.msra.mxu0 0.0
    %397 = vmatprep.subr.mxu0 0.0
    %398 = vmatpush1.msra.mxu0 0.0
    %399 = vmatprep.subr.mxu0 0.0
    %400 = vmatpush1.msra.mxu0 0.0
    %401 = vmatprep.subr.mxu0 0.0
    %402 = vmatpush1.msra.mxu0 0.0
    %403 = vmatprep.subr.mxu0 0.0
    %404 = vmatpush1.msra.mxu0 0.0
    %405 = vmatprep.subr.mxu0 0.0
    %406 = vmatpush1.msra.mxu0 0.0
    %407 = vmatprep.subr.mxu0 0.0
    %408 = vmatpush1.msra.mxu0 0.0
    %409 = vmatprep.subr.mxu0 0.0
    %410 = vmatpush1.msra.mxu0 0.0
    %411 = vmatprep.subr.mxu0 0.0
    %412 = vmatpush1.msra.mxu0 0.0
    %413 = vmatprep.subr.mxu0 0.0
    %414 = vmatpush1.msra.mxu0 0.0
    %415 = vmatprep.subr.mxu0 0.0
    %416 = vmatpush1.msra.mxu0 0.0
    %417 = vmatprep.subr.mxu0 0.0
    %418 = vmatpush1.msra.mxu0 0.0
    %419 = vmatprep.subr.mxu0 0.0
    %420 = vmatpush1.msra.mxu0 0.0
    %421 = vmatprep.subr.mxu0 0.0
    %422 = vmatpush1.msra.mxu0 0.0
    %423 = vmatprep.subr.mxu0 0.0
    %424 = vmatpush1.msra.mxu0 0.0
    %425 = vmatprep.subr.mxu0 0.0
    %426 = vmatpush1.msra.mxu0 0.0
    %427 = vmatprep.subr.mxu0 0.0
    %428 = vmatpush1.msra.mxu0 0.0
    %429 = vmatprep.subr.mxu0 0.0
    %430 = vmatpush1.msra.mxu0 0.0
    %431 = vmatprep.subr.mxu0 0.0
    %432 = vmatpush1.msra.mxu0 0.0
    %433 = vmatprep.subr.mxu0 0.0
    %434 = vmatpush1.msra.mxu0 0.0
    %435 = vmatprep.subr.mxu0 0.0
    %436 = vmatpush1.msra.mxu0 0.0
    %437 = vmatprep.subr.mxu0 0.0
    %438 = vmatpush1.msra.mxu0 0.0
    %439 = vmatprep.mubr.f32.mxu0 0.0
    %440 = vmatmul.mubr.f32.gmra.mrb[0].mxu0 %v373
    %v441 = vpop.f32.mrb[0].mxu0
    %v442 = vadd.f32 0.0, %v441
    %v443 = vpop.f32.mrb[0].mxu0
    %444 = vdwg.mxu0
    %445 = vrot.lane.b32.xlu0 %v79, 120
    %v446 = vpop.permute.xlu0 %445
    %447 = vrot.lane.b32.xlu0 %v80, 120
    %v448 = vpop.permute.xlu0 %447
    %449 = vrot.lane.b32.xlu0 %v81, 120
    %v450 = vpop.permute.xlu0 %449
    %v451 = vsel %vm92, %v446, 0
    %v453 = vsel %vm92, %v448, 0
    %v455 = vsel %vm92, %v450, 0
    %457 = vmatprep.subr.mxu0 0.0
    %458 = vmatpush1.xpose.msra.mxu0 %v455
    %459 = vmatprep.subr.mxu0 0.0
    %460 = vmatpush1.xpose.msra.mxu0 0.0
    %461 = vmatprep.subr.mxu0 0.0
    %462 = vmatpush1.xpose.msra.mxu0 0.0
    %463 = vmatprep.subr.mxu0 0.0
    %464 = vmatpush1.xpose.msra.mxu0 0.0
    %465 = vmatprep.subr.mxu0 0.0
    %466 = vmatpush1.xpose.msra.mxu0 0.0
    %467 = vmatprep.subr.mxu0 0.0
    %468 = vmatpush1.xpose.msra.mxu0 0.0
    %469 = vmatprep.subr.mxu0 0.0
    %470 = vmatpush1.xpose.msra.mxu0 0.0
    %471 = vmatprep.subr.mxu0 0.0
    %472 = vmatpush1.xpose.msra.mxu0 0.0
    %473 = vmatprep.subr.mxu0 0.0
    %474 = vmatpush1.xpose.msra.mxu0 0.0
    %475 = vmatprep.subr.mxu0 0.0
    %476 = vmatpush1.xpose.msra.mxu0 0.0
    %477 = vmatprep.subr.mxu0 0.0
    %478 = vmatpush1.xpose.msra.mxu0 0.0
    %479 = vmatprep.subr.mxu0 0.0
    %480 = vmatpush1.xpose.msra.mxu0 0.0
    %481 = vmatprep.subr.mxu0 0.0
    %482 = vmatpush1.xpose.msra.mxu0 0.0
    %483 = vmatprep.subr.mxu0 0.0
    %484 = vmatpush1.xpose.msra.mxu0 0.0
    %485 = vmatprep.subr.mxu0 0.0
    %486 = vmatpush1.xpose.msra.mxu0 0.0
    %487 = vmatprep.subr.mxu0 0.0
    %488 = vmatpush1.xpose.msra.mxu0 0.0
    %489 = vmatprep.subr.mxu0 0.0
    %490 = vmatpush1.xpose.msra.mxu0 0.0
    %491 = vmatprep.subr.mxu0 0.0
    %492 = vmatpush1.xpose.msra.mxu0 0.0
    %493 = vmatprep.subr.mxu0 0.0
    %494 = vmatpush1.xpose.msra.mxu0 0.0
    %495 = vmatprep.subr.mxu0 0.0
    %496 = vmatpush1.xpose.msra.mxu0 0.0
    %497 = vmatprep.subr.mxu0 0.0
    %498 = vmatpush1.xpose.msra.mxu0 0.0
    %499 = vmatprep.subr.mxu0 0.0
    %500 = vmatpush1.xpose.msra.mxu0 0.0
    %501 = vmatprep.subr.mxu0 0.0
    %502 = vmatpush1.xpose.msra.mxu0 0.0
    %503 = vmatprep.subr.mxu0 0.0
    %504 = vmatpush1.xpose.msra.mxu0 0.0
    %505 = vmatprep.subr.mxu0 0.0
    %506 = vmatpush1.xpose.msra.mxu0 0.0
    %507 = vmatprep.subr.mxu0 0.0
    %508 = vmatpush1.xpose.msra.mxu0 0.0
    %509 = vmatprep.subr.mxu0 0.0
    %510 = vmatpush1.xpose.msra.mxu0 0.0
    %511 = vmatprep.subr.mxu0 0.0
    %512 = vmatpush1.xpose.msra.mxu0 0.0
    %513 = vmatprep.subr.mxu0 0.0
    %514 = vmatpush1.xpose.msra.mxu0 0.0
    %515 = vmatprep.subr.mxu0 0.0
    %516 = vmatpush1.xpose.msra.mxu0 0.0
    %517 = vmatprep.subr.mxu0 0.0
    %518 = vmatpush1.xpose.msra.mxu0 0.0
    %519 = vmatprep.subr.mxu0 0.0
    %520 = vmatpush1.xpose.msra.mxu0 0.0
    %521 = vmatprep.mubr.f32.mxu0 0.0
    %522 = vmatmul.mubr.f32.gmra.mrb[0].mxu0 %v451
    %v523 = vpop.f32.mrb[0].mxu0
    %v524 = vadd.f32 0.0, %v523
    %v525 = vpop.f32.mrb[0].mxu0
    %526 = vmatprep.mubr.f32.mxu0 0.0
    %527 = vmatmul.mubr.f32.gmra.mrb[0].mxu0 %v453
    %v528 = vpop.f32.mrb[0].mxu0
    %v529 = vadd.f32 0.0, %v528
    %v530 = vpop.f32.mrb[0].mxu0
    %531 = vdwg.mxu0
    %v532 = vmax.f32 %v524, -50000.0
    %v533 = vmax.f32 %v529, -50000.0
    %v534 = vmin.f32 %v532, 50000.0
    %v535 = vmin.f32 %v533, 50000.0
    %v536 = vadd.f32 %v534, %v90
    %v537 = vadd.f32 %v535, %v90
    %v538 = vsel %vm92, %v536, -inf
    %539 = vmax.xlane.f32.xlu0 %v538
    %v540 = vpop.xlane.xlu0 %539
    %v541 = vsel %vm92, %v537, -inf
    %542 = vmax.xlane.f32.xlu0 %v541
    %v543 = vpop.xlane.xlu0 %542
    %v544 = vsub.f32 %v536, %v540
    %v545 = vsub.f32 %v537, %v543
    %v546 = vmul.f32 %v544, 1.442695
    %v547 = vpow.pop %v546
    %v548 = vmul.f32 %v545, 1.442695
    %v549 = vpow.pop %v548
    %v550 = vsel %vm92, %v547, 0.0
    %551 = vadd.xlane.f32.xlu0 %v550
    %v552 = vpop.xlane.xlu0 %551
    %v553 = vsel %vm92, %v549, 0.0
    %554 = vadd.xlane.f32.xlu0 %v553
    %v555 = vpop.xlane.xlu0 %554
    %v556 = vrcp.pop %v552
    %v557 = vrcp.pop %v555
    %v558 = vmul.f32 %v547, %v556
    %v559 = vmul.f32 %v549, %v557
    %561 = vrot.lane.b32.xlu0 %v84, 120
    %v562 = vpop.permute.xlu0 %561
    %v565 = vsel %vm92, %v558, 0
    %v568 = vsel %vm92, %v559, 0
    %570 = vmatprep.subr.mxu0 0.0
    %571 = vmatpush1.msra.mxu0 %v562
    %572 = vmatprep.subr.mxu0 0.0
    %573 = vmatpush1.msra.mxu0 0.0
    %574 = vmatprep.subr.mxu0 0.0
    %575 = vmatpush1.msra.mxu0 0.0
    %576 = vmatprep.subr.mxu0 0.0
    %577 = vmatpush1.msra.mxu0 0.0
    %578 = vmatprep.subr.mxu0 0.0
    %579 = vmatpush1.msra.mxu0 0.0
    %580 = vmatprep.subr.mxu0 0.0
    %581 = vmatpush1.msra.mxu0 0.0
    %582 = vmatprep.subr.mxu0 0.0
    %583 = vmatpush1.msra.mxu0 0.0
    %584 = vmatprep.subr.mxu0 0.0
    %585 = vmatpush1.msra.mxu0 0.0
    %586 = vmatprep.subr.mxu0 0.0
    %587 = vmatpush1.msra.mxu0 0.0
    %588 = vmatprep.subr.mxu0 0.0
    %589 = vmatpush1.msra.mxu0 0.0
    %590 = vmatprep.subr.mxu0 0.0
    %591 = vmatpush1.msra.mxu0 0.0
    %592 = vmatprep.subr.mxu0 0.0
    %593 = vmatpush1.msra.mxu0 0.0
    %594 = vmatprep.subr.mxu0 0.0
    %595 = vmatpush1.msra.mxu0 0.0
    %596 = vmatprep.subr.mxu0 0.0
    %597 = vmatpush1.msra.mxu0 0.0
    %598 = vmatprep.subr.mxu0 0.0
    %599 = vmatpush1.msra.mxu0 0.0
    %600 = vmatprep.subr.mxu0 0.0
    %601 = vmatpush1.msra.mxu0 0.0
    %602 = vmatprep.subr.mxu0 0.0
    %603 = vmatpush1.msra.mxu0 0.0
    %604 = vmatprep.subr.mxu0 0.0
    %605 = vmatpush1.msra.mxu0 0.0
    %606 = vmatprep.subr.mxu0 0.0
    %607 = vmatpush1.msra.mxu0 0.0
    %608 = vmatprep.subr.mxu0 0.0
    %609 = vmatpush1.msra.mxu0 0.0
    %610 = vmatprep.subr.mxu0 0.0
    %611 = vmatpush1.msra.mxu0 0.0
    %612 = vmatprep.subr.mxu0 0.0
    %613 = vmatpush1.msra.mxu0 0.0
    %614 = vmatprep.subr.mxu0 0.0
    %615 = vmatpush1.msra.mxu0 0.0
    %616 = vmatprep.subr.mxu0 0.0
    %617 = vmatpush1.msra.mxu0 0.0
    %618 = vmatprep.subr.mxu0 0.0
    %619 = vmatpush1.msra.mxu0 0.0
    %620 = vmatprep.subr.mxu0 0.0
    %621 = vmatpush1.msra.mxu0 0.0
    %622 = vmatprep.subr.mxu0 0.0
    %623 = vmatpush1.msra.mxu0 0.0
    %624 = vmatprep.subr.mxu0 0.0
    %625 = vmatpush1.msra.mxu0 0.0
    %626 = vmatprep.subr.mxu0 0.0
    %627 = vmatpush1.msra.mxu0 0.0
    %628 = vmatprep.subr.mxu0 0.0
    %629 = vmatpush1.msra.mxu0 0.0
    %630 = vmatprep.subr.mxu0 0.0
    %631 = vmatpush1.msra.mxu0 0.0
    %632 = vmatprep.subr.mxu0 0.0
    %633 = vmatpush1.msra.mxu0 0.0
    %634 = vmatprep.mubr.f32.mxu0 0.0
    %635 = vmatmul.mubr.f32.gmra.mrb[0].mxu0 %v565
    %v636 = vpop.f32.mrb[0].mxu0
    %v637 = vadd.f32 0.0, %v636
    %v638 = vpop.f32.mrb[0].mxu0
    %639 = vmatprep.mubr.f32.mxu0 0.0
    %640 = vmatmul.mubr.f32.gmra.mrb[0].mxu0 %v568
    %v641 = vpop.f32.mrb[0].mxu0
    %v642 = vadd.f32 0.0, %v641
    %v643 = vpop.f32.mrb[0].mxu0
    %644 = vdwg.mxu0
    %645 = vmatprep.subr.mxu0 0.0
    %646 = vmatpush1.xpose.msra.mxu0 %v451
    %647 = vmatprep.subr.mxu0 0.0
    %648 = vmatpush1.xpose.msra.mxu0 %v453
    %649 = vmatprep.subr.mxu0 0.0
    %650 = vmatpush1.xpose.msra.mxu0 0.0
    %651 = vmatprep.subr.mxu0 0.0
    %652 = vmatpush1.xpose.msra.mxu0 0.0
    %653 = vmatprep.subr.mxu0 0.0
    %654 = vmatpush1.xpose.msra.mxu0 0.0
    %655 = vmatprep.subr.mxu0 0.0
    %656 = vmatpush1.xpose.msra.mxu0 0.0
    %657 = vmatprep.subr.mxu0 0.0
    %658 = vmatpush1.xpose.msra.mxu0 0.0
    %659 = vmatprep.subr.mxu0 0.0
    %660 = vmatpush1.xpose.msra.mxu0 0.0
    %661 = vmatprep.subr.mxu0 0.0
    %662 = vmatpush1.xpose.msra.mxu0 0.0
    %663 = vmatprep.subr.mxu0 0.0
    %664 = vmatpush1.xpose.msra.mxu0 0.0
    %665 = vmatprep.subr.mxu0 0.0
    %666 = vmatpush1.xpose.msra.mxu0 0.0
    %667 = vmatprep.subr.mxu0 0.0
    %668 = vmatpush1.xpose.msra.mxu0 0.0
    %669 = vmatprep.subr.mxu0 0.0
    %670 = vmatpush1.xpose.msra.mxu0 0.0
    %671 = vmatprep.subr.mxu0 0.0
    %672 = vmatpush1.xpose.msra.mxu0 0.0
    %673 = vmatprep.subr.mxu0 0.0
    %674 = vmatpush1.xpose.msra.mxu0 0.0
    %675 = vmatprep.subr.mxu0 0.0
    %676 = vmatpush1.xpose.msra.mxu0 0.0
    %677 = vmatprep.subr.mxu0 0.0
    %678 = vmatpush1.xpose.msra.mxu0 0.0
    %679 = vmatprep.subr.mxu0 0.0
    %680 = vmatpush1.xpose.msra.mxu0 0.0
    %681 = vmatprep.subr.mxu0 0.0
    %682 = vmatpush1.xpose.msra.mxu0 0.0
    %683 = vmatprep.subr.mxu0 0.0
    %684 = vmatpush1.xpose.msra.mxu0 0.0
    %685 = vmatprep.subr.mxu0 0.0
    %686 = vmatpush1.xpose.msra.mxu0 0.0
    %687 = vmatprep.subr.mxu0 0.0
    %688 = vmatpush1.xpose.msra.mxu0 0.0
    %689 = vmatprep.subr.mxu0 0.0
    %690 = vmatpush1.xpose.msra.mxu0 0.0
    %691 = vmatprep.subr.mxu0 0.0
    %692 = vmatpush1.xpose.msra.mxu0 0.0
    %693 = vmatprep.subr.mxu0 0.0
    %694 = vmatpush1.xpose.msra.mxu0 0.0
    %695 = vmatprep.subr.mxu0 0.0
    %696 = vmatpush1.xpose.msra.mxu0 0.0
    %697 = vmatprep.subr.mxu0 0.0
    %698 = vmatpush1.xpose.msra.mxu0 0.0
    %699 = vmatprep.subr.mxu0 0.0
    %700 = vmatpush1.xpose.msra.mxu0 0.0
    %701 = vmatprep.subr.mxu0 0.0
    %702 = vmatpush1.xpose.msra.mxu0 0.0
    %703 = vmatprep.subr.mxu0 0.0
    %704 = vmatpush1.xpose.msra.mxu0 0.0
    %705 = vmatprep.subr.mxu0 0.0
    %706 = vmatpush1.xpose.msra.mxu0 0.0
    %707 = vmatprep.subr.mxu0 0.0
    %708 = vmatpush1.xpose.msra.mxu0 0.0
    %709 = vmatprep.mubr.f32.mxu0 0.0
    %710 = vmatmul.mubr.f32.gmra.mrb[0].mxu0 %v455
    %v711 = vpop.f32.mrb[0].mxu0
    %v712 = vadd.f32 0.0, %v711
    %v713 = vpop.f32.mrb[0].mxu0
    %714 = vdwg.mxu0
    %v715 = vmax.f32 %v712, -50000.0
    %v716 = vmin.f32 %v715, 50000.0
    %v717 = vsel %vm358, %v716, -inf
    %718 = vmax.xlane.f32.xlu0 %v717
    %v719 = vpop.xlane.xlu0 %718
    %v720 = vsub.f32 %v716, %v719
    %v721 = vmax.f32 %v720, -50000.0
    %v722 = vmin.f32 %v721, 50000.0
    %v723 = vmul.f32 %v722, 1.442695
    %v724 = vpow.pop %v723
    %v725 = vsel %vm358, %v724, 0.0
    %726 = vadd.xlane.f32.xlu0 %v725
    %v727 = vpop.xlane.xlu0 %726
    %v728 = vrcp.pop %v727
    %v729 = vmul.f32 %v724, %v728
    %732 = vrot.lane.b32.xlu0 %v82, 120
    %v733 = vpop.permute.xlu0 %732
    %734 = vrot.lane.b32.xlu0 %v83, 120
    %v735 = vpop.permute.xlu0 %734
    %v739 = vsel %vm358, %v729, 0
    %741 = vmatprep.subr.mxu0 0.0
    %742 = vmatpush1.msra.mxu0 %v733
    %743 = vmatprep.subr.mxu0 0.0
    %744 = vmatpush1.msra.mxu0 %v735
    %745 = vmatprep.subr.mxu0 0.0
    %746 = vmatpush1.msra.mxu0 0.0
    %747 = vmatprep.subr.mxu0 0.0
    %748 = vmatpush1.msra.mxu0 0.0
    %749 = vmatprep.subr.mxu0 0.0
    %750 = vmatpush1.msra.mxu0 0.0
    %751 = vmatprep.subr.mxu0 0.0
    %752 = vmatpush1.msra.mxu0 0.0
    %753 = vmatprep.subr.mxu0 0.0
    %754 = vmatpush1.msra.mxu0 0.0
    %755 = vmatprep.subr.mxu0 0.0
    %756 = vmatpush1.msra.mxu0 0.0
    %757 = vmatprep.subr.mxu0 0.0
    %758 = vmatpush1.msra.mxu0 0.0
    %759 = vmatprep.subr.mxu0 0.0
    %760 = vmatpush1.msra.mxu0 0.0
    %761 = vmatprep.subr.mxu0 0.0
    %762 = vmatpush1.msra.mxu0 0.0
    %763 = vmatprep.subr.mxu0 0.0
    %764 = vmatpush1.msra.mxu0 0.0
    %765 = vmatprep.subr.mxu0 0.0
    %766 = vmatpush1.msra.mxu0 0.0
    %767 = vmatprep.subr.mxu0 0.0
    %768 = vmatpush1.msra.mxu0 0.0
    %769 = vmatprep.subr.mxu0 0.0
    %770 = vmatpush1.msra.mxu0 0.0
    %771 = vmatprep.subr.mxu0 0.0
    %772 = vmatpush1.msra.mxu0 0.0
    %773 = vmatprep.subr.mxu0 0.0
    %774 = vmatpush1.msra.mxu0 0.0
    %775 = vmatprep.subr.mxu0 0.0
    %776 = vmatpush1.msra.mxu0 0.0
    %777 = vmatprep.subr.mxu0 0.0
    %778 = vmatpush1.msra.mxu0 0.0
    %779 = vmatprep.subr.mxu0 0.0
    %780 = vmatpush1.msra.mxu0 0.0
    %781 = vmatprep.subr.mxu0 0.0
    %782 = vmatpush1.msra.mxu0 0.0
    %783 = vmatprep.subr.mxu0 0.0
    %784 = vmatpush1.msra.mxu0 0.0
    %785 = vmatprep.subr.mxu0 0.0
    %786 = vmatpush1.msra.mxu0 0.0
    %787 = vmatprep.subr.mxu0 0.0
    %788 = vmatpush1.msra.mxu0 0.0
    %789 = vmatprep.subr.mxu0 0.0
    %790 = vmatpush1.msra.mxu0 0.0
    %791 = vmatprep.subr.mxu0 0.0
    %792 = vmatpush1.msra.mxu0 0.0
    %793 = vmatprep.subr.mxu0 0.0
    %794 = vmatpush1.msra.mxu0 0.0
    %795 = vmatprep.subr.mxu0 0.0
    %796 = vmatpush1.msra.mxu0 0.0
    %797 = vmatprep.subr.mxu0 0.0
    %798 = vmatpush1.msra.mxu0 0.0
    %799 = vmatprep.subr.mxu0 0.0
    %800 = vmatpush1.msra.mxu0 0.0
    %801 = vmatprep.subr.mxu0 0.0
    %802 = vmatpush1.msra.mxu0 0.0
    %803 = vmatprep.subr.mxu0 0.0
    %804 = vmatpush1.msra.mxu0 0.0
    %805 = vmatprep.mubr.f32.mxu0 0.0
    %806 = vmatmul.mubr.f32.gmra.mrb[0].mxu0 %v739
    %v807 = vpop.f32.mrb[0].mxu0
    %v808 = vadd.f32 0.0, %v807
    %v809 = vpop.f32.mrb[0].mxu0
    %810 = vdwg.mxu0
    %811 = vrot.lane.b32.xlu0 %v79, 112
    %v812 = vpop.permute.xlu0 %811
    %813 = vrot.lane.b32.xlu0 %v80, 112
    %v814 = vpop.permute.xlu0 %813
    %815 = vrot.lane.b32.xlu0 %v81, 112
    %v816 = vpop.permute.xlu0 %815
    %v817 = vsel %vm92, %v812, 0
    %v819 = vsel %vm92, %v814, 0
    %v821 = vsel %vm92, %v816, 0
    %823 = vmatprep.subr.mxu0 0.0
    %824 = vmatpush1.xpose.msra.mxu0 %v821
    %825 = vmatprep.subr.mxu0 0.0
    %826 = vmatpush1.xpose.msra.mxu0 0.0
    %827 = vmatprep.subr.mxu0 0.0
    %828 = vmatpush1.xpose.msra.mxu0 0.0
    %829 = vmatprep.subr.mxu0 0.0
    %830 = vmatpush1.xpose.msra.mxu0 0.0
    %831 = vmatprep.subr.mxu0 0.0
    %832 = vmatpush1.xpose.msra.mxu0 0.0
    %833 = vmatprep.subr.mxu0 0.0
    %834 = vmatpush1.xpose.msra.mxu0 0.0
    %835 = vmatprep.subr.mxu0 0.0
    %836 = vmatpush1.xpose.msra.mxu0 0.0
    %837 = vmatprep.subr.mxu0 0.0
    %838 = vmatpush1.xpose.msra.mxu0 0.0
    %839 = vmatprep.subr.mxu0 0.0
    %840 = vmatpush1.xpose.msra.mxu0 0.0
    %841 = vmatprep.subr.mxu0 0.0
    %842 = vmatpush1.xpose.msra.mxu0 0.0
    %843 = vmatprep.subr.mxu0 0.0
    %844 = vmatpush1.xpose.msra.mxu0 0.0
    %845 = vmatprep.subr.mxu0 0.0
    %846 = vmatpush1.xpose.msra.mxu0 0.0
    %847 = vmatprep.subr.mxu0 0.0
    %848 = vmatpush1.xpose.msra.mxu0 0.0
    %849 = vmatprep.subr.mxu0 0.0
    %850 = vmatpush1.xpose.msra.mxu0 0.0
    %851 = vmatprep.subr.mxu0 0.0
    %852 = vmatpush1.xpose.msra.mxu0 0.0
    %853 = vmatprep.subr.mxu0 0.0
    %854 = vmatpush1.xpose.msra.mxu0 0.0
    %855 = vmatprep.subr.mxu0 0.0
    %856 = vmatpush1.xpose.msra.mxu0 0.0
    %857 = vmatprep.subr.mxu0 0.0
    %858 = vmatpush1.xpose.msra.mxu0 0.0
    %859 = vmatprep.subr.mxu0 0.0
    %860 = vmatpush1.xpose.msra.mxu0 0.0
    %861 = vmatprep.subr.mxu0 0.0
    %862 = vmatpush1.xpose.msra.mxu0 0.0
    %863 = vmatprep.subr.mxu0 0.0
    %864 = vmatpush1.xpose.msra.mxu0 0.0
    %865 = vmatprep.subr.mxu0 0.0
    %866 = vmatpush1.xpose.msra.mxu0 0.0
    %867 = vmatprep.subr.mxu0 0.0
    %868 = vmatpush1.xpose.msra.mxu0 0.0
    %869 = vmatprep.subr.mxu0 0.0
    %870 = vmatpush1.xpose.msra.mxu0 0.0
    %871 = vmatprep.subr.mxu0 0.0
    %872 = vmatpush1.xpose.msra.mxu0 0.0
    %873 = vmatprep.subr.mxu0 0.0
    %874 = vmatpush1.xpose.msra.mxu0 0.0
    %875 = vmatprep.subr.mxu0 0.0
    %876 = vmatpush1.xpose.msra.mxu0 0.0
    %877 = vmatprep.subr.mxu0 0.0
    %878 = vmatpush1.xpose.msra.mxu0 0.0
    %879 = vmatprep.subr.mxu0 0.0
    %880 = vmatpush1.xpose.msra.mxu0 0.0
    %881 = vmatprep.subr.mxu0 0.0
    %882 = vmatpush1.xpose.msra.mxu0 0.0
    %883 = vmatprep.subr.mxu0 0.0
    %884 = vmatpush1.xpose.msra.mxu0 0.0
    %885 = vmatprep.subr.mxu0 0.0
    %886 = vmatpush1.xpose.msra.mxu0 0.0
    %887 = vmatprep.mubr.f32.mxu0 0.0
    %888 = vmatmul.mubr.f32.gmra.mrb[0].mxu0 %v817
    %v889 = vpop.f32.mrb[0].mxu0
    %v890 = vadd.f32 0.0, %v889
    %v891 = vpop.f32.mrb[0].mxu0
    %892 = vmatprep.mubr.f32.mxu0 0.0
    %893 = vmatmul.mubr.f32.gmra.mrb[0].mxu0 %v819
    %v894 = vpop.f32.mrb[0].mxu0
    %v895 = vadd.f32 0.0, %v894
    %v896 = vpop.f32.mrb[0].mxu0
    %897 = vdwg.mxu0
    %v898 = vmax.f32 %v890, -50000.0
    %v899 = vmax.f32 %v895, -50000.0
    %v900 = vmin.f32 %v898, 50000.0
    %v901 = vmin.f32 %v899, 50000.0
    %v902 = vadd.f32 %v900, %v90
    %v903 = vadd.f32 %v901, %v90
    %v904 = vsel %vm92, %v902, -inf
    %905 = vmax.xlane.f32.xlu0 %v904
    %v906 = vpop.xlane.xlu0 %905
    %v907 = vsel %vm92, %v903, -inf
    %908 = vmax.xlane.f32.xlu0 %v907
    %v909 = vpop.xlane.xlu0 %908
    %v910 = vsub.f32 %v902, %v906
    %v911 = vsub.f32 %v903, %v909
    %v912 = vmul.f32 %v910, 1.442695
    %v913 = vpow.pop %v912
    %v914 = vmul.f32 %v911, 1.442695
    %v915 = vpow.pop %v914
    %v916 = vsel %vm92, %v913, 0.0
    %917 = vadd.xlane.f32.xlu0 %v916
    %v918 = vpop.xlane.xlu0 %917
    %v919 = vsel %vm92, %v915, 0.0
    %920 = vadd.xlane.f32.xlu0 %v919
    %v921 = vpop.xlane.xlu0 %920
    %v922 = vrcp.pop %v918
    %v923 = vrcp.pop %v921
    %v924 = vmul.f32 %v913, %v922
    %v925 = vmul.f32 %v915, %v923
    %926 = vrot.lane.b32.xlu0 %v84, 112
    %v927 = vpop.permute.xlu0 %926
    %v930 = vsel %vm92, %v924, 0
    %v933 = vsel %vm92, %v925, 0
    %935 = vmatprep.subr.mxu0 0.0
    %936 = vmatpush1.msra.mxu0 %v927
    %937 = vmatprep.subr.mxu0 0.0
    %938 = vmatpush1.msra.mxu0 0.0
    %939 = vmatprep.subr.mxu0 0.0
    %940 = vmatpush1.msra.mxu0 0.0
    %941 = vmatprep.subr.mxu0 0.0
    %942 = vmatpush1.msra.mxu0 0.0
    %943 = vmatprep.subr.mxu0 0.0
    %944 = vmatpush1.msra.mxu0 0.0
    %945 = vmatprep.subr.mxu0 0.0
    %946 = vmatpush1.msra.mxu0 0.0
    %947 = vmatprep.subr.mxu0 0.0
    %948 = vmatpush1.msra.mxu0 0.0
    %949 = vmatprep.subr.mxu0 0.0
    %950 = vmatpush1.msra.mxu0 0.0
    %951 = vmatprep.subr.mxu0 0.0
    %952 = vmatpush1.msra.mxu0 0.0
    %953 = vmatprep.subr.mxu0 0.0
    %954 = vmatpush1.msra.mxu0 0.0
    %955 = vmatprep.subr.mxu0 0.0
    %956 = vmatpush1.msra.mxu0 0.0
    %957 = vmatprep.subr.mxu0 0.0
    %958 = vmatpush1.msra.mxu0 0.0
    %959 = vmatprep.subr.mxu0 0.0
    %960 = vmatpush1.msra.mxu0 0.0
    %961 = vmatprep.subr.mxu0 0.0
    %962 = vmatpush1.msra.mxu0 0.0
    %963 = vmatprep.subr.mxu0 0.0
    %964 = vmatpush1.msra.mxu0 0.0
    %965 = vmatprep.subr.mxu0 0.0
    %966 = vmatpush1.msra.mxu0 0.0
    %967 = vmatprep.subr.mxu0 0.0
    %968 = vmatpush1.msra.mxu0 0.0
    %969 = vmatprep.subr.mxu0 0.0
    %970 = vmatpush1.msra.mxu0 0.0
    %971 = vmatprep.subr.mxu0 0.0
    %972 = vmatpush1.msra.mxu0 0.0
    %973 = vmatprep.subr.mxu0 0.0
    %974 = vmatpush1.msra.mxu0 0.0
    %975 = vmatprep.subr.mxu0 0.0
    %976 = vmatpush1.msra.mxu0 0.0
    %977 = vmatprep.subr.mxu0 0.0
    %978 = vmatpush1.msra.mxu0 0.0
    %979 = vmatprep.subr.mxu0 0.0
    %980 = vmatpush1.msra.mxu0 0.0
    %981 = vmatprep.subr.mxu0 0.0
    %982 = vmatpush1.msra.mxu0 0.0
    %983 = vmatprep.subr.mxu0 0.0
    %984 = vmatpush1.msra.mxu0 0.0
    %985 = vmatprep.subr.mxu0 0.0
    %986 = vmatpush1.msra.mxu0 0.0
    %987 = vmatprep.subr.mxu0 0.0
    %988 = vmatpush1.msra.mxu0 0.0
    %989 = vmatprep.subr.mxu0 0.0
    %990 = vmatpush1.msra.mxu0 0.0
    %991 = vmatprep.subr.mxu0 0.0
    %992 = vmatpush1.msra.mxu0 0.0
    %993 = vmatprep.subr.mxu0 0.0
    %994 = vmatpush1.msra.mxu0 0.0
    %995 = vmatprep.subr.mxu0 0.0
    %996 = vmatpush1.msra.mxu0 0.0
    %997 = vmatprep.subr.mxu0 0.0
    %998 = vmatpush1.msra.mxu0 0.0
    %999 = vmatprep.mubr.f32.mxu0 0.0
    %1000 = vmatmul.mubr.f32.gmra.mrb[0].mxu0 %v930
    %v1001 = vpop.f32.mrb[0].mxu0
    %v1002 = vadd.f32 0.0, %v1001
    %v1003 = vpop.f32.mrb[0].mxu0
    %1004 = vmatprep.mubr.f32.mxu0 0.0
    %1005 = vmatmul.mubr.f32.gmra.mrb[0].mxu0 %v933
    %v1006 = vpop.f32.mrb[0].mxu0
    %v1007 = vadd.f32 0.0, %v1006
    %v1008 = vpop.f32.mrb[0].mxu0
    %1009 = vdwg.mxu0
    %1010 = vmatprep.subr.mxu0 0.0
    %1011 = vmatpush1.xpose.msra.mxu0 %v817
    %1012 = vmatprep.subr.mxu0 0.0
    %1013 = vmatpush1.xpose.msra.mxu0 %v819
    %1014 = vmatprep.subr.mxu0 0.0
    %1015 = vmatpush1.xpose.msra.mxu0 0.0
    %1016 = vmatprep.subr.mxu0 0.0
    %1017 = vmatpush1.xpose.msra.mxu0 0.0
    %1018 = vmatprep.subr.mxu0 0.0
    %1019 = vmatpush1.xpose.msra.mxu0 0.0
    %1020 = vmatprep.subr.mxu0 0.0
    %1021 = vmatpush1.xpose.msra.mxu0 0.0
    %1022 = vmatprep.subr.mxu0 0.0
    %1023 = vmatpush1.xpose.msra.mxu0 0.0
    %1024 = vmatprep.subr.mxu0 0.0
    %1025 = vmatpush1.xpose.msra.mxu0 0.0
    %1026 = vmatprep.subr.mxu0 0.0
    %1027 = vmatpush1.xpose.msra.mxu0 0.0
    %1028 = vmatprep.subr.mxu0 0.0
    %1029 = vmatpush1.xpose.msra.mxu0 0.0
    %1030 = vmatprep.subr.mxu0 0.0
    %1031 = vmatpush1.xpose.msra.mxu0 0.0
    %1032 = vmatprep.subr.mxu0 0.0
    %1033 = vmatpush1.xpose.msra.mxu0 0.0
    %1034 = vmatprep.subr.mxu0 0.0
    %1035 = vmatpush1.xpose.msra.mxu0 0.0
    %1036 = vmatprep.subr.mxu0 0.0
    %1037 = vmatpush1.xpose.msra.mxu0 0.0
    %1038 = vmatprep.subr.mxu0 0.0
    %1039 = vmatpush1.xpose.msra.mxu0 0.0
    %1040 = vmatprep.subr.mxu0 0.0
    %1041 = vmatpush1.xpose.msra.mxu0 0.0
    %1042 = vmatprep.subr.mxu0 0.0
    %1043 = vmatpush1.xpose.msra.mxu0 0.0
    %1044 = vmatprep.subr.mxu0 0.0
    %1045 = vmatpush1.xpose.msra.mxu0 0.0
    %1046 = vmatprep.subr.mxu0 0.0
    %1047 = vmatpush1.xpose.msra.mxu0 0.0
    %1048 = vmatprep.subr.mxu0 0.0
    %1049 = vmatpush1.xpose.msra.mxu0 0.0
    %1050 = vmatprep.subr.mxu0 0.0
    %1051 = vmatpush1.xpose.msra.mxu0 0.0
    %1052 = vmatprep.subr.mxu0 0.0
    %1053 = vmatpush1.xpose.msra.mxu0 0.0
    %1054 = vmatprep.subr.mxu0 0.0
    %1055 = vmatpush1.xpose.msra.mxu0 0.0
    %1056 = vmatprep.subr.mxu0 0.0
    %1057 = vmatpush1.xpose.msra.mxu0 0.0
    %1058 = vmatprep.subr.mxu0 0.0
    %1059 = vmatpush1.xpose.msra.mxu0 0.0
    %1060 = vmatprep.subr.mxu0 0.0
    %1061 = vmatpush1.xpose.msra.mxu0 0.0
    %1062 = vmatprep.subr.mxu0 0.0
    %1063 = vmatpush1.xpose.msra.mxu0 0.0
    %1064 = vmatprep.subr.mxu0 0.0
    %1065 = vmatpush1.xpose.msra.mxu0 0.0
    %1066 = vmatprep.subr.mxu0 0.0
    %1067 = vmatpush1.xpose.msra.mxu0 0.0
    %1068 = vmatprep.subr.mxu0 0.0
    %1069 = vmatpush1.xpose.msra.mxu0 0.0
    %1070 = vmatprep.subr.mxu0 0.0
    %1071 = vmatpush1.xpose.msra.mxu0 0.0
    %1072 = vmatprep.subr.mxu0 0.0
    %1073 = vmatpush1.xpose.msra.mxu0 0.0
    %1074 = vmatprep.mubr.f32.mxu0 0.0
    %1075 = vmatmul.mubr.f32.gmra.mrb[0].mxu0 %v821
    %v1076 = vpop.f32.mrb[0].mxu0
    %v1077 = vadd.f32 0.0, %v1076
    %v1078 = vpop.f32.mrb[0].mxu0
    %1079 = vdwg.mxu0
    %v1080 = vmax.f32 %v1077, -50000.0
    %v1081 = vmin.f32 %v1080, 50000.0
    %v1082 = vsel %vm358, %v1081, -inf
    %1083 = vmax.xlane.f32.xlu0 %v1082
    %v1084 = vpop.xlane.xlu0 %1083
    %v1085 = vsub.f32 %v1081, %v1084
    %v1086 = vmax.f32 %v1085, -50000.0
    %v1087 = vmin.f32 %v1086, 50000.0
    %v1088 = vmul.f32 %v1087, 1.442695
    %v1089 = vpow.pop %v1088
    %v1090 = vsel %vm358, %v1089, 0.0
    %1091 = vadd.xlane.f32.xlu0 %v1090
    %v1092 = vpop.xlane.xlu0 %1091
    %v1093 = vrcp.pop %v1092
    %v1094 = vmul.f32 %v1089, %v1093
    %1095 = vrot.lane.b32.xlu0 %v82, 112
    %v1096 = vpop.permute.xlu0 %1095
    %1097 = vrot.lane.b32.xlu0 %v83, 112
    %v1098 = vpop.permute.xlu0 %1097
    %v1102 = vsel %vm358, %v1094, 0
    %1104 = vmatprep.subr.mxu0 0.0
    %1105 = vmatpush1.msra.mxu0 %v1096
    %1106 = vmatprep.subr.mxu0 0.0
    %1107 = vmatpush1.msra.mxu0 %v1098
    %1108 = vmatprep.subr.mxu0 0.0
    %1109 = vmatpush1.msra.mxu0 0.0
    %1110 = vmatprep.subr.mxu0 0.0
    %1111 = vmatpush1.msra.mxu0 0.0
    %1112 = vmatprep.subr.mxu0 0.0
    %1113 = vmatpush1.msra.mxu0 0.0
    %1114 = vmatprep.subr.mxu0 0.0
    %1115 = vmatpush1.msra.mxu0 0.0
    %1116 = vmatprep.subr.mxu0 0.0
    %1117 = vmatpush1.msra.mxu0 0.0
    %1118 = vmatprep.subr.mxu0 0.0
    %1119 = vmatpush1.msra.mxu0 0.0
    %1120 = vmatprep.subr.mxu0 0.0
    %1121 = vmatpush1.msra.mxu0 0.0
    %1122 = vmatprep.subr.mxu0 0.0
    %1123 = vmatpush1.msra.mxu0 0.0
    %1124 = vmatprep.subr.mxu0 0.0
    %1125 = vmatpush1.msra.mxu0 0.0
    %1126 = vmatprep.subr.mxu0 0.0
    %1127 = vmatpush1.msra.mxu0 0.0
    %1128 = vmatprep.subr.mxu0 0.0
    %1129 = vmatpush1.msra.mxu0 0.0
    %1130 = vmatprep.subr.mxu0 0.0
    %1131 = vmatpush1.msra.mxu0 0.0
    %1132 = vmatprep.subr.mxu0 0.0
    %1133 = vmatpush1.msra.mxu0 0.0
    %1134 = vmatprep.subr.mxu0 0.0
    %1135 = vmatpush1.msra.mxu0 0.0
    %1136 = vmatprep.subr.mxu0 0.0
    %1137 = vmatpush1.msra.mxu0 0.0
    %1138 = vmatprep.subr.mxu0 0.0
    %1139 = vmatpush1.msra.mxu0 0.0
    %1140 = vmatprep.subr.mxu0 0.0
    %1141 = vmatpush1.msra.mxu0 0.0
    %1142 = vmatprep.subr.mxu0 0.0
    %1143 = vmatpush1.msra.mxu0 0.0
    %1144 = vmatprep.subr.mxu0 0.0
    %1145 = vmatpush1.msra.mxu0 0.0
    %1146 = vmatprep.subr.mxu0 0.0
    %1147 = vmatpush1.msra.mxu0 0.0
    %1148 = vmatprep.subr.mxu0 0.0
    %1149 = vmatpush1.msra.mxu0 0.0
    %1150 = vmatprep.subr.mxu0 0.0
    %1151 = vmatpush1.msra.mxu0 0.0
    %1152 = vmatprep.subr.mxu0 0.0
    %1153 = vmatpush1.msra.mxu0 0.0
    %1154 = vmatprep.subr.mxu0 0.0
    %1155 = vmatpush1.msra.mxu0 0.0
    %1156 = vmatprep.subr.mxu0 0.0
    %1157 = vmatpush1.msra.mxu0 0.0
    %1158 = vmatprep.subr.mxu0 0.0
    %1159 = vmatpush1.msra.mxu0 0.0
    %1160 = vmatprep.subr.mxu0 0.0
    %1161 = vmatpush1.msra.mxu0 0.0
    %1162 = vmatprep.subr.mxu0 0.0
    %1163 = vmatpush1.msra.mxu0 0.0
    %1164 = vmatprep.subr.mxu0 0.0
    %1165 = vmatpush1.msra.mxu0 0.0
    %1166 = vmatprep.subr.mxu0 0.0
    %1167 = vmatpush1.msra.mxu0 0.0
    %1168 = vmatprep.mubr.f32.mxu0 0.0
    %1169 = vmatmul.mubr.f32.gmra.mrb[0].mxu0 %v1102
    %v1170 = vpop.f32.mrb[0].mxu0
    %v1171 = vadd.f32 0.0, %v1170
    %v1172 = vpop.f32.mrb[0].mxu0
    %1173 = vdwg.mxu0
    %1174 = vrot.lane.b32.xlu0 %v79, 104
    %v1175 = vpop.permute.xlu0 %1174
    %1176 = vrot.lane.b32.xlu0 %v80, 104
    %v1177 = vpop.permute.xlu0 %1176
    %1178 = vrot.lane.b32.xlu0 %v81, 104
    %v1179 = vpop.permute.xlu0 %1178
    %v1180 = vsel %vm92, %v1175, 0
    %v1182 = vsel %vm92, %v1177, 0
    %v1184 = vsel %vm92, %v1179, 0
    %1186 = vmatprep.subr.mxu0 0.0
    %1187 = vmatpush1.xpose.msra.mxu0 %v1184
    %1188 = vmatprep.subr.mxu0 0.0
    %1189 = vmatpush1.xpose.msra.mxu0 0.0
    %1190 = vmatprep.subr.mxu0 0.0
    %1191 = vmatpush1.xpose.msra.mxu0 0.0
    %1192 = vmatprep.subr.mxu0 0.0
    %1193 = vmatpush1.xpose.msra.mxu0 0.0
    %1194 = vmatprep.subr.mxu0 0.0
    %1195 = vmatpush1.xpose.msra.mxu0 0.0
    %1196 = vmatprep.subr.mxu0 0.0
    %1197 = vmatpush1.xpose.msra.mxu0 0.0
    %1198 = vmatprep.subr.mxu0 0.0
    %1199 = vmatpush1.xpose.msra.mxu0 0.0
    %1200 = vmatprep.subr.mxu0 0.0
    %1201 = vmatpush1.xpose.msra.mxu0 0.0
    %1202 = vmatprep.subr.mxu0 0.0
    %1203 = vmatpush1.xpose.msra.mxu0 0.0
    %1204 = vmatprep.subr.mxu0 0.0
    %1205 = vmatpush1.xpose.msra.mxu0 0.0
    %1206 = vmatprep.subr.mxu0 0.0
    %1207 = vmatpush1.xpose.msra.mxu0 0.0
    %1208 = vmatprep.subr.mxu0 0.0
    %1209 = vmatpush1.xpose.msra.mxu0 0.0
    %1210 = vmatprep.subr.mxu0 0.0
    %1211 = vmatpush1.xpose.msra.mxu0 0.0
    %1212 = vmatprep.subr.mxu0 0.0
    %1213 = vmatpush1.xpose.msra.mxu0 0.0
    %1214 = vmatprep.subr.mxu0 0.0
    %1215 = vmatpush1.xpose.msra.mxu0 0.0
    %1216 = vmatprep.subr.mxu0 0.0
    %1217 = vmatpush1.xpose.msra.mxu0 0.0
    %1218 = vmatprep.subr.mxu0 0.0
    %1219 = vmatpush1.xpose.msra.mxu0 0.0
    %1220 = vmatprep.subr.mxu0 0.0
    %1221 = vmatpush1.xpose.msra.mxu0 0.0
    %1222 = vmatprep.subr.mxu0 0.0
    %1223 = vmatpush1.xpose.msra.mxu0 0.0
    %1224 = vmatprep.subr.mxu0 0.0
    %1225 = vmatpush1.xpose.msra.mxu0 0.0
    %1226 = vmatprep.subr.mxu0 0.0
    %1227 = vmatpush1.xpose.msra.mxu0 0.0
    %1228 = vmatprep.subr.mxu0 0.0
    %1229 = vmatpush1.xpose.msra.mxu0 0.0
    %1230 = vmatprep.subr.mxu0 0.0
    %1231 = vmatpush1.xpose.msra.mxu0 0.0
    %1232 = vmatprep.subr.mxu0 0.0
    %1233 = vmatpush1.xpose.msra.mxu0 0.0
    %1234 = vmatprep.subr.mxu0 0.0
    %1235 = vmatpush1.xpose.msra.mxu0 0.0
    %1236 = vmatprep.subr.mxu0 0.0
    %1237 = vmatpush1.xpose.msra.mxu0 0.0
    %1238 = vmatprep.subr.mxu0 0.0
    %1239 = vmatpush1.xpose.msra.mxu0 0.0
    %1240 = vmatprep.subr.mxu0 0.0
    %1241 = vmatpush1.xpose.msra.mxu0 0.0
    %1242 = vmatprep.subr.mxu0 0.0
    %1243 = vmatpush1.xpose.msra.mxu0 0.0
    %1244 = vmatprep.subr.mxu0 0.0
    %1245 = vmatpush1.xpose.msra.mxu0 0.0
    %1246 = vmatprep.subr.mxu0 0.0
    %1247 = vmatpush1.xpose.msra.mxu0 0.0
    %1248 = vmatprep.subr.mxu0 0.0
    %1249 = vmatpush1.xpose.msra.mxu0 0.0
    %1250 = vmatprep.mubr.f32.mxu0 0.0
    %1251 = vmatmul.mubr.f32.gmra.mrb[0].mxu0 %v1180
    %v1252 = vpop.f32.mrb[0].mxu0
    %v1253 = vadd.f32 0.0, %v1252
    %v1254 = vpop.f32.mrb[0].mxu0
    %1255 = vmatprep.mubr.f32.mxu0 0.0
    %1256 = vmatmul.mubr.f32.gmra.mrb[0].mxu0 %v1182
    %v1257 = vpop.f32.mrb[0].mxu0
    %v1258 = vadd.f32 0.0, %v1257
    %v1259 = vpop.f32.mrb[0].mxu0
    %1260 = vdwg.mxu0
    %v1261 = vmax.f32 %v1253, -50000.0
    %v1262 = vmax.f32 %v1258, -50000.0
    %v1263 = vmin.f32 %v1261, 50000.0
    %v1264 = vmin.f32 %v1262, 50000.0
    %v1265 = vadd.f32 %v1263, %v90
    %v1266 = vadd.f32 %v1264, %v90
    %v1267 = vsel %vm92, %v1265, -inf
    %1268 = vmax.xlane.f32.xlu0 %v1267
    %v1269 = vpop.xlane.xlu0 %1268
    %v1270 = vsel %vm92, %v1266, -inf
    %1271 = vmax.xlane.f32.xlu0 %v1270
    %v1272 = vpop.xlane.xlu0 %1271
    %v1273 = vsub.f32 %v1265, %v1269
    %v1274 = vsub.f32 %v1266, %v1272
    %v1275 = vmul.f32 %v1273, 1.442695
    %v1276 = vpow.pop %v1275
    %v1277 = vmul.f32 %v1274, 1.442695
    %v1278 = vpow.pop %v1277
    %v1279 = vsel %vm92, %v1276, 0.0
    %1280 = vadd.xlane.f32.xlu0 %v1279
    %v1281 = vpop.xlane.xlu0 %1280
    %v1282 = vsel %vm92, %v1278, 0.0
    %1283 = vadd.xlane.f32.xlu0 %v1282
    %v1284 = vpop.xlane.xlu0 %1283
    %v1285 = vrcp.pop %v1281
    %v1286 = vrcp.pop %v1284
    %v1287 = vmul.f32 %v1276, %v1285
    %v1288 = vmul.f32 %v1278, %v1286
    %1289 = vrot.lane.b32.xlu0 %v84, 104
    %v1290 = vpop.permute.xlu0 %1289
    %v1293 = vsel %vm92, %v1287, 0
    %v1296 = vsel %vm92, %v1288, 0
    %1298 = vmatprep.subr.mxu0 0.0
    %1299 = vmatpush1.msra.mxu0 %v1290
    %1300 = vmatprep.subr.mxu0 0.0
    %1301 = vmatpush1.msra.mxu0 0.0
    %1302 = vmatprep.subr.mxu0 0.0
    %1303 = vmatpush1.msra.mxu0 0.0
    %1304 = vmatprep.subr.mxu0 0.0
    %1305 = vmatpush1.msra.mxu0 0.0
    %1306 = vmatprep.subr.mxu0 0.0
    %1307 = vmatpush1.msra.mxu0 0.0
    %1308 = vmatprep.subr.mxu0 0.0
    %1309 = vmatpush1.msra.mxu0 0.0
    %1310 = vmatprep.subr.mxu0 0.0
    %1311 = vmatpush1.msra.mxu0 0.0
    %1312 = vmatprep.subr.mxu0 0.0
    %1313 = vmatpush1.msra.mxu0 0.0
    %1314 = vmatprep.subr.mxu0 0.0
    %1315 = vmatpush1.msra.mxu0 0.0
    %1316 = vmatprep.subr.mxu0 0.0
    %1317 = vmatpush1.msra.mxu0 0.0
    %1318 = vmatprep.subr.mxu0 0.0
    %1319 = vmatpush1.msra.mxu0 0.0
    %1320 = vmatprep.subr.mxu0 0.0
    %1321 = vmatpush1.msra.mxu0 0.0
    %1322 = vmatprep.subr.mxu0 0.0
    %1323 = vmatpush1.msra.mxu0 0.0
    %1324 = vmatprep.subr.mxu0 0.0
    %1325 = vmatpush1.msra.mxu0 0.0
    %1326 = vmatprep.subr.mxu0 0.0
    %1327 = vmatpush1.msra.mxu0 0.0
    %1328 = vmatprep.subr.mxu0 0.0
    %1329 = vmatpush1.msra.mxu0 0.0
    %1330 = vmatprep.subr.mxu0 0.0
    %1331 = vmatpush1.msra.mxu0 0.0
    %1332 = vmatprep.subr.mxu0 0.0
    %1333 = vmatpush1.msra.mxu0 0.0
    %1334 = vmatprep.subr.mxu0 0.0
    %1335 = vmatpush1.msra.mxu0 0.0
    %1336 = vmatprep.subr.mxu0 0.0
    %1337 = vmatpush1.msra.mxu0 0.0
    %1338 = vmatprep.subr.mxu0 0.0
    %1339 = vmatpush1.msra.mxu0 0.0
    %1340 = vmatprep.subr.mxu0 0.0
    %1341 = vmatpush1.msra.mxu0 0.0
    %1342 = vmatprep.subr.mxu0 0.0
    %1343 = vmatpush1.msra.mxu0 0.0
    %1344 = vmatprep.subr.mxu0 0.0
    %1345 = vmatpush1.msra.mxu0 0.0
    %1346 = vmatprep.subr.mxu0 0.0
    %1347 = vmatpush1.msra.mxu0 0.0
    %1348 = vmatprep.subr.mxu0 0.0
    %1349 = vmatpush1.msra.mxu0 0.0
    %1350 = vmatprep.subr.mxu0 0.0
    %1351 = vmatpush1.msra.mxu0 0.0
    %1352 = vmatprep.subr.mxu0 0.0
    %1353 = vmatpush1.msra.mxu0 0.0
    %1354 = vmatprep.subr.mxu0 0.0
    %1355 = vmatpush1.msra.mxu0 0.0
    %1356 = vmatprep.subr.mxu0 0.0
    %1357 = vmatpush1.msra.mxu0 0.0
    %1358 = vmatprep.subr.mxu0 0.0
    %1359 = vmatpush1.msra.mxu0 0.0
    %1360 = vmatprep.subr.mxu0 0.0
    %1361 = vmatpush1.msra.mxu0 0.0
    %1362 = vmatprep.mubr.f32.mxu0 0.0
    %1363 = vmatmul.mubr.f32.gmra.mrb[0].mxu0 %v1293
    %v1364 = vpop.f32.mrb[0].mxu0
    %v1365 = vadd.f32 0.0, %v1364
    %v1366 = vpop.f32.mrb[0].mxu0
    %1367 = vmatprep.mubr.f32.mxu0 0.0
    %1368 = vmatmul.mubr.f32.gmra.mrb[0].mxu0 %v1296
    %v1369 = vpop.f32.mrb[0].mxu0
    %v1370 = vadd.f32 0.0, %v1369
    %v1371 = vpop.f32.mrb[0].mxu0
    %1372 = vdwg.mxu0
    %1373 = vmatprep.subr.mxu0 0.0
    %1374 = vmatpush1.xpose.msra.mxu0 %v1180
    %1375 = vmatprep.subr.mxu0 0.0
    %1376 = vmatpush1.xpose.msra.mxu0 %v1182
    %1377 = vmatprep.subr.mxu0 0.0
    %1378 = vmatpush1.xpose.msra.mxu0 0.0
    %1379 = vmatprep.subr.mxu0 0.0
    %1380 = vmatpush1.xpose.msra.mxu0 0.0
    %1381 = vmatprep.subr.mxu0 0.0
    %1382 = vmatpush1.xpose.msra.mxu0 0.0
    %1383 = vmatprep.subr.mxu0 0.0
    %1384 = vmatpush1.xpose.msra.mxu0 0.0
    %1385 = vmatprep.subr.mxu0 0.0
    %1386 = vmatpush1.xpose.msra.mxu0 0.0
    %1387 = vmatprep.subr.mxu0 0.0
    %1388 = vmatpush1.xpose.msra.mxu0 0.0
    %1389 = vmatprep.subr.mxu0 0.0
    %1390 = vmatpush1.xpose.msra.mxu0 0.0
    %1391 = vmatprep.subr.mxu0 0.0
    %1392 = vmatpush1.xpose.msra.mxu0 0.0
    %1393 = vmatprep.subr.mxu0 0.0
    %1394 = vmatpush1.xpose.msra.mxu0 0.0
    %1395 = vmatprep.subr.mxu0 0.0
    %1396 = vmatpush1.xpose.msra.mxu0 0.0
    %1397 = vmatprep.subr.mxu0 0.0
    %1398 = vmatpush1.xpose.msra.mxu0 0.0
    %1399 = vmatprep.subr.mxu0 0.0
    %1400 = vmatpush1.xpose.msra.mxu0 0.0
    %1401 = vmatprep.subr.mxu0 0.0
    %1402 = vmatpush1.xpose.msra.mxu0 0.0
    %1403 = vmatprep.subr.mxu0 0.0
    %1404 = vmatpush1.xpose.msra.mxu0 0.0
    %1405 = vmatprep.subr.mxu0 0.0
    %1406 = vmatpush1.xpose.msra.mxu0 0.0
    %1407 = vmatprep.subr.mxu0 0.0
    %1408 = vmatpush1.xpose.msra.mxu0 0.0
    %1409 = vmatprep.subr.mxu0 0.0
    %1410 = vmatpush1.xpose.msra.mxu0 0.0
    %1411 = vmatprep.subr.mxu0 0.0
    %1412 = vmatpush1.xpose.msra.mxu0 0.0
    %1413 = vmatprep.subr.mxu0 0.0
    %1414 = vmatpush1.xpose.msra.mxu0 0.0
    %1415 = vmatprep.subr.mxu0 0.0
    %1416 = vmatpush1.xpose.msra.mxu0 0.0
    %1417 = vmatprep.subr.mxu0 0.0
    %1418 = vmatpush1.xpose.msra.mxu0 0.0
    %1419 = vmatprep.subr.mxu0 0.0
    %1420 = vmatpush1.xpose.msra.mxu0 0.0
    %1421 = vmatprep.subr.mxu0 0.0
    %1422 = vmatpush1.xpose.msra.mxu0 0.0
    %1423 = vmatprep.subr.mxu0 0.0
    %1424 = vmatpush1.xpose.msra.mxu0 0.0
    %1425 = vmatprep.subr.mxu0 0.0
    %1426 = vmatpush1.xpose.msra.mxu0 0.0
    %1427 = vmatprep.subr.mxu0 0.0
    %1428 = vmatpush1.xpose.msra.mxu0 0.0
    %1429 = vmatprep.subr.mxu0 0.0
    %1430 = vmatpush1.xpose.msra.mxu0 0.0
    %1431 = vmatprep.subr.mxu0 0.0
    %1432 = vmatpush1.xpose.msra.mxu0 0.0
    %1433 = vmatprep.subr.mxu0 0.0
    %1434 = vmatpush1.xpose.msra.mxu0 0.0
    %1435 = vmatprep.subr.mxu0 0.0
    %1436 = vmatpush1.xpose.msra.mxu0 0.0
    %1437 = vmatprep.mubr.f32.mxu0 0.0
    %1438 = vmatmul.mubr.f32.gmra.mrb[0].mxu0 %v1184
    %v1439 = vpop.f32.mrb[0].mxu0
    %v1440 = vadd.f32 0.0, %v1439
    %v1441 = vpop.f32.mrb[0].mxu0
    %1442 = vdwg.mxu0
    %v1443 = vmax.f32 %v1440, -50000.0
    %v1444 = vmin.f32 %v1443, 50000.0
    %v1445 = vsel %vm358, %v1444, -inf
    %1446 = vmax.xlane.f32.xlu0 %v1445
    %v1447 = vpop.xlane.xlu0 %1446
    %v1448 = vsub.f32 %v1444, %v1447
    %v1449 = vmax.f32 %v1448, -50000.0
    %v1450 = vmin.f32 %v1449, 50000.0
    %v1451 = vmul.f32 %v1450, 1.442695
    %v1452 = vpow.pop %v1451
    %v1453 = vsel %vm358, %v1452, 0.0
    %1454 = vadd.xlane.f32.xlu0 %v1453
    %v1455 = vpop.xlane.xlu0 %1454
    %v1456 = vrcp.pop %v1455
    %v1457 = vmul.f32 %v1452, %v1456
    %1458 = vrot.lane.b32.xlu0 %v82, 104
    %v1459 = vpop.permute.xlu0 %1458
    %1460 = vrot.lane.b32.xlu0 %v83, 104
    %v1461 = vpop.permute.xlu0 %1460
    %v1465 = vsel %vm358, %v1457, 0
    %1467 = vmatprep.subr.mxu0 0.0
    %1468 = vmatpush1.msra.mxu0 %v1459
    %1469 = vmatprep.subr.mxu0 0.0
    %1470 = vmatpush1.msra.mxu0 %v1461
    %1471 = vmatprep.subr.mxu0 0.0
    %1472 = vmatpush1.msra.mxu0 0.0
    %1473 = vmatprep.subr.mxu0 0.0
    %1474 = vmatpush1.msra.mxu0 0.0
    %1475 = vmatprep.subr.mxu0 0.0
    %1476 = vmatpush1.msra.mxu0 0.0
    %1477 = vmatprep.subr.mxu0 0.0
    %1478 = vmatpush1.msra.mxu0 0.0
    %1479 = vmatprep.subr.mxu0 0.0
    %1480 = vmatpush1.msra.mxu0 0.0
    %1481 = vmatprep.subr.mxu0 0.0
    %1482 = vmatpush1.msra.mxu0 0.0
    %1483 = vmatprep.subr.mxu0 0.0
    %1484 = vmatpush1.msra.mxu0 0.0
    %1485 = vmatprep.subr.mxu0 0.0
    %1486 = vmatpush1.msra.mxu0 0.0
    %1487 = vmatprep.subr.mxu0 0.0
    %1488 = vmatpush1.msra.mxu0 0.0
    %1489 = vmatprep.subr.mxu0 0.0
    %1490 = vmatpush1.msra.mxu0 0.0
    %1491 = vmatprep.subr.mxu0 0.0
    %1492 = vmatpush1.msra.mxu0 0.0
    %1493 = vmatprep.subr.mxu0 0.0
    %1494 = vmatpush1.msra.mxu0 0.0
    %1495 = vmatprep.subr.mxu0 0.0
    %1496 = vmatpush1.msra.mxu0 0.0
    %1497 = vmatprep.subr.mxu0 0.0
    %1498 = vmatpush1.msra.mxu0 0.0
    %1499 = vmatprep.subr.mxu0 0.0
    %1500 = vmatpush1.msra.mxu0 0.0
    %1501 = vmatprep.subr.mxu0 0.0
    %1502 = vmatpush1.msra.mxu0 0.0
    %1503 = vmatprep.subr.mxu0 0.0
    %1504 = vmatpush1.msra.mxu0 0.0
    %1505 = vmatprep.subr.mxu0 0.0
    %1506 = vmatpush1.msra.mxu0 0.0
    %1507 = vmatprep.subr.mxu0 0.0
    %1508 = vmatpush1.msra.mxu0 0.0
    %1509 = vmatprep.subr.mxu0 0.0
    %1510 = vmatpush1.msra.mxu0 0.0
    %1511 = vmatprep.subr.mxu0 0.0
    %1512 = vmatpush1.msra.mxu0 0.0
    %1513 = vmatprep.subr.mxu0 0.0
    %1514 = vmatpush1.msra.mxu0 0.0
    %1515 = vmatprep.subr.mxu0 0.0
    %1516 = vmatpush1.msra.mxu0 0.0
    %1517 = vmatprep.subr.mxu0 0.0
    %1518 = vmatpush1.msra.mxu0 0.0
    %1519 = vmatprep.subr.mxu0 0.0
    %1520 = vmatpush1.msra.mxu0 0.0
    %1521 = vmatprep.subr.mxu0 0.0
    %1522 = vmatpush1.msra.mxu0 0.0
    %1523 = vmatprep.subr.mxu0 0.0
    %1524 = vmatpush1.msra.mxu0 0.0
    %1525 = vmatprep.subr.mxu0 0.0
    %1526 = vmatpush1.msra.mxu0 0.0
    %1527 = vmatprep.subr.mxu0 0.0
    %1528 = vmatpush1.msra.mxu0 0.0
    %1529 = vmatprep.subr.mxu0 0.0
    %1530 = vmatpush1.msra.mxu0 0.0
    %1531 = vmatprep.mubr.f32.mxu0 0.0
    %1532 = vmatmul.mubr.f32.gmra.mrb[0].mxu0 %v1465
    %v1533 = vpop.f32.mrb[0].mxu0
    %v1534 = vadd.f32 0.0, %v1533
    %v1535 = vpop.f32.mrb[0].mxu0
    %1536 = vdwg.mxu0
    %1539 = vrot.lane.b32.xlu0 %v637, 8
    %v1540 = vpop.permute.xlu0 %1539
    %1541 = vrot.lane.b32.xlu0 %v642, 8
    %v1542 = vpop.permute.xlu0 %1541
    %1547 = vrot.lane.b32.xlu0 %v1002, 16
    %v1548 = vpop.permute.xlu0 %1547
    %1549 = vrot.lane.b32.xlu0 %v1007, 16
    %v1550 = vpop.permute.xlu0 %1549
    %1555 = vrot.lane.b32.xlu0 %v1365, 24
    %v1556 = vpop.permute.xlu0 %1555
    %1557 = vrot.lane.b32.xlu0 %v1370, 24
    %v1558 = vpop.permute.xlu0 %1557
    %v1561 = vsel %vm92, %v278, %v1540
    %v1562 = vsel %vm92, %v283, %v1542
    %v1563 = vsel %vm358, %v1561, %v1548
    %v1564 = vsel %vm358, %v1562, %v1550
    %vm1565 = vcmask 195584
    %v1566 = vsel %vm1565, %v1563, %v1556
    %v1567 = vsel %vm1565, %v1564, %v1558
    %v1568 = vadd.f32 %v1566, 1.0
    %v1569 = vadd.f32 %v1567, 1.0
    %vm1570 = vcmask 261120
    %1571 = vst.msk [vmem:[#allocation10] sm:$0xff] %vm1570, %v1568
    %1572 = vst.msk [vmem:[#allocation10 + $0x8] sm:$0xff] %vm1570, %v1569
    %1574 = vrot.lane.b32.xlu0 %v808, 8
    %v1575 = vpop.permute.xlu0 %1574
    %1578 = vrot.lane.b32.xlu0 %v1171, 16
    %v1579 = vpop.permute.xlu0 %1578
    %1582 = vrot.lane.b32.xlu0 %v1534, 24
    %v1583 = vpop.permute.xlu0 %1582
    %v1585 = vsel %vm92, %v442, %v1575
    %v1586 = vsel %vm358, %v1585, %v1579
    %v1587 = vsel %vm1565, %v1586, %v1583
    %v1588 = vadd.f32 %v1587, 1.0
    %1589 = vst.msk [vmem:[#allocation11] sm:$0xff] %vm1570, %v1588
    %s1590 = scalar_lea.vmem [#allocation2], 16
    %v1591 = vld [vmem:[%s1590] sm:$0xff]
    %v1592 = vld [vmem:[%s1590 + $0x8] sm:$0xff]
    %s1593 = scalar_lea.vmem [#allocation5], 8
    %v1594 = vld [vmem:[%s1593] sm:$0xff]
    %s1595 = scalar_lea.vmem [#allocation7], 16
    %v1596 = vld [vmem:[%s1595] sm:$0xff]
    %v1597 = vld [vmem:[%s1595 + $0x8] sm:$0xff]
    %s1598 = scalar_lea.vmem [#allocation8], 8
    %v1599 = vld [vmem:[%s1598] sm:$0xff]
    %s1600 = scalar_lea.vmem %s4, 1
    %v1601 = vld [vmem:[%s1600] sm:$0x1]
    %v1603 = vlaneseq
    %v1604 = vshrl.u32 %v1603, 7
    %v1605 = vsub.s32 0, %v1604
    %v1606 = vrot.slane %v1601, %v1605
    %v1609 = vsel %vm92, %v1591, 0
    %v1612 = vsel %vm92, %v1592, 0
    %v1615 = vsel %vm92, %v1594, 0
    %1617 = vmatprep.subr.mxu0 0.0
    %1618 = vmatpush1.xpose.msra.mxu0 %v1615
    %1619 = vmatprep.subr.mxu0 0.0
    %1620 = vmatpush1.xpose.msra.mxu0 0.0
    %1621 = vmatprep.subr.mxu0 0.0
    %1622 = vmatpush1.xpose.msra.mxu0 0.0
    %1623 = vmatprep.subr.mxu0 0.0
    %1624 = vmatpush1.xpose.msra.mxu0 0.0
    %1625 = vmatprep.subr.mxu0 0.0
    %1626 = vmatpush1.xpose.msra.mxu0 0.0
    %1627 = vmatprep.subr.mxu0 0.0
    %1628 = vmatpush1.xpose.msra.mxu0 0.0
    %1629 = vmatprep.subr.mxu0 0.0
    %1630 = vmatpush1.xpose.msra.mxu0 0.0
    %1631 = vmatprep.subr.mxu0 0.0
    %1632 = vmatpush1.xpose.msra.mxu0 0.0
    %1633 = vmatprep.subr.mxu0 0.0
    %1634 = vmatpush1.xpose.msra.mxu0 0.0
    %1635 = vmatprep.subr.mxu0 0.0
    %1636 = vmatpush1.xpose.msra.mxu0 0.0
    %1637 = vmatprep.subr.mxu0 0.0
    %1638 = vmatpush1.xpose.msra.mxu0 0.0
    %1639 = vmatprep.subr.mxu0 0.0
    %1640 = vmatpush1.xpose.msra.mxu0 0.0
    %1641 = vmatprep.subr.mxu0 0.0
    %1642 = vmatpush1.xpose.msra.mxu0 0.0
    %1643 = vmatprep.subr.mxu0 0.0
    %1644 = vmatpush1.xpose.msra.mxu0 0.0
    %1645 = vmatprep.subr.mxu0 0.0
    %1646 = vmatpush1.xpose.msra.mxu0 0.0
    %1647 = vmatprep.subr.mxu0 0.0
    %1648 = vmatpush1.xpose.msra.mxu0 0.0
    %1649 = vmatprep.subr.mxu0 0.0
    %1650 = vmatpush1.xpose.msra.mxu0 0.0
    %1651 = vmatprep.subr.mxu0 0.0
    %1652 = vmatpush1.xpose.msra.mxu0 0.0
    %1653 = vmatprep.subr.mxu0 0.0
    %1654 = vmatpush1.xpose.msra.mxu0 0.0
    %1655 = vmatprep.subr.mxu0 0.0
    %1656 = vmatpush1.xpose.msra.mxu0 0.0
    %1657 = vmatprep.subr.mxu0 0.0
    %1658 = vmatpush1.xpose.msra.mxu0 0.0
    %1659 = vmatprep.subr.mxu0 0.0
    %1660 = vmatpush1.xpose.msra.mxu0 0.0
    %1661 = vmatprep.subr.mxu0 0.0
    %1662 = vmatpush1.xpose.msra.mxu0 0.0
    %1663 = vmatprep.subr.mxu0 0.0
    %1664 = vmatpush1.xpose.msra.mxu0 0.0
    %1665 = vmatprep.subr.mxu0 0.0
    %1666 = vmatpush1.xpose.msra.mxu0 0.0
    %1667 = vmatprep.subr.mxu0 0.0
    %1668 = vmatpush1.xpose.msra.mxu0 0.0
    %1669 = vmatprep.subr.mxu0 0.0
    %1670 = vmatpush1.xpose.msra.mxu0 0.0
    %1671 = vmatprep.subr.mxu0 0.0
    %1672 = vmatpush1.xpose.msra.mxu0 0.0
    %1673 = vmatprep.subr.mxu0 0.0
    %1674 = vmatpush1.xpose.msra.mxu0 0.0
    %1675 = vmatprep.subr.mxu0 0.0
    %1676 = vmatpush1.xpose.msra.mxu0 0.0
    %1677 = vmatprep.subr.mxu0 0.0
    %1678 = vmatpush1.xpose.msra.mxu0 0.0
    %1679 = vmatprep.subr.mxu0 0.0
    %1680 = vmatpush1.xpose.msra.mxu0 0.0
    %1681 = vmatprep.mubr.f32.mxu0 0.0
    %1682 = vmatmul.mubr.f32.gmra.mrb[0].mxu0 %v1609
    %v1683 = vpop.f32.mrb[0].mxu0
    %v1684 = vadd.f32 0.0, %v1683
    %v1685 = vpop.f32.mrb[0].mxu0
    %1686 = vmatprep.mubr.f32.mxu0 0.0
    %1687 = vmatmul.mubr.f32.gmra.mrb[0].mxu0 %v1612
    %v1688 = vpop.f32.mrb[0].mxu0
    %v1689 = vadd.f32 0.0, %v1688
    %v1690 = vpop.f32.mrb[0].mxu0
    %1691 = vdwg.mxu0
    %v1692 = vmax.f32 %v1684, -50000.0
    %v1693 = vmax.f32 %v1689, -50000.0
    %v1694 = vmin.f32 %v1692, 50000.0
    %v1695 = vmin.f32 %v1693, 50000.0
    %v1696 = vadd.f32 %v1694, %v1606
    %v1697 = vadd.f32 %v1695, %v1606
    %v1698 = vsel %vm92, %v1696, -inf
    %1699 = vmax.xlane.f32.xlu0 %v1698
    %v1700 = vpop.xlane.xlu0 %1699
    %v1701 = vsel %vm92, %v1697, -inf
    %1702 = vmax.xlane.f32.xlu0 %v1701
    %v1703 = vpop.xlane.xlu0 %1702
    %v1704 = vsub.f32 %v1696, %v1700
    %v1705 = vsub.f32 %v1697, %v1703
    %v1706 = vmul.f32 %v1704, 1.442695
    %v1707 = vpow.pop %v1706
    %v1708 = vmul.f32 %v1705, 1.442695
    %v1709 = vpow.pop %v1708
    %v1710 = vsel %vm92, %v1707, 0.0
    %1711 = vadd.xlane.f32.xlu0 %v1710
    %v1712 = vpop.xlane.xlu0 %1711
    %v1713 = vsel %vm92, %v1709, 0.0
    %1714 = vadd.xlane.f32.xlu0 %v1713
    %v1715 = vpop.xlane.xlu0 %1714
    %v1716 = vrcp.pop %v1712
    %v1717 = vrcp.pop %v1715
    %v1718 = vmul.f32 %v1707, %v1716
    %v1719 = vmul.f32 %v1709, %v1717
    %v1721 = vsel %vm92, %v1718, 0
    %v1724 = vsel %vm92, %v1719, 0
    %1726 = vmatprep.subr.mxu0 0.0
    %1727 = vmatpush1.msra.mxu0 %v1599
    %1728 = vmatprep.subr.mxu0 0.0
    %1729 = vmatpush1.msra.mxu0 0.0
    %1730 = vmatprep.subr.mxu0 0.0
    %1731 = vmatpush1.msra.mxu0 0.0
    %1732 = vmatprep.subr.mxu0 0.0
    %1733 = vmatpush1.msra.mxu0 0.0
    %1734 = vmatprep.subr.mxu0 0.0
    %1735 = vmatpush1.msra.mxu0 0.0
    %1736 = vmatprep.subr.mxu0 0.0
    %1737 = vmatpush1.msra.mxu0 0.0
    %1738 = vmatprep.subr.mxu0 0.0
    %1739 = vmatpush1.msra.mxu0 0.0
    %1740 = vmatprep.subr.mxu0 0.0
    %1741 = vmatpush1.msra.mxu0 0.0
    %1742 = vmatprep.subr.mxu0 0.0
    %1743 = vmatpush1.msra.mxu0 0.0
    %1744 = vmatprep.subr.mxu0 0.0
    %1745 = vmatpush1.msra.mxu0 0.0
    %1746 = vmatprep.subr.mxu0 0.0
    %1747 = vmatpush1.msra.mxu0 0.0
    %1748 = vmatprep.subr.mxu0 0.0
    %1749 = vmatpush1.msra.mxu0 0.0
    %1750 = vmatprep.subr.mxu0 0.0
    %1751 = vmatpush1.msra.mxu0 0.0
    %1752 = vmatprep.subr.mxu0 0.0
    %1753 = vmatpush1.msra.mxu0 0.0
    %1754 = vmatprep.subr.mxu0 0.0
    %1755 = vmatpush1.msra.mxu0 0.0
    %1756 = vmatprep.subr.mxu0 0.0
    %1757 = vmatpush1.msra.mxu0 0.0
    %1758 = vmatprep.subr.mxu0 0.0
    %1759 = vmatpush1.msra.mxu0 0.0
    %1760 = vmatprep.subr.mxu0 0.0
    %1761 = vmatpush1.msra.mxu0 0.0
    %1762 = vmatprep.subr.mxu0 0.0
    %1763 = vmatpush1.msra.mxu0 0.0
    %1764 = vmatprep.subr.mxu0 0.0
    %1765 = vmatpush1.msra.mxu0 0.0
    %1766 = vmatprep.subr.mxu0 0.0
    %1767 = vmatpush1.msra.mxu0 0.0
    %1768 = vmatprep.subr.mxu0 0.0
    %1769 = vmatpush1.msra.mxu0 0.0
    %1770 = vmatprep.subr.mxu0 0.0
    %1771 = vmatpush1.msra.mxu0 0.0
    %1772 = vmatprep.subr.mxu0 0.0
    %1773 = vmatpush1.msra.mxu0 0.0
    %1774 = vmatprep.subr.mxu0 0.0
    %1775 = vmatpush1.msra.mxu0 0.0
    %1776 = vmatprep.subr.mxu0 0.0
    %1777 = vmatpush1.msra.mxu0 0.0
    %1778 = vmatprep.subr.mxu0 0.0
    %1779 = vmatpush1.msra.mxu0 0.0
    %1780 = vmatprep.subr.mxu0 0.0
    %1781 = vmatpush1.msra.mxu0 0.0
    %1782 = vmatprep.subr.mxu0 0.0
    %1783 = vmatpush1.msra.mxu0 0.0
    %1784 = vmatprep.subr.mxu0 0.0
    %1785 = vmatpush1.msra.mxu0 0.0
    %1786 = vmatprep.subr.mxu0 0.0
    %1787 = vmatpush1.msra.mxu0 0.0
    %1788 = vmatprep.subr.mxu0 0.0
    %1789 = vmatpush1.msra.mxu0 0.0
    %1790 = vmatprep.mubr.f32.mxu0 0.0
    %1791 = vmatmul.mubr.f32.gmra.mrb[0].mxu0 %v1721
    %v1792 = vpop.f32.mrb[0].mxu0
    %v1793 = vadd.f32 0.0, %v1792
    %v1794 = vpop.f32.mrb[0].mxu0
    %1795 = vmatprep.mubr.f32.mxu0 0.0
    %1796 = vmatmul.mubr.f32.gmra.mrb[0].mxu0 %v1724
    %v1797 = vpop.f32.mrb[0].mxu0
    %v1798 = vadd.f32 0.0, %v1797
    %v1799 = vpop.f32.mrb[0].mxu0
    %1800 = vdwg.mxu0
    %1801 = vmatprep.subr.mxu0 0.0
    %1802 = vmatpush1.xpose.msra.mxu0 %v1609
    %1803 = vmatprep.subr.mxu0 0.0
    %1804 = vmatpush1.xpose.msra.mxu0 %v1612
    %1805 = vmatprep.subr.mxu0 0.0
    %1806 = vmatpush1.xpose.msra.mxu0 0.0
    %1807 = vmatprep.subr.mxu0 0.0
    %1808 = vmatpush1.xpose.msra.mxu0 0.0
    %1809 = vmatprep.subr.mxu0 0.0
    %1810 = vmatpush1.xpose.msra.mxu0 0.0
    %1811 = vmatprep.subr.mxu0 0.0
    %1812 = vmatpush1.xpose.msra.mxu0 0.0
    %1813 = vmatprep.subr.mxu0 0.0
    %1814 = vmatpush1.xpose.msra.mxu0 0.0
    %1815 = vmatprep.subr.mxu0 0.0
    %1816 = vmatpush1.xpose.msra.mxu0 0.0
    %1817 = vmatprep.subr.mxu0 0.0
    %1818 = vmatpush1.xpose.msra.mxu0 0.0
    %1819 = vmatprep.subr.mxu0 0.0
    %1820 = vmatpush1.xpose.msra.mxu0 0.0
    %1821 = vmatprep.subr.mxu0 0.0
    %1822 = vmatpush1.xpose.msra.mxu0 0.0
    %1823 = vmatprep.subr.mxu0 0.0
    %1824 = vmatpush1.xpose.msra.mxu0 0.0
    %1825 = vmatprep.subr.mxu0 0.0
    %1826 = vmatpush1.xpose.msra.mxu0 0.0
    %1827 = vmatprep.subr.mxu0 0.0
    %1828 = vmatpush1.xpose.msra.mxu0 0.0
    %1829 = vmatprep.subr.mxu0 0.0
    %1830 = vmatpush1.xpose.msra.mxu0 0.0
    %1831 = vmatprep.subr.mxu0 0.0
    %1832 = vmatpush1.xpose.msra.mxu0 0.0
    %1833 = vmatprep.subr.mxu0 0.0
    %1834 = vmatpush1.xpose.msra.mxu0 0.0
    %1835 = vmatprep.subr.mxu0 0.0
    %1836 = vmatpush1.xpose.msra.mxu0 0.0
    %1837 = vmatprep.subr.mxu0 0.0
    %1838 = vmatpush1.xpose.msra.mxu0 0.0
    %1839 = vmatprep.subr.mxu0 0.0
    %1840 = vmatpush1.xpose.msra.mxu0 0.0
    %1841 = vmatprep.subr.mxu0 0.0
    %1842 = vmatpush1.xpose.msra.mxu0 0.0
    %1843 = vmatprep.subr.mxu0 0.0
    %1844 = vmatpush1.xpose.msra.mxu0 0.0
    %1845 = vmatprep.subr.mxu0 0.0
    %1846 = vmatpush1.xpose.msra.mxu0 0.0
    %1847 = vmatprep.subr.mxu0 0.0
    %1848 = vmatpush1.xpose.msra.mxu0 0.0
    %1849 = vmatprep.subr.mxu0 0.0
    %1850 = vmatpush1.xpose.msra.mxu0 0.0
    %1851 = vmatprep.subr.mxu0 0.0
    %1852 = vmatpush1.xpose.msra.mxu0 0.0
    %1853 = vmatprep.subr.mxu0 0.0
    %1854 = vmatpush1.xpose.msra.mxu0 0.0
    %1855 = vmatprep.subr.mxu0 0.0
    %1856 = vmatpush1.xpose.msra.mxu0 0.0
    %1857 = vmatprep.subr.mxu0 0.0
    %1858 = vmatpush1.xpose.msra.mxu0 0.0
    %1859 = vmatprep.subr.mxu0 0.0
    %1860 = vmatpush1.xpose.msra.mxu0 0.0
    %1861 = vmatprep.subr.mxu0 0.0
    %1862 = vmatpush1.xpose.msra.mxu0 0.0
    %1863 = vmatprep.subr.mxu0 0.0
    %1864 = vmatpush1.xpose.msra.mxu0 0.0
    %1865 = vmatprep.mubr.f32.mxu0 0.0
    %1866 = vmatmul.mubr.f32.gmra.mrb[0].mxu0 %v1615
    %v1867 = vpop.f32.mrb[0].mxu0
    %v1868 = vadd.f32 0.0, %v1867
    %v1869 = vpop.f32.mrb[0].mxu0
    %1870 = vdwg.mxu0
    %v1871 = vmax.f32 %v1868, -50000.0
    %v1872 = vmin.f32 %v1871, 50000.0
    %v1873 = vsel %vm358, %v1872, -inf
    %1874 = vmax.xlane.f32.xlu0 %v1873
    %v1875 = vpop.xlane.xlu0 %1874
    %v1876 = vsub.f32 %v1872, %v1875
    %v1877 = vmax.f32 %v1876, -50000.0
    %v1878 = vmin.f32 %v1877, 50000.0
    %v1879 = vmul.f32 %v1878, 1.442695
    %v1880 = vpow.pop %v1879
    %v1881 = vsel %vm358, %v1880, 0.0
    %1882 = vadd.xlane.f32.xlu0 %v1881
    %v1883 = vpop.xlane.xlu0 %1882
    %v1884 = vrcp.pop %v1883
    %v1885 = vmul.f32 %v1880, %v1884
    %v1887 = vsel %vm358, %v1885, 0
    %1889 = vmatprep.subr.mxu0 0.0
    %1890 = vmatpush1.msra.mxu0 %v1596
    %1891 = vmatprep.subr.mxu0 0.0
    %1892 = vmatpush1.msra.mxu0 %v1597
    %1893 = vmatprep.subr.mxu0 0.0
    %1894 = vmatpush1.msra.mxu0 0.0
    %1895 = vmatprep.subr.mxu0 0.0
    %1896 = vmatpush1.msra.mxu0 0.0
    %1897 = vmatprep.subr.mxu0 0.0
    %1898 = vmatpush1.msra.mxu0 0.0
    %1899 = vmatprep.subr.mxu0 0.0
    %1900 = vmatpush1.msra.mxu0 0.0
    %1901 = vmatprep.subr.mxu0 0.0
    %1902 = vmatpush1.msra.mxu0 0.0
    %1903 = vmatprep.subr.mxu0 0.0
    %1904 = vmatpush1.msra.mxu0 0.0
    %1905 = vmatprep.subr.mxu0 0.0
    %1906 = vmatpush1.msra.mxu0 0.0
    %1907 = vmatprep.subr.mxu0 0.0
    %1908 = vmatpush1.msra.mxu0 0.0
    %1909 = vmatprep.subr.mxu0 0.0
    %1910 = vmatpush1.msra.mxu0 0.0
    %1911 = vmatprep.subr.mxu0 0.0
    %1912 = vmatpush1.msra.mxu0 0.0
    %1913 = vmatprep.subr.mxu0 0.0
    %1914 = vmatpush1.msra.mxu0 0.0
    %1915 = vmatprep.subr.mxu0 0.0
    %1916 = vmatpush1.msra.mxu0 0.0
    %1917 = vmatprep.subr.mxu0 0.0
    %1918 = vmatpush1.msra.mxu0 0.0
    %1919 = vmatprep.subr.mxu0 0.0
    %1920 = vmatpush1.msra.mxu0 0.0
    %1921 = vmatprep.subr.mxu0 0.0
    %1922 = vmatpush1.msra.mxu0 0.0
    %1923 = vmatprep.subr.mxu0 0.0
    %1924 = vmatpush1.msra.mxu0 0.0
    %1925 = vmatprep.subr.mxu0 0.0
    %1926 = vmatpush1.msra.mxu0 0.0
    %1927 = vmatprep.subr.mxu0 0.0
    %1928 = vmatpush1.msra.mxu0 0.0
    %1929 = vmatprep.subr.mxu0 0.0
    %1930 = vmatpush1.msra.mxu0 0.0
    %1931 = vmatprep.subr.mxu0 0.0
    %1932 = vmatpush1.msra.mxu0 0.0
    %1933 = vmatprep.subr.mxu0 0.0
    %1934 = vmatpush1.msra.mxu0 0.0
    %1935 = vmatprep.subr.mxu0 0.0
    %1936 = vmatpush1.msra.mxu0 0.0
    %1937 = vmatprep.subr.mxu0 0.0
    %1938 = vmatpush1.msra.mxu0 0.0
    %1939 = vmatprep.subr.mxu0 0.0
    %1940 = vmatpush1.msra.mxu0 0.0
    %1941 = vmatprep.subr.mxu0 0.0
    %1942 = vmatpush1.msra.mxu0 0.0
    %1943 = vmatprep.subr.mxu0 0.0
    %1944 = vmatpush1.msra.mxu0 0.0
    %1945 = vmatprep.subr.mxu0 0.0
    %1946 = vmatpush1.msra.mxu0 0.0
    %1947 = vmatprep.subr.mxu0 0.0
    %1948 = vmatpush1.msra.mxu0 0.0
    %1949 = vmatprep.subr.mxu0 0.0
    %1950 = vmatpush1.msra.mxu0 0.0
    %1951 = vmatprep.subr.mxu0 0.0
    %1952 = vmatpush1.msra.mxu0 0.0
    %1953 = vmatprep.mubr.f32.mxu0 0.0
    %1954 = vmatmul.mubr.f32.gmra.mrb[0].mxu0 %v1887
    %v1955 = vpop.f32.mrb[0].mxu0
    %v1956 = vadd.f32 0.0, %v1955
    %v1957 = vpop.f32.mrb[0].mxu0
    %1958 = vdwg.mxu0
    %1959 = vrot.lane.b32.xlu0 %v1591, 120
    %v1960 = vpop.permute.xlu0 %1959
    %1961 = vrot.lane.b32.xlu0 %v1592, 120
    %v1962 = vpop.permute.xlu0 %1961
    %1963 = vrot.lane.b32.xlu0 %v1594, 120
    %v1964 = vpop.permute.xlu0 %1963
    %v1965 = vsel %vm92, %v1960, 0
    %v1967 = vsel %vm92, %v1962, 0
    %v1969 = vsel %vm92, %v1964, 0
    %1971 = vmatprep.subr.mxu0 0.0
    %1972 = vmatpush1.xpose.msra.mxu0 %v1969
    %1973 = vmatprep.subr.mxu0 0.0
    %1974 = vmatpush1.xpose.msra.mxu0 0.0
    %1975 = vmatprep.subr.mxu0 0.0
    %1976 = vmatpush1.xpose.msra.mxu0 0.0
    %1977 = vmatprep.subr.mxu0 0.0
    %1978 = vmatpush1.xpose.msra.mxu0 0.0
    %1979 = vmatprep.subr.mxu0 0.0
    %1980 = vmatpush1.xpose.msra.mxu0 0.0
    %1981 = vmatprep.subr.mxu0 0.0
    %1982 = vmatpush1.xpose.msra.mxu0 0.0
    %1983 = vmatprep.subr.mxu0 0.0
    %1984 = vmatpush1.xpose.msra.mxu0 0.0
    %1985 = vmatprep.subr.mxu0 0.0
    %1986 = vmatpush1.xpose.msra.mxu0 0.0
    %1987 = vmatprep.subr.mxu0 0.0
    %1988 = vmatpush1.xpose.msra.mxu0 0.0
    %1989 = vmatprep.subr.mxu0 0.0
    %1990 = vmatpush1.xpose.msra.mxu0 0.0
    %1991 = vmatprep.subr.mxu0 0.0
    %1992 = vmatpush1.xpose.msra.mxu0 0.0
    %1993 = vmatprep.subr.mxu0 0.0
    %1994 = vmatpush1.xpose.msra.mxu0 0.0
    %1995 = vmatprep.subr.mxu0 0.0
    %1996 = vmatpush1.xpose.msra.mxu0 0.0
    %1997 = vmatprep.subr.mxu0 0.0
    %1998 = vmatpush1.xpose.msra.mxu0 0.0
    %1999 = vmatprep.subr.mxu0 0.0
    %2000 = vmatpush1.xpose.msra.mxu0 0.0
    %2001 = vmatprep.subr.mxu0 0.0
    %2002 = vmatpush1.xpose.msra.mxu0 0.0
    %2003 = vmatprep.subr.mxu0 0.0
    %2004 = vmatpush1.xpose.msra.mxu0 0.0
    %2005 = vmatprep.subr.mxu0 0.0
    %2006 = vmatpush1.xpose.msra.mxu0 0.0
    %2007 = vmatprep.subr.mxu0 0.0
    %2008 = vmatpush1.xpose.msra.mxu0 0.0
    %2009 = vmatprep.subr.mxu0 0.0
    %2010 = vmatpush1.xpose.msra.mxu0 0.0
    %2011 = vmatprep.subr.mxu0 0.0
    %2012 = vmatpush1.xpose.msra.mxu0 0.0
    %2013 = vmatprep.subr.mxu0 0.0
    %2014 = vmatpush1.xpose.msra.mxu0 0.0
    %2015 = vmatprep.subr.mxu0 0.0
    %2016 = vmatpush1.xpose.msra.mxu0 0.0
    %2017 = vmatprep.subr.mxu0 0.0
    %2018 = vmatpush1.xpose.msra.mxu0 0.0
    %2019 = vmatprep.subr.mxu0 0.0
    %2020 = vmatpush1.xpose.msra.mxu0 0.0
    %2021 = vmatprep.subr.mxu0 0.0
    %2022 = vmatpush1.xpose.msra.mxu0 0.0
    %2023 = vmatprep.subr.mxu0 0.0
    %2024 = vmatpush1.xpose.msra.mxu0 0.0
    %2025 = vmatprep.subr.mxu0 0.0
    %2026 = vmatpush1.xpose.msra.mxu0 0.0
    %2027 = vmatprep.subr.mxu0 0.0
    %2028 = vmatpush1.xpose.msra.mxu0 0.0
    %2029 = vmatprep.subr.mxu0 0.0
    %2030 = vmatpush1.xpose.msra.mxu0 0.0
    %2031 = vmatprep.subr.mxu0 0.0
    %2032 = vmatpush1.xpose.msra.mxu0 0.0
    %2033 = vmatprep.subr.mxu0 0.0
    %2034 = vmatpush1.xpose.msra.mxu0 0.0
    %2035 = vmatprep.mubr.f32.mxu0 0.0
    %2036 = vmatmul.mubr.f32.gmra.mrb[0].mxu0 %v1965
    %v2037 = vpop.f32.mrb[0].mxu0
    %v2038 = vadd.f32 0.0, %v2037
    %v2039 = vpop.f32.mrb[0].mxu0
    %2040 = vmatprep.mubr.f32.mxu0 0.0
    %2041 = vmatmul.mubr.f32.gmra.mrb[0].mxu0 %v1967
    %v2042 = vpop.f32.mrb[0].mxu0
    %v2043 = vadd.f32 0.0, %v2042
    %v2044 = vpop.f32.mrb[0].mxu0
    %2045 = vdwg.mxu0
    %v2046 = vmax.f32 %v2038, -50000.0
    %v2047 = vmax.f32 %v2043, -50000.0
    %v2048 = vmin.f32 %v2046, 50000.0
    %v2049 = vmin.f32 %v2047, 50000.0
    %v2050 = vadd.f32 %v2048, %v1606
    %v2051 = vadd.f32 %v2049, %v1606
    %v2052 = vsel %vm92, %v2050, -inf
    %2053 = vmax.xlane.f32.xlu0 %v2052
    %v2054 = vpop.xlane.xlu0 %2053
    %v2055 = vsel %vm92, %v2051, -inf
    %2056 = vmax.xlane.f32.xlu0 %v2055
    %v2057 = vpop.xlane.xlu0 %2056
    %v2058 = vsub.f32 %v2050, %v2054
    %v2059 = vsub.f32 %v2051, %v2057
    %v2060 = vmul.f32 %v2058, 1.442695
    %v2061 = vpow.pop %v2060
    %v2062 = vmul.f32 %v2059, 1.442695
    %v2063 = vpow.pop %v2062
    %v2064 = vsel %vm92, %v2061, 0.0
    %2065 = vadd.xlane.f32.xlu0 %v2064
    %v2066 = vpop.xlane.xlu0 %2065
    %v2067 = vsel %vm92, %v2063, 0.0
    %2068 = vadd.xlane.f32.xlu0 %v2067
    %v2069 = vpop.xlane.xlu0 %2068
    %v2070 = vrcp.pop %v2066
    %v2071 = vrcp.pop %v2069
    %v2072 = vmul.f32 %v2061, %v2070
    %v2073 = vmul.f32 %v2063, %v2071
    %2075 = vrot.lane.b32.xlu0 %v1599, 120
    %v2076 = vpop.permute.xlu0 %2075
    %v2079 = vsel %vm92, %v2072, 0
    %v2082 = vsel %vm92, %v2073, 0
    %2084 = vmatprep.subr.mxu0 0.0
    %2085 = vmatpush1.msra.mxu0 %v2076
    %2086 = vmatprep.subr.mxu0 0.0
    %2087 = vmatpush1.msra.mxu0 0.0
    %2088 = vmatprep.subr.mxu0 0.0
    %2089 = vmatpush1.msra.mxu0 0.0
    %2090 = vmatprep.subr.mxu0 0.0
    %2091 = vmatpush1.msra.mxu0 0.0
    %2092 = vmatprep.subr.mxu0 0.0
    %2093 = vmatpush1.msra.mxu0 0.0
    %2094 = vmatprep.subr.mxu0 0.0
    %2095 = vmatpush1.msra.mxu0 0.0
    %2096 = vmatprep.subr.mxu0 0.0
    %2097 = vmatpush1.msra.mxu0 0.0
    %2098 = vmatprep.subr.mxu0 0.0
    %2099 = vmatpush1.msra.mxu0 0.0
    %2100 = vmatprep.subr.mxu0 0.0
    %2101 = vmatpush1.msra.mxu0 0.0
    %2102 = vmatprep.subr.mxu0 0.0
    %2103 = vmatpush1.msra.mxu0 0.0
    %2104 = vmatprep.subr.mxu0 0.0
    %2105 = vmatpush1.msra.mxu0 0.0
    %2106 = vmatprep.subr.mxu0 0.0
    %2107 = vmatpush1.msra.mxu0 0.0
    %2108 = vmatprep.subr.mxu0 0.0
    %2109 = vmatpush1.msra.mxu0 0.0
    %2110 = vmatprep.subr.mxu0 0.0
    %2111 = vmatpush1.msra.mxu0 0.0
    %2112 = vmatprep.subr.mxu0 0.0
    %2113 = vmatpush1.msra.mxu0 0.0
    %2114 = vmatprep.subr.mxu0 0.0
    %2115 = vmatpush1.msra.mxu0 0.0
    %2116 = vmatprep.subr.mxu0 0.0
    %2117 = vmatpush1.msra.mxu0 0.0
    %2118 = vmatprep.subr.mxu0 0.0
    %2119 = vmatpush1.msra.mxu0 0.0
    %2120 = vmatprep.subr.mxu0 0.0
    %2121 = vmatpush1.msra.mxu0 0.0
    %2122 = vmatprep.subr.mxu0 0.0
    %2123 = vmatpush1.msra.mxu0 0.0
    %2124 = vmatprep.subr.mxu0 0.0
    %2125 = vmatpush1.msra.mxu0 0.0
    %2126 = vmatprep.subr.mxu0 0.0
    %2127 = vmatpush1.msra.mxu0 0.0
    %2128 = vmatprep.subr.mxu0 0.0
    %2129 = vmatpush1.msra.mxu0 0.0
    %2130 = vmatprep.subr.mxu0 0.0
    %2131 = vmatpush1.msra.mxu0 0.0
    %2132 = vmatprep.subr.mxu0 0.0
    %2133 = vmatpush1.msra.mxu0 0.0
    %2134 = vmatprep.subr.mxu0 0.0
    %2135 = vmatpush1.msra.mxu0 0.0
    %2136 = vmatprep.subr.mxu0 0.0
    %2137 = vmatpush1.msra.mxu0 0.0
    %2138 = vmatprep.subr.mxu0 0.0
    %2139 = vmatpush1.msra.mxu0 0.0
    %2140 = vmatprep.subr.mxu0 0.0
    %2141 = vmatpush1.msra.mxu0 0.0
    %2142 = vmatprep.subr.mxu0 0.0
    %2143 = vmatpush1.msra.mxu0 0.0
    %2144 = vmatprep.subr.mxu0 0.0
    %2145 = vmatpush1.msra.mxu0 0.0
    %2146 = vmatprep.subr.mxu0 0.0
    %2147 = vmatpush1.msra.mxu0 0.0
    %2148 = vmatprep.mubr.f32.mxu0 0.0
    %2149 = vmatmul.mubr.f32.gmra.mrb[0].mxu0 %v2079
    %v2150 = vpop.f32.mrb[0].mxu0
    %v2151 = vadd.f32 0.0, %v2150
    %v2152 = vpop.f32.mrb[0].mxu0
    %2153 = vmatprep.mubr.f32.mxu0 0.0
    %2154 = vmatmul.mubr.f32.gmra.mrb[0].mxu0 %v2082
    %v2155 = vpop.f32.mrb[0].mxu0
    %v2156 = vadd.f32 0.0, %v2155
    %v2157 = vpop.f32.mrb[0].mxu0
    %2158 = vdwg.mxu0
    %2159 = vmatprep.subr.mxu0 0.0
    %2160 = vmatpush1.xpose.msra.mxu0 %v1965
    %2161 = vmatprep.subr.mxu0 0.0
    %2162 = vmatpush1.xpose.msra.mxu0 %v1967
    %2163 = vmatprep.subr.mxu0 0.0
    %2164 = vmatpush1.xpose.msra.mxu0 0.0
    %2165 = vmatprep.subr.mxu0 0.0
    %2166 = vmatpush1.xpose.msra.mxu0 0.0
    %2167 = vmatprep.subr.mxu0 0.0
    %2168 = vmatpush1.xpose.msra.mxu0 0.0
    %2169 = vmatprep.subr.mxu0 0.0
    %2170 = vmatpush1.xpose.msra.mxu0 0.0
    %2171 = vmatprep.subr.mxu0 0.0
    %2172 = vmatpush1.xpose.msra.mxu0 0.0
    %2173 = vmatprep.subr.mxu0 0.0
    %2174 = vmatpush1.xpose.msra.mxu0 0.0
    %2175 = vmatprep.subr.mxu0 0.0
    %2176 = vmatpush1.xpose.msra.mxu0 0.0
    %2177 = vmatprep.subr.mxu0 0.0
    %2178 = vmatpush1.xpose.msra.mxu0 0.0
    %2179 = vmatprep.subr.mxu0 0.0
    %2180 = vmatpush1.xpose.msra.mxu0 0.0
    %2181 = vmatprep.subr.mxu0 0.0
    %2182 = vmatpush1.xpose.msra.mxu0 0.0
    %2183 = vmatprep.subr.mxu0 0.0
    %2184 = vmatpush1.xpose.msra.mxu0 0.0
    %2185 = vmatprep.subr.mxu0 0.0
    %2186 = vmatpush1.xpose.msra.mxu0 0.0
    %2187 = vmatprep.subr.mxu0 0.0
    %2188 = vmatpush1.xpose.msra.mxu0 0.0
    %2189 = vmatprep.subr.mxu0 0.0
    %2190 = vmatpush1.xpose.msra.mxu0 0.0
    %2191 = vmatprep.subr.mxu0 0.0
    %2192 = vmatpush1.xpose.msra.mxu0 0.0
    %2193 = vmatprep.subr.mxu0 0.0
    %2194 = vmatpush1.xpose.msra.mxu0 0.0
    %2195 = vmatprep.subr.mxu0 0.0
    %2196 = vmatpush1.xpose.msra.mxu0 0.0
    %2197 = vmatprep.subr.mxu0 0.0
    %2198 = vmatpush1.xpose.msra.mxu0 0.0
    %2199 = vmatprep.subr.mxu0 0.0
    %2200 = vmatpush1.xpose.msra.mxu0 0.0
    %2201 = vmatprep.subr.mxu0 0.0
    %2202 = vmatpush1.xpose.msra.mxu0 0.0
    %2203 = vmatprep.subr.mxu0 0.0
    %2204 = vmatpush1.xpose.msra.mxu0 0.0
    %2205 = vmatprep.subr.mxu0 0.0
    %2206 = vmatpush1.xpose.msra.mxu0 0.0
    %2207 = vmatprep.subr.mxu0 0.0
    %2208 = vmatpush1.xpose.msra.mxu0 0.0
    %2209 = vmatprep.subr.mxu0 0.0
    %2210 = vmatpush1.xpose.msra.mxu0 0.0
    %2211 = vmatprep.subr.mxu0 0.0
    %2212 = vmatpush1.xpose.msra.mxu0 0.0
    %2213 = vmatprep.subr.mxu0 0.0
    %2214 = vmatpush1.xpose.msra.mxu0 0.0
    %2215 = vmatprep.subr.mxu0 0.0
    %2216 = vmatpush1.xpose.msra.mxu0 0.0
    %2217 = vmatprep.subr.mxu0 0.0
    %2218 = vmatpush1.xpose.msra.mxu0 0.0
    %2219 = vmatprep.subr.mxu0 0.0
    %2220 = vmatpush1.xpose.msra.mxu0 0.0
    %2221 = vmatprep.subr.mxu0 0.0
    %2222 = vmatpush1.xpose.msra.mxu0 0.0
    %2223 = vmatprep.mubr.f32.mxu0 0.0
    %2224 = vmatmul.mubr.f32.gmra.mrb[0].mxu0 %v1969
    %v2225 = vpop.f32.mrb[0].mxu0
    %v2226 = vadd.f32 0.0, %v2225
    %v2227 = vpop.f32.mrb[0].mxu0
    %2228 = vdwg.mxu0
    %v2229 = vmax.f32 %v2226, -50000.0
    %v2230 = vmin.f32 %v2229, 50000.0
    %v2231 = vsel %vm358, %v2230, -inf
    %2232 = vmax.xlane.f32.xlu0 %v2231
    %v2233 = vpop.xlane.xlu0 %2232
    %v2234 = vsub.f32 %v2230, %v2233
    %v2235 = vmax.f32 %v2234, -50000.0
    %v2236 = vmin.f32 %v2235, 50000.0
    %v2237 = vmul.f32 %v2236, 1.442695
    %v2238 = vpow.pop %v2237
    %v2239 = vsel %vm358, %v2238, 0.0
    %2240 = vadd.xlane.f32.xlu0 %v2239
    %v2241 = vpop.xlane.xlu0 %2240
    %v2242 = vrcp.pop %v2241
    %v2243 = vmul.f32 %v2238, %v2242
    %2246 = vrot.lane.b32.xlu0 %v1596, 120
    %v2247 = vpop.permute.xlu0 %2246
    %2248 = vrot.lane.b32.xlu0 %v1597, 120
    %v2249 = vpop.permute.xlu0 %2248
    %v2253 = vsel %vm358, %v2243, 0
    %2255 = vmatprep.subr.mxu0 0.0
    %2256 = vmatpush1.msra.mxu0 %v2247
    %2257 = vmatprep.subr.mxu0 0.0
    %2258 = vmatpush1.msra.mxu0 %v2249
    %2259 = vmatprep.subr.mxu0 0.0
    %2260 = vmatpush1.msra.mxu0 0.0
    %2261 = vmatprep.subr.mxu0 0.0
    %2262 = vmatpush1.msra.mxu0 0.0
    %2263 = vmatprep.subr.mxu0 0.0
    %2264 = vmatpush1.msra.mxu0 0.0
    %2265 = vmatprep.subr.mxu0 0.0
    %2266 = vmatpush1.msra.mxu0 0.0
    %2267 = vmatprep.subr.mxu0 0.0
    %2268 = vmatpush1.msra.mxu0 0.0
    %2269 = vmatprep.subr.mxu0 0.0
    %2270 = vmatpush1.msra.mxu0 0.0
    %2271 = vmatprep.subr.mxu0 0.0
    %2272 = vmatpush1.msra.mxu0 0.0
    %2273 = vmatprep.subr.mxu0 0.0
    %2274 = vmatpush1.msra.mxu0 0.0
    %2275 = vmatprep.subr.mxu0 0.0
    %2276 = vmatpush1.msra.mxu0 0.0
    %2277 = vmatprep.subr.mxu0 0.0
    %2278 = vmatpush1.msra.mxu0 0.0
    %2279 = vmatprep.subr.mxu0 0.0
    %2280 = vmatpush1.msra.mxu0 0.0
    %2281 = vmatprep.subr.mxu0 0.0
    %2282 = vmatpush1.msra.mxu0 0.0
    %2283 = vmatprep.subr.mxu0 0.0
    %2284 = vmatpush1.msra.mxu0 0.0
    %2285 = vmatprep.subr.mxu0 0.0
    %2286 = vmatpush1.msra.mxu0 0.0
    %2287 = vmatprep.subr.mxu0 0.0
    %2288 = vmatpush1.msra.mxu0 0.0
    %2289 = vmatprep.subr.mxu0 0.0
    %2290 = vmatpush1.msra.mxu0 0.0
    %2291 = vmatprep.subr.mxu0 0.0
    %2292 = vmatpush1.msra.mxu0 0.0
    %2293 = vmatprep.subr.mxu0 0.0
    %2294 = vmatpush1.msra.mxu0 0.0
    %2295 = vmatprep.subr.mxu0 0.0
    %2296 = vmatpush1.msra.mxu0 0.0
    %2297 = vmatprep.subr.mxu0 0.0
    %2298 = vmatpush1.msra.mxu0 0.0
    %2299 = vmatprep.subr.mxu0 0.0
    %2300 = vmatpush1.msra.mxu0 0.0
    %2301 = vmatprep.subr.mxu0 0.0
    %2302 = vmatpush1.msra.mxu0 0.0
    %2303 = vmatprep.subr.mxu0 0.0
    %2304 = vmatpush1.msra.mxu0 0.0
    %2305 = vmatprep.subr.mxu0 0.0
    %2306 = vmatpush1.msra.mxu0 0.0
    %2307 = vmatprep.subr.mxu0 0.0
    %2308 = vmatpush1.msra.mxu0 0.0
    %2309 = vmatprep.subr.mxu0 0.0
    %2310 = vmatpush1.msra.mxu0 0.0
    %2311 = vmatprep.subr.mxu0 0.0
    %2312 = vmatpush1.msra.mxu0 0.0
    %2313 = vmatprep.subr.mxu0 0.0
    %2314 = vmatpush1.msra.mxu0 0.0
    %2315 = vmatprep.subr.mxu0 0.0
    %2316 = vmatpush1.msra.mxu0 0.0
    %2317 = vmatprep.subr.mxu0 0.0
    %2318 = vmatpush1.msra.mxu0 0.0
    %2319 = vmatprep.mubr.f32.mxu0 0.0
    %2320 = vmatmul.mubr.f32.gmra.mrb[0].mxu0 %v2253
    %v2321 = vpop.f32.mrb[0].mxu0
    %v2322 = vadd.f32 0.0, %v2321
    %v2323 = vpop.f32.mrb[0].mxu0
    %2324 = vdwg.mxu0
    %2325 = vrot.lane.b32.xlu0 %v1591, 112
    %v2326 = vpop.permute.xlu0 %2325
    %2327 = vrot.lane.b32.xlu0 %v1592, 112
    %v2328 = vpop.permute.xlu0 %2327
    %2329 = vrot.lane.b32.xlu0 %v1594, 112
    %v2330 = vpop.permute.xlu0 %2329
    %v2331 = vsel %vm92, %v2326, 0
    %v2333 = vsel %vm92, %v2328, 0
    %v2335 = vsel %vm92, %v2330, 0
    %2337 = vmatprep.subr.mxu0 0.0
    %2338 = vmatpush1.xpose.msra.mxu0 %v2335
    %2339 = vmatprep.subr.mxu0 0.0
    %2340 = vmatpush1.xpose.msra.mxu0 0.0
    %2341 = vmatprep.subr.mxu0 0.0
    %2342 = vmatpush1.xpose.msra.mxu0 0.0
    %2343 = vmatprep.subr.mxu0 0.0
    %2344 = vmatpush1.xpose.msra.mxu0 0.0
    %2345 = vmatprep.subr.mxu0 0.0
    %2346 = vmatpush1.xpose.msra.mxu0 0.0
    %2347 = vmatprep.subr.mxu0 0.0
    %2348 = vmatpush1.xpose.msra.mxu0 0.0
    %2349 = vmatprep.subr.mxu0 0.0
    %2350 = vmatpush1.xpose.msra.mxu0 0.0
    %2351 = vmatprep.subr.mxu0 0.0
    %2352 = vmatpush1.xpose.msra.mxu0 0.0
    %2353 = vmatprep.subr.mxu0 0.0
    %2354 = vmatpush1.xpose.msra.mxu0 0.0
    %2355 = vmatprep.subr.mxu0 0.0
    %2356 = vmatpush1.xpose.msra.mxu0 0.0
    %2357 = vmatprep.subr.mxu0 0.0
    %2358 = vmatpush1.xpose.msra.mxu0 0.0
    %2359 = vmatprep.subr.mxu0 0.0
    %2360 = vmatpush1.xpose.msra.mxu0 0.0
    %2361 = vmatprep.subr.mxu0 0.0
    %2362 = vmatpush1.xpose.msra.mxu0 0.0
    %2363 = vmatprep.subr.mxu0 0.0
    %2364 = vmatpush1.xpose.msra.mxu0 0.0
    %2365 = vmatprep.subr.mxu0 0.0
    %2366 = vmatpush1.xpose.msra.mxu0 0.0
    %2367 = vmatprep.subr.mxu0 0.0
    %2368 = vmatpush1.xpose.msra.mxu0 0.0
    %2369 = vmatprep.subr.mxu0 0.0
    %2370 = vmatpush1.xpose.msra.mxu0 0.0
    %2371 = vmatprep.subr.mxu0 0.0
    %2372 = vmatpush1.xpose.msra.mxu0 0.0
    %2373 = vmatprep.subr.mxu0 0.0
    %2374 = vmatpush1.xpose.msra.mxu0 0.0
    %2375 = vmatprep.subr.mxu0 0.0
    %2376 = vmatpush1.xpose.msra.mxu0 0.0
    %2377 = vmatprep.subr.mxu0 0.0
    %2378 = vmatpush1.xpose.msra.mxu0 0.0
    %2379 = vmatprep.subr.mxu0 0.0
    %2380 = vmatpush1.xpose.msra.mxu0 0.0
    %2381 = vmatprep.subr.mxu0 0.0
    %2382 = vmatpush1.xpose.msra.mxu0 0.0
    %2383 = vmatprep.subr.mxu0 0.0
    %2384 = vmatpush1.xpose.msra.mxu0 0.0
    %2385 = vmatprep.subr.mxu0 0.0
    %2386 = vmatpush1.xpose.msra.mxu0 0.0
    %2387 = vmatprep.subr.mxu0 0.0
    %2388 = vmatpush1.xpose.msra.mxu0 0.0
    %2389 = vmatprep.subr.mxu0 0.0
    %2390 = vmatpush1.xpose.msra.mxu0 0.0
    %2391 = vmatprep.subr.mxu0 0.0
    %2392 = vmatpush1.xpose.msra.mxu0 0.0
    %2393 = vmatprep.subr.mxu0 0.0
    %2394 = vmatpush1.xpose.msra.mxu0 0.0
    %2395 = vmatprep.subr.mxu0 0.0
    %2396 = vmatpush1.xpose.msra.mxu0 0.0
    %2397 = vmatprep.subr.mxu0 0.0
    %2398 = vmatpush1.xpose.msra.mxu0 0.0
    %2399 = vmatprep.subr.mxu0 0.0
    %2400 = vmatpush1.xpose.msra.mxu0 0.0
    %2401 = vmatprep.mubr.f32.mxu0 0.0
    %2402 = vmatmul.mubr.f32.gmra.mrb[0].mxu0 %v2331
    %v2403 = vpop.f32.mrb[0].mxu0
    %v2404 = vadd.f32 0.0, %v2403
    %v2405 = vpop.f32.mrb[0].mxu0
    %2406 = vmatprep.mubr.f32.mxu0 0.0
    %2407 = vmatmul.mubr.f32.gmra.mrb[0].mxu0 %v2333
    %v2408 = vpop.f32.mrb[0].mxu0
    %v2409 = vadd.f32 0.0, %v2408
    %v2410 = vpop.f32.mrb[0].mxu0
    %2411 = vdwg.mxu0
    %v2412 = vmax.f32 %v2404, -50000.0
    %v2413 = vmax.f32 %v2409, -50000.0
    %v2414 = vmin.f32 %v2412, 50000.0
    %v2415 = vmin.f32 %v2413, 50000.0
    %v2416 = vadd.f32 %v2414, %v1606
    %v2417 = vadd.f32 %v2415, %v1606
    %v2418 = vsel %vm92, %v2416, -inf
    %2419 = vmax.xlane.f32.xlu0 %v2418
    %v2420 = vpop.xlane.xlu0 %2419
    %v2421 = vsel %vm92, %v2417, -inf
    %2422 = vmax.xlane.f32.xlu0 %v2421
    %v2423 = vpop.xlane.xlu0 %2422
    %v2424 = vsub.f32 %v2416, %v2420
    %v2425 = vsub.f32 %v2417, %v2423
    %v2426 = vmul.f32 %v2424, 1.442695
    %v2427 = vpow.pop %v2426
    %v2428 = vmul.f32 %v2425, 1.442695
    %v2429 = vpow.pop %v2428
    %v2430 = vsel %vm92, %v2427, 0.0
    %2431 = vadd.xlane.f32.xlu0 %v2430
    %v2432 = vpop.xlane.xlu0 %2431
    %v2433 = vsel %vm92, %v2429, 0.0
    %2434 = vadd.xlane.f32.xlu0 %v2433
    %v2435 = vpop.xlane.xlu0 %2434
    %v2436 = vrcp.pop %v2432
    %v2437 = vrcp.pop %v2435
    %v2438 = vmul.f32 %v2427, %v2436
    %v2439 = vmul.f32 %v2429, %v2437
    %2440 = vrot.lane.b32.xlu0 %v1599, 112
    %v2441 = vpop.permute.xlu0 %2440
    %v2444 = vsel %vm92, %v2438, 0
    %v2447 = vsel %vm92, %v2439, 0
    %2449 = vmatprep.subr.mxu0 0.0
    %2450 = vmatpush1.msra.mxu0 %v2441
    %2451 = vmatprep.subr.mxu0 0.0
    %2452 = vmatpush1.msra.mxu0 0.0
    %2453 = vmatprep.subr.mxu0 0.0
    %2454 = vmatpush1.msra.mxu0 0.0
    %2455 = vmatprep.subr.mxu0 0.0
    %2456 = vmatpush1.msra.mxu0 0.0
    %2457 = vmatprep.subr.mxu0 0.0
    %2458 = vmatpush1.msra.mxu0 0.0
    %2459 = vmatprep.subr.mxu0 0.0
    %2460 = vmatpush1.msra.mxu0 0.0
    %2461 = vmatprep.subr.mxu0 0.0
    %2462 = vmatpush1.msra.mxu0 0.0
    %2463 = vmatprep.subr.mxu0 0.0
    %2464 = vmatpush1.msra.mxu0 0.0
    %2465 = vmatprep.subr.mxu0 0.0
    %2466 = vmatpush1.msra.mxu0 0.0
    %2467 = vmatprep.subr.mxu0 0.0
    %2468 = vmatpush1.msra.mxu0 0.0
    %2469 = vmatprep.subr.mxu0 0.0
    %2470 = vmatpush1.msra.mxu0 0.0
    %2471 = vmatprep.subr.mxu0 0.0
    %2472 = vmatpush1.msra.mxu0 0.0
    %2473 = vmatprep.subr.mxu0 0.0
    %2474 = vmatpush1.msra.mxu0 0.0
    %2475 = vmatprep.subr.mxu0 0.0
    %2476 = vmatpush1.msra.mxu0 0.0
    %2477 = vmatprep.subr.mxu0 0.0
    %2478 = vmatpush1.msra.mxu0 0.0
    %2479 = vmatprep.subr.mxu0 0.0
    %2480 = vmatpush1.msra.mxu0 0.0
    %2481 = vmatprep.subr.mxu0 0.0
    %2482 = vmatpush1.msra.mxu0 0.0
    %2483 = vmatprep.subr.mxu0 0.0
    %2484 = vmatpush1.msra.mxu0 0.0
    %2485 = vmatprep.subr.mxu0 0.0
    %2486 = vmatpush1.msra.mxu0 0.0
    %2487 = vmatprep.subr.mxu0 0.0
    %2488 = vmatpush1.msra.mxu0 0.0
    %2489 = vmatprep.subr.mxu0 0.0
    %2490 = vmatpush1.msra.mxu0 0.0
    %2491 = vmatprep.subr.mxu0 0.0
    %2492 = vmatpush1.msra.mxu0 0.0
    %2493 = vmatprep.subr.mxu0 0.0
    %2494 = vmatpush1.msra.mxu0 0.0
    %2495 = vmatprep.subr.mxu0 0.0
    %2496 = vmatpush1.msra.mxu0 0.0
    %2497 = vmatprep.subr.mxu0 0.0
    %2498 = vmatpush1.msra.mxu0 0.0
    %2499 = vmatprep.subr.mxu0 0.0
    %2500 = vmatpush1.msra.mxu0 0.0
    %2501 = vmatprep.subr.mxu0 0.0
    %2502 = vmatpush1.msra.mxu0 0.0
    %2503 = vmatprep.subr.mxu0 0.0
    %2504 = vmatpush1.msra.mxu0 0.0
    %2505 = vmatprep.subr.mxu0 0.0
    %2506 = vmatpush1.msra.mxu0 0.0
    %2507 = vmatprep.subr.mxu0 0.0
    %2508 = vmatpush1.msra.mxu0 0.0
    %2509 = vmatprep.subr.mxu0 0.0
    %2510 = vmatpush1.msra.mxu0 0.0
    %2511 = vmatprep.subr.mxu0 0.0
    %2512 = vmatpush1.msra.mxu0 0.0
    %2513 = vmatprep.mubr.f32.mxu0 0.0
    %2514 = vmatmul.mubr.f32.gmra.mrb[0].mxu0 %v2444
    %v2515 = vpop.f32.mrb[0].mxu0
    %v2516 = vadd.f32 0.0, %v2515
    %v2517 = vpop.f32.mrb[0].mxu0
    %2518 = vmatprep.mubr.f32.mxu0 0.0
    %2519 = vmatmul.mubr.f32.gmra.mrb[0].mxu0 %v2447
    %v2520 = vpop.f32.mrb[0].mxu0
    %v2521 = vadd.f32 0.0, %v2520
    %v2522 = vpop.f32.mrb[0].mxu0
    %2523 = vdwg.mxu0
    %2524 = vmatprep.subr.mxu0 0.0
    %2525 = vmatpush1.xpose.msra.mxu0 %v2331
    %2526 = vmatprep.subr.mxu0 0.0
    %2527 = vmatpush1.xpose.msra.mxu0 %v2333
    %2528 = vmatprep.subr.mxu0 0.0
    %2529 = vmatpush1.xpose.msra.mxu0 0.0
    %2530 = vmatprep.subr.mxu0 0.0
    %2531 = vmatpush1.xpose.msra.mxu0 0.0
    %2532 = vmatprep.subr.mxu0 0.0
    %2533 = vmatpush1.xpose.msra.mxu0 0.0
    %2534 = vmatprep.subr.mxu0 0.0
    %2535 = vmatpush1.xpose.msra.mxu0 0.0
    %2536 = vmatprep.subr.mxu0 0.0
    %2537 = vmatpush1.xpose.msra.mxu0 0.0
    %2538 = vmatprep.subr.mxu0 0.0
    %2539 = vmatpush1.xpose.msra.mxu0 0.0
    %2540 = vmatprep.subr.mxu0 0.0
    %2541 = vmatpush1.xpose.msra.mxu0 0.0
    %2542 = vmatprep.subr.mxu0 0.0
    %2543 = vmatpush1.xpose.msra.mxu0 0.0
    %2544 = vmatprep.subr.mxu0 0.0
    %2545 = vmatpush1.xpose.msra.mxu0 0.0
    %2546 = vmatprep.subr.mxu0 0.0
    %2547 = vmatpush1.xpose.msra.mxu0 0.0
    %2548 = vmatprep.subr.mxu0 0.0
    %2549 = vmatpush1.xpose.msra.mxu0 0.0
    %2550 = vmatprep.subr.mxu0 0.0
    %2551 = vmatpush1.xpose.msra.mxu0 0.0
    %2552 = vmatprep.subr.mxu0 0.0
    %2553 = vmatpush1.xpose.msra.mxu0 0.0
    %2554 = vmatprep.subr.mxu0 0.0
    %2555 = vmatpush1.xpose.msra.mxu0 0.0
    %2556 = vmatprep.subr.mxu0 0.0
    %2557 = vmatpush1.xpose.msra.mxu0 0.0
    %2558 = vmatprep.subr.mxu0 0.0
    %2559 = vmatpush1.xpose.msra.mxu0 0.0
    %2560 = vmatprep.subr.mxu0 0.0
    %2561 = vmatpush1.xpose.msra.mxu0 0.0
    %2562 = vmatprep.subr.mxu0 0.0
    %2563 = vmatpush1.xpose.msra.mxu0 0.0
    %2564 = vmatprep.subr.mxu0 0.0
    %2565 = vmatpush1.xpose.msra.mxu0 0.0
    %2566 = vmatprep.subr.mxu0 0.0
    %2567 = vmatpush1.xpose.msra.mxu0 0.0
    %2568 = vmatprep.subr.mxu0 0.0
    %2569 = vmatpush1.xpose.msra.mxu0 0.0
    %2570 = vmatprep.subr.mxu0 0.0
    %2571 = vmatpush1.xpose.msra.mxu0 0.0
    %2572 = vmatprep.subr.mxu0 0.0
    %2573 = vmatpush1.xpose.msra.mxu0 0.0
    %2574 = vmatprep.subr.mxu0 0.0
    %2575 = vmatpush1.xpose.msra.mxu0 0.0
    %2576 = vmatprep.subr.mxu0 0.0
    %2577 = vmatpush1.xpose.msra.mxu0 0.0
    %2578 = vmatprep.subr.mxu0 0.0
    %2579 = vmatpush1.xpose.msra.mxu0 0.0
    %2580 = vmatprep.subr.mxu0 0.0
    %2581 = vmatpush1.xpose.msra.mxu0 0.0
    %2582 = vmatprep.subr.mxu0 0.0
    %2583 = vmatpush1.xpose.msra.mxu0 0.0
    %2584 = vmatprep.subr.mxu0 0.0
    %2585 = vmatpush1.xpose.msra.mxu0 0.0
    %2586 = vmatprep.subr.mxu0 0.0
    %2587 = vmatpush1.xpose.msra.mxu0 0.0
    %2588 = vmatprep.mubr.f32.mxu0 0.0
    %2589 = vmatmul.mubr.f32.gmra.mrb[0].mxu0 %v2335
    %v2590 = vpop.f32.mrb[0].mxu0
    %v2591 = vadd.f32 0.0, %v2590
    %v2592 = vpop.f32.mrb[0].mxu0
    %2593 = vdwg.mxu0
    %v2594 = vmax.f32 %v2591, -50000.0
    %v2595 = vmin.f32 %v2594, 50000.0
    %v2596 = vsel %vm358, %v2595, -inf
    %2597 = vmax.xlane.f32.xlu0 %v2596
    %v2598 = vpop.xlane.xlu0 %2597
    %v2599 = vsub.f32 %v2595, %v2598
    %v2600 = vmax.f32 %v2599, -50000.0
    %v2601 = vmin.f32 %v2600, 50000.0
    %v2602 = vmul.f32 %v2601, 1.442695
    %v2603 = vpow.pop %v2602
    %v2604 = vsel %vm358, %v2603, 0.0
    %2605 = vadd.xlane.f32.xlu0 %v2604
    %v2606 = vpop.xlane.xlu0 %2605
    %v2607 = vrcp.pop %v2606
    %v2608 = vmul.f32 %v2603, %v2607
    %2609 = vrot.lane.b32.xlu0 %v1596, 112
    %v2610 = vpop.permute.xlu0 %2609
    %2611 = vrot.lane.b32.xlu0 %v1597, 112
    %v2612 = vpop.permute.xlu0 %2611
    %v2616 = vsel %vm358, %v2608, 0
    %2618 = vmatprep.subr.mxu0 0.0
    %2619 = vmatpush1.msra.mxu0 %v2610
    %2620 = vmatprep.subr.mxu0 0.0
    %2621 = vmatpush1.msra.mxu0 %v2612
    %2622 = vmatprep.subr.mxu0 0.0
    %2623 = vmatpush1.msra.mxu0 0.0
    %2624 = vmatprep.subr.mxu0 0.0
    %2625 = vmatpush1.msra.mxu0 0.0
    %2626 = vmatprep.subr.mxu0 0.0
    %2627 = vmatpush1.msra.mxu0 0.0
    %2628 = vmatprep.subr.mxu0 0.0
    %2629 = vmatpush1.msra.mxu0 0.0
    %2630 = vmatprep.subr.mxu0 0.0
    %2631 = vmatpush1.msra.mxu0 0.0
    %2632 = vmatprep.subr.mxu0 0.0
    %2633 = vmatpush1.msra.mxu0 0.0
    %2634 = vmatprep.subr.mxu0 0.0
    %2635 = vmatpush1.msra.mxu0 0.0
    %2636 = vmatprep.subr.mxu0 0.0
    %2637 = vmatpush1.msra.mxu0 0.0
    %2638 = vmatprep.subr.mxu0 0.0
    %2639 = vmatpush1.msra.mxu0 0.0
    %2640 = vmatprep.subr.mxu0 0.0
    %2641 = vmatpush1.msra.mxu0 0.0
    %2642 = vmatprep.subr.mxu0 0.0
    %2643 = vmatpush1.msra.mxu0 0.0
    %2644 = vmatprep.subr.mxu0 0.0
    %2645 = vmatpush1.msra.mxu0 0.0
    %2646 = vmatprep.subr.mxu0 0.0
    %2647 = vmatpush1.msra.mxu0 0.0
    %2648 = vmatprep.subr.mxu0 0.0
    %2649 = vmatpush1.msra.mxu0 0.0
    %2650 = vmatprep.subr.mxu0 0.0
    %2651 = vmatpush1.msra.mxu0 0.0
    %2652 = vmatprep.subr.mxu0 0.0
    %2653 = vmatpush1.msra.mxu0 0.0
    %2654 = vmatprep.subr.mxu0 0.0
    %2655 = vmatpush1.msra.mxu0 0.0
    %2656 = vmatprep.subr.mxu0 0.0
    %2657 = vmatpush1.msra.mxu0 0.0
    %2658 = vmatprep.subr.mxu0 0.0
    %2659 = vmatpush1.msra.mxu0 0.0
    %2660 = vmatprep.subr.mxu0 0.0
    %2661 = vmatpush1.msra.mxu0 0.0
    %2662 = vmatprep.subr.mxu0 0.0
    %2663 = vmatpush1.msra.mxu0 0.0
    %2664 = vmatprep.subr.mxu0 0.0
    %2665 = vmatpush1.msra.mxu0 0.0
    %2666 = vmatprep.subr.mxu0 0.0
    %2667 = vmatpush1.msra.mxu0 0.0
    %2668 = vmatprep.subr.mxu0 0.0
    %2669 = vmatpush1.msra.mxu0 0.0
    %2670 = vmatprep.subr.mxu0 0.0
    %2671 = vmatpush1.msra.mxu0 0.0
    %2672 = vmatprep.subr.mxu0 0.0
    %2673 = vmatpush1.msra.mxu0 0.0
    %2674 = vmatprep.subr.mxu0 0.0
    %2675 = vmatpush1.msra.mxu0 0.0
    %2676 = vmatprep.subr.mxu0 0.0
    %2677 = vmatpush1.msra.mxu0 0.0
    %2678 = vmatprep.subr.mxu0 0.0
    %2679 = vmatpush1.msra.mxu0 0.0
    %2680 = vmatprep.subr.mxu0 0.0
    %2681 = vmatpush1.msra.mxu0 0.0
    %2682 = vmatprep.mubr.f32.mxu0 0.0
    %2683 = vmatmul.mubr.f32.gmra.mrb[0].mxu0 %v2616
    %v2684 = vpop.f32.mrb[0].mxu0
    %v2685 = vadd.f32 0.0, %v2684
    %v2686 = vpop.f32.mrb[0].mxu0
    %2687 = vdwg.mxu0
    %2688 = vrot.lane.b32.xlu0 %v1591, 104
    %v2689 = vpop.permute.xlu0 %2688
    %2690 = vrot.lane.b32.xlu0 %v1592, 104
    %v2691 = vpop.permute.xlu0 %2690
    %2692 = vrot.lane.b32.xlu0 %v1594, 104
    %v2693 = vpop.permute.xlu0 %2692
    %v2694 = vsel %vm92, %v2689, 0
    %v2696 = vsel %vm92, %v2691, 0
    %v2698 = vsel %vm92, %v2693, 0
    %2700 = vmatprep.subr.mxu0 0.0
    %2701 = vmatpush1.xpose.msra.mxu0 %v2698
    %2702 = vmatprep.subr.mxu0 0.0
    %2703 = vmatpush1.xpose.msra.mxu0 0.0
    %2704 = vmatprep.subr.mxu0 0.0
    %2705 = vmatpush1.xpose.msra.mxu0 0.0
    %2706 = vmatprep.subr.mxu0 0.0
    %2707 = vmatpush1.xpose.msra.mxu0 0.0
    %2708 = vmatprep.subr.mxu0 0.0
    %2709 = vmatpush1.xpose.msra.mxu0 0.0
    %2710 = vmatprep.subr.mxu0 0.0
    %2711 = vmatpush1.xpose.msra.mxu0 0.0
    %2712 = vmatprep.subr.mxu0 0.0
    %2713 = vmatpush1.xpose.msra.mxu0 0.0
    %2714 = vmatprep.subr.mxu0 0.0
    %2715 = vmatpush1.xpose.msra.mxu0 0.0
    %2716 = vmatprep.subr.mxu0 0.0
    %2717 = vmatpush1.xpose.msra.mxu0 0.0
    %2718 = vmatprep.subr.mxu0 0.0
    %2719 = vmatpush1.xpose.msra.mxu0 0.0
    %2720 = vmatprep.subr.mxu0 0.0
    %2721 = vmatpush1.xpose.msra.mxu0 0.0
    %2722 = vmatprep.subr.mxu0 0.0
    %2723 = vmatpush1.xpose.msra.mxu0 0.0
    %2724 = vmatprep.subr.mxu0 0.0
    %2725 = vmatpush1.xpose.msra.mxu0 0.0
    %2726 = vmatprep.subr.mxu0 0.0
    %2727 = vmatpush1.xpose.msra.mxu0 0.0
    %2728 = vmatprep.subr.mxu0 0.0
    %2729 = vmatpush1.xpose.msra.mxu0 0.0
    %2730 = vmatprep.subr.mxu0 0.0
    %2731 = vmatpush1.xpose.msra.mxu0 0.0
    %2732 = vmatprep.subr.mxu0 0.0
    %2733 = vmatpush1.xpose.msra.mxu0 0.0
    %2734 = vmatprep.subr.mxu0 0.0
    %2735 = vmatpush1.xpose.msra.mxu0 0.0
    %2736 = vmatprep.subr.mxu0 0.0
    %2737 = vmatpush1.xpose.msra.mxu0 0.0
    %2738 = vmatprep.subr.mxu0 0.0
    %2739 = vmatpush1.xpose.msra.mxu0 0.0
    %2740 = vmatprep.subr.mxu0 0.0
    %2741 = vmatpush1.xpose.msra.mxu0 0.0
    %2742 = vmatprep.subr.mxu0 0.0
    %2743 = vmatpush1.xpose.msra.mxu0 0.0
    %2744 = vmatprep.subr.mxu0 0.0
    %2745 = vmatpush1.xpose.msra.mxu0 0.0
    %2746 = vmatprep.subr.mxu0 0.0
    %2747 = vmatpush1.xpose.msra.mxu0 0.0
    %2748 = vmatprep.subr.mxu0 0.0
    %2749 = vmatpush1.xpose.msra.mxu0 0.0
    %2750 = vmatprep.subr.mxu0 0.0
    %2751 = vmatpush1.xpose.msra.mxu0 0.0
    %2752 = vmatprep.subr.mxu0 0.0
    %2753 = vmatpush1.xpose.msra.mxu0 0.0
    %2754 = vmatprep.subr.mxu0 0.0
    %2755 = vmatpush1.xpose.msra.mxu0 0.0
    %2756 = vmatprep.subr.mxu0 0.0
    %2757 = vmatpush1.xpose.msra.mxu0 0.0
    %2758 = vmatprep.subr.mxu0 0.0
    %2759 = vmatpush1.xpose.msra.mxu0 0.0
    %2760 = vmatprep.subr.mxu0 0.0
    %2761 = vmatpush1.xpose.msra.mxu0 0.0
    %2762 = vmatprep.subr.mxu0 0.0
    %2763 = vmatpush1.xpose.msra.mxu0 0.0
    %2764 = vmatprep.mubr.f32.mxu0 0.0
    %2765 = vmatmul.mubr.f32.gmra.mrb[0].mxu0 %v2694
    %v2766 = vpop.f32.mrb[0].mxu0
    %v2767 = vadd.f32 0.0, %v2766
    %v2768 = vpop.f32.mrb[0].mxu0
    %2769 = vmatprep.mubr.f32.mxu0 0.0
    %2770 = vmatmul.mubr.f32.gmra.mrb[0].mxu0 %v2696
    %v2771 = vpop.f32.mrb[0].mxu0
    %v2772 = vadd.f32 0.0, %v2771
    %v2773 = vpop.f32.mrb[0].mxu0
    %2774 = vdwg.mxu0
    %v2775 = vmax.f32 %v2767, -50000.0
    %v2776 = vmax.f32 %v2772, -50000.0
    %v2777 = vmin.f32 %v2775, 50000.0
    %v2778 = vmin.f32 %v2776, 50000.0
    %v2779 = vadd.f32 %v2777, %v1606
    %v2780 = vadd.f32 %v2778, %v1606
    %v2781 = vsel %vm92, %v2779, -inf
    %2782 = vmax.xlane.f32.xlu0 %v2781
    %v2783 = vpop.xlane.xlu0 %2782
    %v2784 = vsel %vm92, %v2780, -inf
    %2785 = vmax.xlane.f32.xlu0 %v2784
    %v2786 = vpop.xlane.xlu0 %2785
    %v2787 = vsub.f32 %v2779, %v2783
    %v2788 = vsub.f32 %v2780, %v2786
    %v2789 = vmul.f32 %v2787, 1.442695
    %v2790 = vpow.pop %v2789
    %v2791 = vmul.f32 %v2788, 1.442695
    %v2792 = vpow.pop %v2791
    %v2793 = vsel %vm92, %v2790, 0.0
    %2794 = vadd.xlane.f32.xlu0 %v2793
    %v2795 = vpop.xlane.xlu0 %2794
    %v2796 = vsel %vm92, %v2792, 0.0
    %2797 = vadd.xlane.f32.xlu0 %v2796
    %v2798 = vpop.xlane.xlu0 %2797
    %v2799 = vrcp.pop %v2795
    %v2800 = vrcp.pop %v2798
    %v2801 = vmul.f32 %v2790, %v2799
    %v2802 = vmul.f32 %v2792, %v2800
    %2803 = vrot.lane.b32.xlu0 %v1599, 104
    %v2804 = vpop.permute.xlu0 %2803
    %v2807 = vsel %vm92, %v2801, 0
    %v2810 = vsel %vm92, %v2802, 0
    %2812 = vmatprep.subr.mxu0 0.0
    %2813 = vmatpush1.msra.mxu0 %v2804
    %2814 = vmatprep.subr.mxu0 0.0
    %2815 = vmatpush1.msra.mxu0 0.0
    %2816 = vmatprep.subr.mxu0 0.0
    %2817 = vmatpush1.msra.mxu0 0.0
    %2818 = vmatprep.subr.mxu0 0.0
    %2819 = vmatpush1.msra.mxu0 0.0
    %2820 = vmatprep.subr.mxu0 0.0
    %2821 = vmatpush1.msra.mxu0 0.0
    %2822 = vmatprep.subr.mxu0 0.0
    %2823 = vmatpush1.msra.mxu0 0.0
    %2824 = vmatprep.subr.mxu0 0.0
    %2825 = vmatpush1.msra.mxu0 0.0
    %2826 = vmatprep.subr.mxu0 0.0
    %2827 = vmatpush1.msra.mxu0 0.0
    %2828 = vmatprep.subr.mxu0 0.0
    %2829 = vmatpush1.msra.mxu0 0.0
    %2830 = vmatprep.subr.mxu0 0.0
    %2831 = vmatpush1.msra.mxu0 0.0
    %2832 = vmatprep.subr.mxu0 0.0
    %2833 = vmatpush1.msra.mxu0 0.0
    %2834 = vmatprep.subr.mxu0 0.0
    %2835 = vmatpush1.msra.mxu0 0.0
    %2836 = vmatprep.subr.mxu0 0.0
    %2837 = vmatpush1.msra.mxu0 0.0
    %2838 = vmatprep.subr.mxu0 0.0
    %2839 = vmatpush1.msra.mxu0 0.0
    %2840 = vmatprep.subr.mxu0 0.0
    %2841 = vmatpush1.msra.mxu0 0.0
    %2842 = vmatprep.subr.mxu0 0.0
    %2843 = vmatpush1.msra.mxu0 0.0
    %2844 = vmatprep.subr.mxu0 0.0
    %2845 = vmatpush1.msra.mxu0 0.0
    %2846 = vmatprep.subr.mxu0 0.0
    %2847 = vmatpush1.msra.mxu0 0.0
    %2848 = vmatprep.subr.mxu0 0.0
    %2849 = vmatpush1.msra.mxu0 0.0
    %2850 = vmatprep.subr.mxu0 0.0
    %2851 = vmatpush1.msra.mxu0 0.0
    %2852 = vmatprep.subr.mxu0 0.0
    %2853 = vmatpush1.msra.mxu0 0.0
    %2854 = vmatprep.subr.mxu0 0.0
    %2855 = vmatpush1.msra.mxu0 0.0
    %2856 = vmatprep.subr.mxu0 0.0
    %2857 = vmatpush1.msra.mxu0 0.0
    %2858 = vmatprep.subr.mxu0 0.0
    %2859 = vmatpush1.msra.mxu0 0.0
    %2860 = vmatprep.subr.mxu0 0.0
    %2861 = vmatpush1.msra.mxu0 0.0
    %2862 = vmatprep.subr.mxu0 0.0
    %2863 = vmatpush1.msra.mxu0 0.0
    %2864 = vmatprep.subr.mxu0 0.0
    %2865 = vmatpush1.msra.mxu0 0.0
    %2866 = vmatprep.subr.mxu0 0.0
    %2867 = vmatpush1.msra.mxu0 0.0
    %2868 = vmatprep.subr.mxu0 0.0
    %2869 = vmatpush1.msra.mxu0 0.0
    %2870 = vmatprep.subr.mxu0 0.0
    %2871 = vmatpush1.msra.mxu0 0.0
    %2872 = vmatprep.subr.mxu0 0.0
    %2873 = vmatpush1.msra.mxu0 0.0
    %2874 = vmatprep.subr.mxu0 0.0
    %2875 = vmatpush1.msra.mxu0 0.0
    %2876 = vmatprep.mubr.f32.mxu0 0.0
    %2877 = vmatmul.mubr.f32.gmra.mrb[0].mxu0 %v2807
    %v2878 = vpop.f32.mrb[0].mxu0
    %v2879 = vadd.f32 0.0, %v2878
    %v2880 = vpop.f32.mrb[0].mxu0
    %2881 = vmatprep.mubr.f32.mxu0 0.0
    %2882 = vmatmul.mubr.f32.gmra.mrb[0].mxu0 %v2810
    %v2883 = vpop.f32.mrb[0].mxu0
    %v2884 = vadd.f32 0.0, %v2883
    %v2885 = vpop.f32.mrb[0].mxu0
    %2886 = vdwg.mxu0
    %2887 = vmatprep.subr.mxu0 0.0
    %2888 = vmatpush1.xpose.msra.mxu0 %v2694
    %2889 = vmatprep.subr.mxu0 0.0
    %2890 = vmatpush1.xpose.msra.mxu0 %v2696
    %2891 = vmatprep.subr.mxu0 0.0
    %2892 = vmatpush1.xpose.msra.mxu0 0.0
    %2893 = vmatprep.subr.mxu0 0.0
    %2894 = vmatpush1.xpose.msra.mxu0 0.0
    %2895 = vmatprep.subr.mxu0 0.0
    %2896 = vmatpush1.xpose.msra.mxu0 0.0
    %2897 = vmatprep.subr.mxu0 0.0
    %2898 = vmatpush1.xpose.msra.mxu0 0.0
    %2899 = vmatprep.subr.mxu0 0.0
    %2900 = vmatpush1.xpose.msra.mxu0 0.0
    %2901 = vmatprep.subr.mxu0 0.0
    %2902 = vmatpush1.xpose.msra.mxu0 0.0
    %2903 = vmatprep.subr.mxu0 0.0
    %2904 = vmatpush1.xpose.msra.mxu0 0.0
    %2905 = vmatprep.subr.mxu0 0.0
    %2906 = vmatpush1.xpose.msra.mxu0 0.0
    %2907 = vmatprep.subr.mxu0 0.0
    %2908 = vmatpush1.xpose.msra.mxu0 0.0
    %2909 = vmatprep.subr.mxu0 0.0
    %2910 = vmatpush1.xpose.msra.mxu0 0.0
    %2911 = vmatprep.subr.mxu0 0.0
    %2912 = vmatpush1.xpose.msra.mxu0 0.0
    %2913 = vmatprep.subr.mxu0 0.0
    %2914 = vmatpush1.xpose.msra.mxu0 0.0
    %2915 = vmatprep.subr.mxu0 0.0
    %2916 = vmatpush1.xpose.msra.mxu0 0.0
    %2917 = vmatprep.subr.mxu0 0.0
    %2918 = vmatpush1.xpose.msra.mxu0 0.0
    %2919 = vmatprep.subr.mxu0 0.0
    %2920 = vmatpush1.xpose.msra.mxu0 0.0
    %2921 = vmatprep.subr.mxu0 0.0
    %2922 = vmatpush1.xpose.msra.mxu0 0.0
    %2923 = vmatprep.subr.mxu0 0.0
    %2924 = vmatpush1.xpose.msra.mxu0 0.0
    %2925 = vmatprep.subr.mxu0 0.0
    %2926 = vmatpush1.xpose.msra.mxu0 0.0
    %2927 = vmatprep.subr.mxu0 0.0
    %2928 = vmatpush1.xpose.msra.mxu0 0.0
    %2929 = vmatprep.subr.mxu0 0.0
    %2930 = vmatpush1.xpose.msra.mxu0 0.0
    %2931 = vmatprep.subr.mxu0 0.0
    %2932 = vmatpush1.xpose.msra.mxu0 0.0
    %2933 = vmatprep.subr.mxu0 0.0
    %2934 = vmatpush1.xpose.msra.mxu0 0.0
    %2935 = vmatprep.subr.mxu0 0.0
    %2936 = vmatpush1.xpose.msra.mxu0 0.0
    %2937 = vmatprep.subr.mxu0 0.0
    %2938 = vmatpush1.xpose.msra.mxu0 0.0
    %2939 = vmatprep.subr.mxu0 0.0
    %2940 = vmatpush1.xpose.msra.mxu0 0.0
    %2941 = vmatprep.subr.mxu0 0.0
    %2942 = vmatpush1.xpose.msra.mxu0 0.0
    %2943 = vmatprep.subr.mxu0 0.0
    %2944 = vmatpush1.xpose.msra.mxu0 0.0
    %2945 = vmatprep.subr.mxu0 0.0
    %2946 = vmatpush1.xpose.msra.mxu0 0.0
    %2947 = vmatprep.subr.mxu0 0.0
    %2948 = vmatpush1.xpose.msra.mxu0 0.0
    %2949 = vmatprep.subr.mxu0 0.0
    %2950 = vmatpush1.xpose.msra.mxu0 0.0
    %2951 = vmatprep.mubr.f32.mxu0 0.0
    %2952 = vmatmul.mubr.f32.gmra.mrb[0].mxu0 %v2698
    %v2953 = vpop.f32.mrb[0].mxu0
    %v2954 = vadd.f32 0.0, %v2953
    %v2955 = vpop.f32.mrb[0].mxu0
    %2956 = vdwg.mxu0
    %v2957 = vmax.f32 %v2954, -50000.0
    %v2958 = vmin.f32 %v2957, 50000.0
    %v2959 = vsel %vm358, %v2958, -inf
    %2960 = vmax.xlane.f32.xlu0 %v2959
    %v2961 = vpop.xlane.xlu0 %2960
    %v2962 = vsub.f32 %v2958, %v2961
    %v2963 = vmax.f32 %v2962, -50000.0
    %v2964 = vmin.f32 %v2963, 50000.0
    %v2965 = vmul.f32 %v2964, 1.442695
    %v2966 = vpow.pop %v2965
    %v2967 = vsel %vm358, %v2966, 0.0
    %2968 = vadd.xlane.f32.xlu0 %v2967
    %v2969 = vpop.xlane.xlu0 %2968
    %v2970 = vrcp.pop %v2969
    %v2971 = vmul.f32 %v2966, %v2970
    %2972 = vrot.lane.b32.xlu0 %v1596, 104
    %v2973 = vpop.permute.xlu0 %2972
    %2974 = vrot.lane.b32.xlu0 %v1597, 104
    %v2975 = vpop.permute.xlu0 %2974
    %v2979 = vsel %vm358, %v2971, 0
    %2981 = vmatprep.subr.mxu0 0.0
    %2982 = vmatpush1.msra.mxu0 %v2973
    %2983 = vmatprep.subr.mxu0 0.0
    %2984 = vmatpush1.msra.mxu0 %v2975
    %2985 = vmatprep.subr.mxu0 0.0
    %2986 = vmatpush1.msra.mxu0 0.0
    %2987 = vmatprep.subr.mxu0 0.0
    %2988 = vmatpush1.msra.mxu0 0.0
    %2989 = vmatprep.subr.mxu0 0.0
    %2990 = vmatpush1.msra.mxu0 0.0
    %2991 = vmatprep.subr.mxu0 0.0
    %2992 = vmatpush1.msra.mxu0 0.0
    %2993 = vmatprep.subr.mxu0 0.0
    %2994 = vmatpush1.msra.mxu0 0.0
    %2995 = vmatprep.subr.mxu0 0.0
    %2996 = vmatpush1.msra.mxu0 0.0
    %2997 = vmatprep.subr.mxu0 0.0
    %2998 = vmatpush1.msra.mxu0 0.0
    %2999 = vmatprep.subr.mxu0 0.0
    %3000 = vmatpush1.msra.mxu0 0.0
    %3001 = vmatprep.subr.mxu0 0.0
    %3002 = vmatpush1.msra.mxu0 0.0
    %3003 = vmatprep.subr.mxu0 0.0
    %3004 = vmatpush1.msra.mxu0 0.0
    %3005 = vmatprep.subr.mxu0 0.0
    %3006 = vmatpush1.msra.mxu0 0.0
    %3007 = vmatprep.subr.mxu0 0.0
    %3008 = vmatpush1.msra.mxu0 0.0
    %3009 = vmatprep.subr.mxu0 0.0
    %3010 = vmatpush1.msra.mxu0 0.0
    %3011 = vmatprep.subr.mxu0 0.0
    %3012 = vmatpush1.msra.mxu0 0.0
    %3013 = vmatprep.subr.mxu0 0.0
    %3014 = vmatpush1.msra.mxu0 0.0
    %3015 = vmatprep.subr.mxu0 0.0
    %3016 = vmatpush1.msra.mxu0 0.0
    %3017 = vmatprep.subr.mxu0 0.0
    %3018 = vmatpush1.msra.mxu0 0.0
    %3019 = vmatprep.subr.mxu0 0.0
    %3020 = vmatpush1.msra.mxu0 0.0
    %3021 = vmatprep.subr.mxu0 0.0
    %3022 = vmatpush1.msra.mxu0 0.0
    %3023 = vmatprep.subr.mxu0 0.0
    %3024 = vmatpush1.msra.mxu0 0.0
    %3025 = vmatprep.subr.mxu0 0.0
    %3026 = vmatpush1.msra.mxu0 0.0
    %3027 = vmatprep.subr.mxu0 0.0
    %3028 = vmatpush1.msra.mxu0 0.0
    %3029 = vmatprep.subr.mxu0 0.0
    %3030 = vmatpush1.msra.mxu0 0.0
    %3031 = vmatprep.subr.mxu0 0.0
    %3032 = vmatpush1.msra.mxu0 0.0
    %3033 = vmatprep.subr.mxu0 0.0
    %3034 = vmatpush1.msra.mxu0 0.0
    %3035 = vmatprep.subr.mxu0 0.0
    %3036 = vmatpush1.msra.mxu0 0.0
    %3037 = vmatprep.subr.mxu0 0.0
    %3038 = vmatpush1.msra.mxu0 0.0
    %3039 = vmatprep.subr.mxu0 0.0
    %3040 = vmatpush1.msra.mxu0 0.0
    %3041 = vmatprep.subr.mxu0 0.0
    %3042 = vmatpush1.msra.mxu0 0.0
    %3043 = vmatprep.subr.mxu0 0.0
    %3044 = vmatpush1.msra.mxu0 0.0
    %3045 = vmatprep.mubr.f32.mxu0 0.0
    %3046 = vmatmul.mubr.f32.gmra.mrb[0].mxu0 %v2979
    %v3047 = vpop.f32.mrb[0].mxu0
    %v3048 = vadd.f32 0.0, %v3047
    %v3049 = vpop.f32.mrb[0].mxu0
    %3050 = vdwg.mxu0
    %3053 = vrot.lane.b32.xlu0 %v2151, 8
    %v3054 = vpop.permute.xlu0 %3053
    %3055 = vrot.lane.b32.xlu0 %v2156, 8
    %v3056 = vpop.permute.xlu0 %3055
    %3061 = vrot.lane.b32.xlu0 %v2516, 16
    %v3062 = vpop.permute.xlu0 %3061
    %3063 = vrot.lane.b32.xlu0 %v2521, 16
    %v3064 = vpop.permute.xlu0 %3063
    %3069 = vrot.lane.b32.xlu0 %v2879, 24
    %v3070 = vpop.permute.xlu0 %3069
    %3071 = vrot.lane.b32.xlu0 %v2884, 24
    %v3072 = vpop.permute.xlu0 %3071
    %v3075 = vsel %vm92, %v1793, %v3054
    %v3076 = vsel %vm92, %v1798, %v3056
    %v3077 = vsel %vm358, %v3075, %v3062
    %v3078 = vsel %vm358, %v3076, %v3064
    %v3079 = vsel %vm1565, %v3077, %v3070
    %v3080 = vsel %vm1565, %v3078, %v3072
    %v3081 = vadd.f32 %v3079, 1.0
    %v3082 = vadd.f32 %v3080, 1.0
    %s3083 = scalar_lea.vmem [#allocation10], 16
    %3084 = vst.msk [vmem:[%s3083] sm:$0xff] %vm1570, %v3081
    %3085 = vst.msk [vmem:[%s3083 + $0x8] sm:$0xff] %vm1570, %v3082
    %3087 = vrot.lane.b32.xlu0 %v2322, 8
    %v3088 = vpop.permute.xlu0 %3087
    %3091 = vrot.lane.b32.xlu0 %v2685, 16
    %v3092 = vpop.permute.xlu0 %3091
    %3095 = vrot.lane.b32.xlu0 %v3048, 24
    %v3096 = vpop.permute.xlu0 %3095
    %v3098 = vsel %vm92, %v1956, %v3088
    %v3099 = vsel %vm358, %v3098, %v3092
    %v3100 = vsel %vm1565, %v3099, %v3096
    %v3101 = vadd.f32 %v3100, 1.0
    %s3102 = scalar_lea.vmem [#allocation11], 8
    %3103 = vst.msk [vmem:[%s3102] sm:$0xff] %vm1570, %v3101
    // Predicated region
    $region38: #{tpu_custom_call.1} parent=1 // pred_check
      _
    $region39: #{tpu_custom_call.1} parent=1 // pred_check_branch
      %3105 = sbr.rel (0) target = $region41
    $region40: #{tpu_custom_call.1} parent=1 // pred_region
      %s3107 = ssub.s32 512, 512
      %3108 = vsyncadd [#allocation4], %s3107
      %s3109 = sshll.u32 [#allocation10], 4
      %s3110 = int_to_ptr.vmem [resolvable:$true] %s3109
      %3115 = dma.vmem_to_hbm [thread:$0]  %s3110, 512, %s5, [#allocation4], 128, 128, 8
    $region41: #{tpu_custom_call.1} parent=1 // pred_fallthru
      _
    // Predicated region
    $region42: #{tpu_custom_call.1} parent=1 // pred_check
      _
    $region43: #{tpu_custom_call.1} parent=1 // pred_check_branch
      %3117 = sbr.rel (0) target = $region45
    $region44: #{tpu_custom_call.1} parent=1 // pred_region
      %s3119 = ssub.s32 256, 256
      %3120 = vsyncadd [#allocation12], %s3119
      %s3121 = sshll.u32 [#allocation11], 4
      %s3122 = int_to_ptr.vmem [resolvable:$true] %s3121
      %3127 = dma.vmem_to_hbm [thread:$0]  %s3122, 256, %s6, [#allocation12], 128, 128, 8
    $region45: #{tpu_custom_call.1} parent=1 // pred_fallthru
      _
    // Predicated region
    $region46: #{tpu_custom_call.1} parent=1 // pred_check
      _
    $region47: #{tpu_custom_call.1} parent=1 // pred_check_branch
      %3129 = sbr.rel (0) target = $region49
    $region48: #{tpu_custom_call.1} parent=1 // pred_region
      %3130 = dma.done [#allocation4], 512
    $region49: #{tpu_custom_call.1} parent=1 // pred_fallthru
      _
    // Predicated region
    $region50: #{tpu_custom_call.1} parent=1 // pred_check
      _
    $region51: #{tpu_custom_call.1} parent=1 // pred_check_branch
      %3132 = sbr.rel (0) target = $region53
    $region52: #{tpu_custom_call.1} parent=1 // pred_region
      %3133 = dma.done [#allocation12], 256
    $region53: #{tpu_custom_call.1} parent=1 // pred_fallthru
      _
    %3134 = vsyncpa [#allocation3], 1
    %3135 = vsyncpa [#allocation6], 1
    %3136 = vsyncpa [#allocation9], 1
    %3137 = vsyncpa [#allocation4], 1
    %3138 = vsyncpa [#allocation12], 1

</llo_original>
